<compile_context>
chip_gen: v7x
topology: tpu7x:2x2x1
jax: 0.10.0
libtpu: 0.0.40
codegen_flags: <defaults>
</compile_context>

<pallas_src>
import jax
import jax.numpy as jnp
from jax.experimental import pallas as pl
from jax.experimental.pallas import tpu as pltpu

NUM_ANCHORS = 9
C_IN = 256
C_CLS = NUM_ANCHORS * 2        # 18
C_BOX = NUM_ANCHORS * 4        # 36
TILE_N = 2048                  # lane-axis tile (sweep 1024-4096); 128-aligned


def _rpn_head_kernel(w_cls_ref, b_cls_ref, w_box_ref, b_box_ref, x_ref,
                     cls_ref, box_ref):
    # w_cls_ref: (18, 256), w_box_ref: (36, 256) -- resident across grid steps
    # b_*_ref:   (C, 1)                          -- lane-broadcast bias
    # x_ref:     (1, 256, TILE)                  -- one batch elem, one lane tile
    x = x_ref[0]                                                 # (256, TILE)
    y_cls = jnp.dot(w_cls_ref[...], x, preferred_element_type=jnp.float32)
    y_box = jnp.dot(w_box_ref[...], x, preferred_element_type=jnp.float32)
    cls_ref[...] = (y_cls + b_cls_ref[...])[None].astype(cls_ref.dtype)
    box_ref[...] = (y_box + b_box_ref[...])[None].astype(box_ref.dtype)


def _rpn_head_level(feat, w_cls, b_cls, w_box, b_box, tile_n=TILE_N):
    """RPN 1x1-conv heads on one NCHW FPN level via a single pallas_call."""
    B, C, H, W = feat.shape
    n = H * W
    x = feat.reshape(B, C, n)            # free reshape on contiguous NCHW
    # Lane tile: whole level if it fits, else a 128-aligned TILE_N with a
    # masked ragged last block.  Garbage read in out-of-bounds input columns
    # only produces out-of-bounds output columns, which the masked store drops
    # -- they never reach HBM (invariant required by dropping the zero pad).
    tile = n if n <= tile_n else tile_n
    grid = (B, pl.cdiv(n, tile))

    dt = feat.dtype
    w_cls = w_cls.astype(dt)             # tiny; keeps the dot single-dtype
    w_box = w_box.astype(dt)
    b_cls2 = b_cls.astype(jnp.float32).reshape(C_CLS, 1)
    b_box2 = b_box.astype(jnp.float32).reshape(C_BOX, 1)

    cls_flat, box_flat = pl.pallas_call(
        _rpn_head_kernel,
        out_shape=(jax.ShapeDtypeStruct((B, C_CLS, n), dt),
                   jax.ShapeDtypeStruct((B, C_BOX, n), dt)),
        grid_spec=pltpu.PrefetchScalarGridSpec(
            num_scalar_prefetch=0,
            grid=grid,
            in_specs=[
                pl.BlockSpec((C_CLS, C), lambda b, j: (0, 0)),
                pl.BlockSpec((C_CLS, 1), lambda b, j: (0, 0)),
                pl.BlockSpec((C_BOX, C), lambda b, j: (0, 0)),
                pl.BlockSpec((C_BOX, 1), lambda b, j: (0, 0)),
                pl.BlockSpec((1, C, tile), lambda b, j: (b, 0, j)),
            ],
            out_specs=(
                pl.BlockSpec((1, C_CLS, tile), lambda b, j: (b, 0, j)),
                pl.BlockSpec((1, C_BOX, tile), lambda b, j: (b, 0, j)),
            ),
        ),
        compiler_params=pltpu.CompilerParams(
            dimension_semantics=("parallel", "parallel")),
    )(w_cls, b_cls2, w_box, b_box2, x)

    return (cls_flat.reshape(B, C_CLS, H, W),
            box_flat.reshape(B, C_BOX, H, W))


def rpn_heads(fpn_features, w_cls, b_cls, w_box, b_box):
    """RPN.forward applied to every FPN level (one pallas_call per level).

    fpn_features: list of NCHW (B, 256, H, W) arrays.
    w_cls: (18, 256), b_cls: (18,), w_box: (36, 256), b_box: (36,)
      (PyTorch Conv2d(256, C, 1) weights with the trailing 1x1 dims squeezed).
    Returns [(cls_logits, bbox_pred)] per level in NCHW, like the reference.
    """
    return [_rpn_head_level(f, w_cls, b_cls, w_box, b_box) for f in fpn_features]


def detection_network_forward(fpn_features, rpn_params, rois=None):
    """DetectionNetwork.forward restricted to its well-defined parts (rois=None)."""
    w_cls, b_cls, w_box, b_box = rpn_params
    rpn_out = rpn_heads(fpn_features, w_cls, b_cls, w_box, b_box)
    if rois is not None:
        raise NotImplementedError("RoIAlign branch not implemented")  # TODO(synk)
    return rpn_out


if __name__ == "__main__":
    key = jax.random.PRNGKey(0)
    kfeat, kwc, kbc, kwb, kbb = jax.random.split(key, 5)

    # Conv2d(256, 18, 1) / Conv2d(256, 36, 1) parameters, (out, in) layout.
    w_cls = jax.random.normal(kwc, (C_CLS, C_IN), jnp.float32) * 0.01
    b_cls = jax.random.normal(kbc, (C_CLS,), jnp.float32) * 0.01
    w_box = jax.random.normal(kwb, (C_BOX, C_IN), jnp.float32) * 0.01
    b_box = jax.random.normal(kbb, (C_BOX,), jnp.float32) * 0.01

    # Five FPN-like levels, batch=2, 256 channels, NCHW.  The 48x48 level
    # (H*W = 2304 > TILE_N) exercises the tiled / masked-ragged-last-block
    # path; the smaller levels take the whole-level-in-one-tile path.
    B = 2
    spatials = [48, 24, 16, 8, 4]
    fpn_features = [
        jax.random.normal(jax.random.fold_in(kfeat, i), (B, C_IN, s, s), jnp.float32)
        for i, s in enumerate(spatials)
    ]

    out = detection_network_forward(fpn_features, (w_cls, b_cls, w_box, b_box))
    out = jax.block_until_ready(out)

    # Plain-JAX reference for the two 1x1 convs, checked on EVERY level
    # (covers the ragged tail tile and every small-level path).
    for lvl, (f, s) in enumerate(zip(fpn_features, spatials)):
        ref_logits = jnp.einsum('bchw,oc->bohw', f, w_cls) + b_cls[None, :, None, None]
        ref_bbox = jnp.einsum('bchw,oc->bohw', f, w_box) + b_box[None, :, None, None]
        logits, bbox = out[lvl]
        assert logits.shape == (B, C_CLS, s, s)
        assert bbox.shape == (B, C_BOX, s, s)
        assert jnp.allclose(logits, ref_logits, atol=2e-4), f"cls_logits mismatch @ level {lvl}"
        assert jnp.allclose(bbox, ref_bbox, atol=2e-4), f"bbox_pred mismatch @ level {lvl}"

    print("KERNEL_OK")
</pallas_src>

<mosaic_0001>
module attributes {stable_mosaic.version = 11 : i64} {
  func.func @_rpn_head_kernel(%arg0: i32, %arg1: i32, %arg2: memref<18x256xf32, #tpu.memory_space<vmem>>, %arg3: memref<18x1xf32, #tpu.memory_space<vmem>>, %arg4: memref<36x256xf32, #tpu.memory_space<vmem>>, %arg5: memref<36x1xf32, #tpu.memory_space<vmem>>, %arg6: memref<1x256x2048xf32, #tpu.memory_space<vmem>>, %arg7: memref<1x18x2048xf32, #tpu.memory_space<vmem>>, %arg8: memref<1x36x2048xf32, #tpu.memory_space<vmem>>) attributes {dimension_semantics = [#tpu.dimension_semantics<parallel>, #tpu.dimension_semantics<parallel>], iteration_bounds = array<i64: 2, 2>, scalar_prefetch = 0 : i64, scratch_operands = 0 : i64, tpu.core_type = #tpu.core_type<tc>, window_params = [{pipeline_mode = #tpu.pipeline_mode<synchronous>, transform_indices = @transform_0, window_bounds = array<i64: 18, 256>}, {pipeline_mode = #tpu.pipeline_mode<synchronous>, transform_indices = @transform_1, window_bounds = array<i64: 18, 1>}, {pipeline_mode = #tpu.pipeline_mode<synchronous>, transform_indices = @transform_2, window_bounds = array<i64: 36, 256>}, {pipeline_mode = #tpu.pipeline_mode<synchronous>, transform_indices = @transform_3, window_bounds = array<i64: 36, 1>}, {transform_indices = @transform_4, window_bounds = array<i64: 1, 256, 2048>}, {transform_indices = @transform_5, window_bounds = array<i64: 1, 18, 2048>}, {transform_indices = @transform_6, window_bounds = array<i64: 1, 36, 2048>}]} {
    %c0 = arith.constant 0 : index
    %c0_0 = arith.constant 0 : index
    %c0_1 = arith.constant 0 : index
    %0 = vector.load %arg6[%c0, %c0_0, %c0_1] : memref<1x256x2048xf32, #tpu.memory_space<vmem>>, vector<1x256x2048xf32>
    %1 = vector.shape_cast %0 : vector<1x256x2048xf32> to vector<256x2048xf32>
    %c0_2 = arith.constant 0 : index
    %c0_3 = arith.constant 0 : index
    %2 = vector.load %arg2[%c0_2, %c0_3] : memref<18x256xf32, #tpu.memory_space<vmem>>, vector<18x256xf32>
    %cst = arith.constant dense<0.000000e+00> : vector<18x2048xf32>
    %3 = tpu.matmul %2, %1, %cst {dimension_numbers = #tpu.dot_dimension_numbers<[1], [0], [0], [1], [0, 0, 1, 1], [], []>} : vector<18x256xf32>, vector<256x2048xf32>, vector<18x2048xf32> -> vector<18x2048xf32>
    %c0_4 = arith.constant 0 : index
    %c0_5 = arith.constant 0 : index
    %4 = vector.load %arg4[%c0_4, %c0_5] : memref<36x256xf32, #tpu.memory_space<vmem>>, vector<36x256xf32>
    %cst_6 = arith.constant dense<0.000000e+00> : vector<36x2048xf32>
    %5 = tpu.matmul %4, %1, %cst_6 {dimension_numbers = #tpu.dot_dimension_numbers<[1], [0], [0], [1], [0, 0, 1, 1], [], []>} : vector<36x256xf32>, vector<256x2048xf32>, vector<36x2048xf32> -> vector<36x2048xf32>
    %c0_7 = arith.constant 0 : index
    %c0_8 = arith.constant 0 : index
    %6 = vector.load %arg3[%c0_7, %c0_8] : memref<18x1xf32, #tpu.memory_space<vmem>>, vector<18x1xf32>
    %7 = vector.broadcast %6 : vector<18x1xf32> to vector<18x2048xf32>
    %8 = arith.addf %3, %7 : vector<18x2048xf32>
    %9 = vector.shape_cast %8 : vector<18x2048xf32> to vector<1x18x2048xf32>
    %c0_9 = arith.constant 0 : index
    %c0_10 = arith.constant 0 : index
    %c0_11 = arith.constant 0 : index
    %10 = vector.load %arg7[%c0_9, %c0_10, %c0_11] : memref<1x18x2048xf32, #tpu.memory_space<vmem>>, vector<1x18x2048xf32>
    tpu.vector_store %arg7[%c0_9, %c0_10, %c0_11], %9 {strides = array<i32>} : memref<1x18x2048xf32, #tpu.memory_space<vmem>>, vector<1x18x2048xf32>,
    %c0_12 = arith.constant 0 : index
    %c0_13 = arith.constant 0 : index
    %11 = vector.load %arg5[%c0_12, %c0_13] : memref<36x1xf32, #tpu.memory_space<vmem>>, vector<36x1xf32>
    %12 = vector.broadcast %11 : vector<36x1xf32> to vector<36x2048xf32>
    %13 = arith.addf %5, %12 : vector<36x2048xf32>
    %14 = vector.shape_cast %13 : vector<36x2048xf32> to vector<1x36x2048xf32>
    %c0_14 = arith.constant 0 : index
    %c0_15 = arith.constant 0 : index
    %c0_16 = arith.constant 0 : index
    %15 = vector.load %arg8[%c0_14, %c0_15, %c0_16] : memref<1x36x2048xf32, #tpu.memory_space<vmem>>, vector<1x36x2048xf32>
    tpu.vector_store %arg8[%c0_14, %c0_15, %c0_16], %14 {strides = array<i32>} : memref<1x36x2048xf32, #tpu.memory_space<vmem>>, vector<1x36x2048xf32>,
    return
  }
  func.func @transform_0(%arg0: i32, %arg1: i32) -> (i32, i32) {
    %c0_i32 = arith.constant 0 : i32
    %c0_i32_0 = arith.constant 0 : i32
    %c0_i32_1 = arith.constant 0 : i32
    return %c0_i32, %c0_i32_0 : i32, i32
  }
  func.func @transform_1(%arg0: i32, %arg1: i32) -> (i32, i32) {
    %c0_i32 = arith.constant 0 : i32
    %c0_i32_0 = arith.constant 0 : i32
    %c0_i32_1 = arith.constant 0 : i32
    return %c0_i32, %c0_i32_0 : i32, i32
  }
  func.func @transform_2(%arg0: i32, %arg1: i32) -> (i32, i32) {
    %c0_i32 = arith.constant 0 : i32
    %c0_i32_0 = arith.constant 0 : i32
    %c0_i32_1 = arith.constant 0 : i32
    return %c0_i32, %c0_i32_0 : i32, i32
  }
  func.func @transform_3(%arg0: i32, %arg1: i32) -> (i32, i32) {
    %c0_i32 = arith.constant 0 : i32
    %c0_i32_0 = arith.constant 0 : i32
    %c0_i32_1 = arith.constant 0 : i32
    return %c0_i32, %c0_i32_0 : i32, i32
  }
  func.func @transform_4(%arg0: i32, %arg1: i32) -> (i32, i32, i32) {
    %c0_i32 = arith.constant 0 : i32
    %c0_i32_0 = arith.constant 0 : i32
    return %arg0, %c0_i32, %arg1 : i32, i32, i32
  }
  func.func @transform_5(%arg0: i32, %arg1: i32) -> (i32, i32, i32) {
    %c0_i32 = arith.constant 0 : i32
    %c0_i32_0 = arith.constant 0 : i32
    return %arg0, %c0_i32, %arg1 : i32, i32, i32
  }
  func.func @transform_6(%arg0: i32, %arg1: i32) -> (i32, i32, i32) {
    %c0_i32 = arith.constant 0 : i32
    %c0_i32_0 = arith.constant 0 : i32
    return %arg0, %c0_i32, %arg1 : i32, i32, i32
  }
}

</mosaic_0001>

<llo_original>
// kernel: tpu_custom_call.1
$region0: #{tpu_custom_call.1}
  #allocation0 [shape = 'u32[]', space=smem, size = 0x4, offset = 0x4, fixed_abs, tag = 'smem constant byte address 0x4 - core index']
  #allocation1 [shape = 'u32[144,128]{1,0:T(1,128)}', space=vmem, size = 0x12000, scoped, tag = 'internal scratch']
  %s0 = inlined_call_operand.hbm [shape: f32[18,256], index: 0, kind: input, shape index: {}]
  %s1 = inlined_call_operand.vmem [shape: f32[18,1], index: 1, kind: input, shape index: {}]
  %s2 = inlined_call_operand.hbm [shape: f32[36,256], index: 2, kind: input, shape index: {}]
  %s3 = inlined_call_operand.vmem [shape: f32[36,1], index: 3, kind: input, shape index: {}]
  %s4 = inlined_call_operand.hbm [shape: f32[2,256,2304], index: 4, kind: input, shape index: {}]
  %s5 = inlined_call_operand.vmem [shape: f32[2,18,2304], index: 5, kind: output, shape index: {0}]
  %s6 = inlined_call_operand.vmem [shape: f32[2,36,2304], index: 6, kind: output, shape index: {1}]
  %7 = xla_tuple %s5, %s6
  %s8 = sld [smem:[#allocation0]]
  $region197: #{tpu_custom_call.1} parent=0
    _
  %s10 = ssub.s32 1, %s8
  %s11 = scalar_select 0, %s10, %s8
  $region1: #{tpu_custom_call.1} parent=0
    #allocation2 [shape = 'u8[24576]{0}', space=vmem, size = 0x6000, scoped, tag = 'input window, operand 0, single buffered']
    #allocation3 [shape = 's32[2]{0}', space=sflag, size = 0x8, scoped, tag = 'scoped memory for tpu_custom_call.1']
    #allocation4 [shape = 'u8[40960]{0}', space=vmem, size = 0xa000, scoped, tag = 'input window, operand 2, single buffered']
    #allocation5 [shape = 's32[1]{0}', space=sflag, size = 0x4, scoped, tag = 'scoped memory for tpu_custom_call.1']
    #allocation6 [shape = 'u8[4194304]{0}', space=vmem, size = 0x400000, scoped, tag = 'input window, operand 4']
    #allocation7 [shape = 'u8[393216]{0}', space=vmem, size = 0x60000, scoped, tag = 'output window, operand 0']
    #allocation8 [shape = 'u8[655360]{0}', space=vmem, size = 0xa0000, scoped, tag = 'output window, operand 1']
    %12 = vsyncpa [#allocation3], 0
    %13 = vsyncpa [#allocation5], 0
    loop: start=0, step=1, limit=6
    $region2: #{tpu_custom_call.1} parent=1 // loop_pre_header
      _
    $region3: #{tpu_custom_call.1} parent=1 // loop_header
      %s15 = sphi 0, %s19
      %p16 = scmp.ge.s32.totalorder %s15, 6
      %s22 = sphi 0, %s34
      %s23 = sphi 0, %s30
      %s24 = sphi 0, %s22
      %s25 = sphi 0, %s23
      %s26 = sphi 0, %s24
      %s27 = sphi 0, %s25
      %s35 = sphi 0, %s35
      %s37 = sphi 0, %s35
      %s38 = sphi 0, %s37
      %s52 = sphi 0, %s38
      %s56 = sphi 0, %s56
      %s58 = sphi 0, %s56
      %s59 = sphi 0, %s58
      %s73 = sphi 0, %s59
      %s77 = sphi 0, %s77
      %s79 = sphi 0, %s77
      %s80 = sphi 0, %s79
      %s94 = sphi 0, %s80
      %s98 = sphi 0, %s98
      %s100 = sphi 0, %s98
      %s101 = sphi 0, %s100
      %s115 = sphi 0, %s101
      %s123 = sphi 0, %s125
      %s126 = sphi 0, %s123
      %s127 = sphi 0, %s126
      %s143 = sphi 0, %s127
      %s151 = sphi 0, %s153
      %s154 = sphi 0, %s151
      %s155 = sphi 0, %s154
      %s171 = sphi 0, %s155
      %s179 = sphi 0, %s181
      %s182 = sphi 0, %s179
      %s183 = sphi 0, %s182
      %s199 = sphi 0, %s183
    $region4: #{tpu_custom_call.1} parent=1 // loop_header_branch
      %18 = sbr.rel (%p16) target = $region8
    $region5: #{tpu_custom_call.1} parent=1 // loop_body
      %s20 = ssub.s32 %s15, 1
      %s21 = ssub.s32 %s15, 2
      %s28 = sadd.s32 1, %s23
      %p29 = scmp.ge.s32.totalorder %s28, 2
      %s30 = scalar_select %p29, 0, %s28
      %s31 = sadd.s32 1, %s22
      %s32 = scalar_select %p29, %s31, %s22
      %p33 = scmp.ge.s32.totalorder %s32, 2
      %s34 = scalar_select %p33, 0, %s32
      %s36 = sadd.s32 %s35, 1
      %p39 = scmp.eq.s32.totalorder %s15, 3
      %p40 = scmp.ne.s32.totalorder %s35, %s37
      %p41 = scmp.eq.s32.totalorder %s15, 0
      %p42 = por %p40, %p41
      %p43 = scmp.ne.s32.totalorder %s35, %s37
      %p44 = scmp.eq.s32.totalorder %s20, 3
      %p45 = por %p43, %p44
      %p46 = scmp.ne.s32.totalorder %s37, %s38
      %p47 = scmp.eq.s32.totalorder %s20, 0
      %p48 = por %p46, %p47
      %p49 = scmp.ne.s32.totalorder %s37, %s38
      %p50 = scmp.eq.s32.totalorder %s21, 3
      %p51 = por %p49, %p50
      %p53 = scmp.ne.s32.totalorder %s38, %s52
      %p54 = scmp.eq.s32.totalorder %s21, 0
      %p55 = por %p53, %p54
      %s57 = sadd.s32 %s56, 1
      %p60 = scmp.eq.s32.totalorder %s15, 3
      %p61 = scmp.ne.s32.totalorder %s56, %s58
      %p62 = scmp.eq.s32.totalorder %s15, 0
      %p63 = por %p61, %p62
      %p64 = scmp.ne.s32.totalorder %s56, %s58
      %p65 = scmp.eq.s32.totalorder %s20, 3
      %p66 = por %p64, %p65
      %p67 = scmp.ne.s32.totalorder %s58, %s59
      %p68 = scmp.eq.s32.totalorder %s20, 0
      %p69 = por %p67, %p68
      %p70 = scmp.ne.s32.totalorder %s58, %s59
      %p71 = scmp.eq.s32.totalorder %s21, 3
      %p72 = por %p70, %p71
      %p74 = scmp.ne.s32.totalorder %s59, %s73
      %p75 = scmp.eq.s32.totalorder %s21, 0
      %p76 = por %p74, %p75
      %s78 = sadd.s32 %s77, 1
      %p81 = scmp.eq.s32.totalorder %s15, 3
      %p82 = scmp.ne.s32.totalorder %s77, %s79
      %p83 = scmp.eq.s32.totalorder %s15, 0
      %p84 = por %p82, %p83
      %p85 = scmp.ne.s32.totalorder %s77, %s79
      %p86 = scmp.eq.s32.totalorder %s20, 3
      %p87 = por %p85, %p86
      %p88 = scmp.ne.s32.totalorder %s79, %s80
      %p89 = scmp.eq.s32.totalorder %s20, 0
      %p90 = por %p88, %p89
      %p91 = scmp.ne.s32.totalorder %s79, %s80
      %p92 = scmp.eq.s32.totalorder %s21, 3
      %p93 = por %p91, %p92
      %p95 = scmp.ne.s32.totalorder %s80, %s94
      %p96 = scmp.eq.s32.totalorder %s21, 0
      %p97 = por %p95, %p96
      %s99 = sadd.s32 %s98, 1
      %p102 = scmp.eq.s32.totalorder %s15, 3
      %p103 = scmp.ne.s32.totalorder %s98, %s100
      %p104 = scmp.eq.s32.totalorder %s15, 0
      %p105 = por %p103, %p104
      %p106 = scmp.ne.s32.totalorder %s98, %s100
      %p107 = scmp.eq.s32.totalorder %s20, 3
      %p108 = por %p106, %p107
      %p109 = scmp.ne.s32.totalorder %s100, %s101
      %p110 = scmp.eq.s32.totalorder %s20, 0
      %p111 = por %p109, %p110
      %p112 = scmp.ne.s32.totalorder %s100, %s101
      %p113 = scmp.eq.s32.totalorder %s21, 3
      %p114 = por %p112, %p113
      %p116 = scmp.ne.s32.totalorder %s101, %s115
      %p117 = scmp.eq.s32.totalorder %s21, 0
      %p118 = por %p116, %p117
      %s119 = ssub.s32 %s22, %s34
      %s120 = ssub.s32 %s23, %s30
      %s121 = sor.u32 %s119, %s120
      %p122 = scmp.eq.s32.totalorder %s121, 0
      %s124 = sadd.s32 %s123, 1
      %s125 = scalar_select %p122, %s123, %s124
      %p128 = pneg %p122
      %p129 = scmp.eq.s32.totalorder %s15, 3
      %p130 = por %p128, %p129
      %p131 = scmp.ne.s32.totalorder %s123, %s126
      %p132 = scmp.eq.s32.totalorder %s15, 0
      %p133 = por %p131, %p132
      %p134 = scmp.ne.s32.totalorder %s123, %s126
      %p135 = scmp.eq.s32.totalorder %s20, 3
      %p136 = por %p134, %p135
      %p137 = scmp.ne.s32.totalorder %s126, %s127
      %p138 = scmp.eq.s32.totalorder %s20, 0
      %p139 = por %p137, %p138
      %p140 = scmp.ne.s32.totalorder %s126, %s127
      %p141 = scmp.eq.s32.totalorder %s21, 3
      %p142 = por %p140, %p141
      %p144 = scmp.ne.s32.totalorder %s127, %s143
      %p145 = scmp.eq.s32.totalorder %s21, 0
      %p146 = por %p144, %p145
      %s147 = ssub.s32 %s22, %s34
      %s148 = ssub.s32 %s23, %s30
      %s149 = sor.u32 %s147, %s148
      %p150 = scmp.eq.s32.totalorder %s149, 0
      %s152 = sadd.s32 %s151, 1
      %s153 = scalar_select %p150, %s151, %s152
      %p156 = pneg %p150
      %p157 = scmp.eq.s32.totalorder %s15, 3
      %p158 = por %p156, %p157
      %p159 = scmp.ne.s32.totalorder %s151, %s154
      %p160 = scmp.eq.s32.totalorder %s15, 0
      %p161 = por %p159, %p160
      %p162 = scmp.ne.s32.totalorder %s151, %s154
      %p163 = scmp.eq.s32.totalorder %s20, 3
      %p164 = por %p162, %p163
      %p165 = scmp.ne.s32.totalorder %s154, %s155
      %p166 = scmp.eq.s32.totalorder %s20, 0
      %p167 = por %p165, %p166
      %p168 = scmp.ne.s32.totalorder %s154, %s155
      %p169 = scmp.eq.s32.totalorder %s21, 3
      %p170 = por %p168, %p169
      %p172 = scmp.ne.s32.totalorder %s155, %s171
      %p173 = scmp.eq.s32.totalorder %s21, 0
      %p174 = por %p172, %p173
      %s175 = ssub.s32 %s22, %s34
      %s176 = ssub.s32 %s23, %s30
      %s177 = sor.u32 %s175, %s176
      %p178 = scmp.eq.s32.totalorder %s177, 0
      %s180 = sadd.s32 %s179, 1
      %s181 = scalar_select %p178, %s179, %s180
      %p184 = pneg %p178
      %p185 = scmp.eq.s32.totalorder %s15, 3
      %p186 = por %p184, %p185
      %p187 = scmp.ne.s32.totalorder %s179, %s182
      %p188 = scmp.eq.s32.totalorder %s15, 0
      %p189 = por %p187, %p188
      %p190 = scmp.ne.s32.totalorder %s179, %s182
      %p191 = scmp.eq.s32.totalorder %s20, 3
      %p192 = por %p190, %p191
      %p193 = scmp.ne.s32.totalorder %s182, %s183
      %p194 = scmp.eq.s32.totalorder %s20, 0
      %p195 = por %p193, %p194
      %p196 = scmp.ne.s32.totalorder %s182, %s183
      %p197 = scmp.eq.s32.totalorder %s21, 3
      %p198 = por %p196, %p197
      %p200 = scmp.ne.s32.totalorder %s183, %s199
      %p201 = scmp.eq.s32.totalorder %s21, 0
      %p202 = por %p200, %p201
      %p203 = scmp.le.s32.totalorder 1, %s15
      %p204 = scmp.lt.s32.totalorder %s15, 5
      %p205 = pnand %p203, %p204
      %p206 = pneg %p205
      // Predicated region
      $region9: #{tpu_custom_call.1} parent=5 // pred_check
        _
      $region10: #{tpu_custom_call.1} parent=5 // pred_check_branch
        %208 = sbr.rel (%p205) target = $region12
      $region11: #{tpu_custom_call.1} parent=5 // pred_region
        %s209 = ssub.s32 %s15, 1
        // Predicated region
        $region13: #{tpu_custom_call.1} parent=11 // pred_check
          %p210 = pneg %p48
        $region14: #{tpu_custom_call.1} parent=11 // pred_check_branch
          %212 = sbr.rel (%p210) target = $region16
        $region15: #{tpu_custom_call.1} parent=11 // pred_region
          %s214 = ssub.s32 768, 768
          %215 = vsyncadd [#allocation3], %s214
          %s216 = sshll.u32 [#allocation2], 4
          %s217 = int_to_ptr.vmem [resolvable:$true] %s216
          %222 = dma.hbm_to_vmem [thread:$0]  %s0, 768, %s217, [#allocation3], 256, 256, 16
        $region16: #{tpu_custom_call.1} parent=11 // pred_fallthru
          _
        // Predicated region
        $region17: #{tpu_custom_call.1} parent=11 // pred_check
          %p223 = pneg %p69
        $region18: #{tpu_custom_call.1} parent=11 // pred_check_branch
          %225 = sbr.rel (%p223) target = $region20
        $region19: #{tpu_custom_call.1} parent=11 // pred_region
          _
        $region20: #{tpu_custom_call.1} parent=11 // pred_fallthru
          _
        // Predicated region
        $region21: #{tpu_custom_call.1} parent=11 // pred_check
          %p226 = pneg %p90
        $region22: #{tpu_custom_call.1} parent=11 // pred_check_branch
          %228 = sbr.rel (%p226) target = $region24
        $region23: #{tpu_custom_call.1} parent=11 // pred_region
          %s230 = ssub.s32 1280, 1280
          %231 = vsyncadd [#allocation5], %s230
          %s232 = sshll.u32 [#allocation4], 4
          %s233 = int_to_ptr.vmem [resolvable:$true] %s232
          %238 = dma.hbm_to_vmem [thread:$0]  %s2, 1280, %s233, [#allocation5], 256, 256, 16
        $region24: #{tpu_custom_call.1} parent=11 // pred_fallthru
          _
        // Predicated region
        $region25: #{tpu_custom_call.1} parent=11 // pred_check
          %p239 = pneg %p111
        $region26: #{tpu_custom_call.1} parent=11 // pred_check_branch
          %241 = sbr.rel (%p239) target = $region28
        $region27: #{tpu_custom_call.1} parent=11 // pred_region
          _
        $region28: #{tpu_custom_call.1} parent=11 // pred_fallthru
          _
      $region12: #{tpu_custom_call.1} parent=5 // pred_fallthru
        _
      %p242 = scmp.lt.s32.totalorder %s15, 4
      // Predicated region
      $region29: #{tpu_custom_call.1} parent=5 // pred_check
        %p243 = pneg %p242
      $region30: #{tpu_custom_call.1} parent=5 // pred_check_branch
        %245 = sbr.rel (%p243) target = $region32
      $region31: #{tpu_custom_call.1} parent=5 // pred_region
        // Predicated region
        $region33: #{tpu_custom_call.1} parent=31 // pred_check
          %p246 = pneg %p133
        $region34: #{tpu_custom_call.1} parent=31 // pred_check_branch
          %248 = sbr.rel (%p246) target = $region36
        $region35: #{tpu_custom_call.1} parent=31 // pred_region
          %s249 = sand.u32 %s15, 1
          %s250 = scalar_lea.sflag [#allocation3], %s249
          %s251 = sand.u32 %s123, 1
          %s252 = smul.addr %s251, 4096
          %s253 = scalar_lea.vmem [#allocation6], %s252
          %s254 = smul.u32 16, %s23
          %s255 = ssub.s32 18, %s254
          %p256 = scmp.lt.s32.totalorder %s255, 16
          %s257 = scalar_select %p256, %s255, 16
          %s258 = smul.u32 4096, %s257
          %s260 = ssub.s32 65536, %s258
          %261 = vsyncadd %s250, %s260
          %p262 = scmp.ne.s32.totalorder 0, %s258
          %s263 = smul.addr %s22, 576
          %s264 = sadd.s32 %s254, %s263
          %s265 = smul.addr %s264, 128
          %s266 = scalar_lea.hbm %s4, %s265
          %s267 = smul.u32 %s257, 8
          %s268 = smul.u32 %s267, 32
          %s269 = sshll.u32 %s253, 4
          %s270 = int_to_ptr.vmem [resolvable:$true] %s269
          %s271 = sshll.u32 %s268, 4
          %275 = dma.hbm_to_vmem [thread:$0]  (%p262), %s266, %s271, %s270, %s250, 2304, 2048, %s267
        $region36: #{tpu_custom_call.1} parent=31 // pred_fallthru
          _
      $region32: #{tpu_custom_call.1} parent=5 // pred_fallthru
        _
      %p276 = scmp.le.s32.totalorder 1, %s15
      %p277 = scmp.lt.s32.totalorder %s15, 5
      %p278 = pnand %p276, %p277
      %p279 = pneg %p278
      // Predicated region
      $region37: #{tpu_custom_call.1} parent=5 // pred_check
        _
      $region38: #{tpu_custom_call.1} parent=5 // pred_check_branch
        %281 = sbr.rel (%p278) target = $region40
      $region39: #{tpu_custom_call.1} parent=5 // pred_region
        %s282 = ssub.s32 %s15, 1
        // Predicated region
        $region41: #{tpu_custom_call.1} parent=39 // pred_check
          %p283 = pneg %p48
        $region42: #{tpu_custom_call.1} parent=39 // pred_check_branch
          %285 = sbr.rel (%p283) target = $region44
        $region43: #{tpu_custom_call.1} parent=39 // pred_region
          %286 = dma.done [#allocation3], 768
        $region44: #{tpu_custom_call.1} parent=39 // pred_fallthru
          _
        // Predicated region
        $region45: #{tpu_custom_call.1} parent=39 // pred_check
          %p287 = pneg %p90
        $region46: #{tpu_custom_call.1} parent=39 // pred_check_branch
          %289 = sbr.rel (%p287) target = $region48
        $region47: #{tpu_custom_call.1} parent=39 // pred_region
          %290 = dma.done [#allocation5], 1280
        $region48: #{tpu_custom_call.1} parent=39 // pred_fallthru
          _
        %s291 = sand.u32 %s20, 1
        %s292 = scalar_lea.sflag [#allocation3], %s291
        %s293 = sand.u32 %s126, 1
        %s294 = smul.addr %s293, 4096
        %s295 = scalar_lea.vmem [#allocation6], %s294
        // Predicated region
        $region49: #{tpu_custom_call.1} parent=39 // pred_check
          %p296 = pneg %p139
        $region50: #{tpu_custom_call.1} parent=39 // pred_check_branch
          %298 = sbr.rel (%p296) target = $region52
        $region51: #{tpu_custom_call.1} parent=39 // pred_region
          %299 = dma.done %s292, 65536
        $region52: #{tpu_custom_call.1} parent=39 // pred_fallthru
          _
        %p300 = pneg %p48
        %p301 = pneg %p45
        %p302 = pneg %p69
        %p303 = pneg %p66
        %p304 = pneg %p90
        %p305 = pneg %p87
        %p306 = pneg %p111
        %p307 = pneg %p108
        %s308 = sand.u32 %s20, 1
        %s309 = scalar_lea.sflag [#allocation3], %s308
        %s310 = sand.u32 %s126, 1
        %s311 = smul.addr %s310, 4096
        %s312 = scalar_lea.vmem [#allocation6], %s311
        %p313 = pneg %p139
        %p314 = pneg %p136
        %p315 = pneg %p167
        %p316 = pneg %p164
        %s317 = sand.u32 %s154, 1
        %s318 = sand.u32 %s154, 1
        %s319 = smul.addr %s318, 384
        %s320 = scalar_lea.vmem [#allocation7], %s319
        %p321 = pneg %p195
        %p322 = pneg %p192
        %s323 = sand.u32 %s182, 1
        %s324 = sand.u32 %s182, 1
        %s325 = smul.addr %s324, 640
        %s326 = scalar_lea.vmem [#allocation8], %s325
        %s327 = smul.u32 16, %s25
        %s328 = ssub.s32 18, %s327
        %p329 = scmp.lt.s32.totalorder %s328, 16
        %s330 = scalar_select %p329, %s328, 16
        %s331 = smul.u32 4096, %s330
        %s332 = smul.u32 16, %s25
        %s333 = ssub.s32 18, %s332
        %p334 = scmp.lt.s32.totalorder %s333, 16
        %s335 = scalar_select %p334, %s333, 16
        %s336 = smul.u32 384, %s335
        %s337 = smul.u32 16, %s25
        %s338 = ssub.s32 18, %s337
        %p339 = scmp.lt.s32.totalorder %s338, 16
        %s340 = scalar_select %p339, %s338, 16
        %s341 = smul.u32 640, %s340
        %v342 = vld [vmem:[%s295] sm:$0xff]
        %v343 = vld [vmem:[%s295 + $0x8] sm:$0xff]
        %v344 = vld [vmem:[%s295 + $0x10] sm:$0xff]
        %v345 = vld [vmem:[%s295 + $0x18] sm:$0xff]
        %v346 = vld [vmem:[%s295 + $0x20] sm:$0xff]
        %v347 = vld [vmem:[%s295 + $0x28] sm:$0xff]
        %v348 = vld [vmem:[%s295 + $0x30] sm:$0xff]
        %v349 = vld [vmem:[%s295 + $0x38] sm:$0xff]
        %v350 = vld [vmem:[%s295 + $0x40] sm:$0xff]
        %v351 = vld [vmem:[%s295 + $0x48] sm:$0xff]
        %v352 = vld [vmem:[%s295 + $0x50] sm:$0xff]
        %v353 = vld [vmem:[%s295 + $0x58] sm:$0xff]
        %v354 = vld [vmem:[%s295 + $0x60] sm:$0xff]
        %v355 = vld [vmem:[%s295 + $0x68] sm:$0xff]
        %v356 = vld [vmem:[%s295 + $0x70] sm:$0xff]
        %v357 = vld [vmem:[%s295 + $0x78] sm:$0xff]
        %v358 = vld [vmem:[%s295 + $0x80] sm:$0xff]
        %v359 = vld [vmem:[%s295 + $0x88] sm:$0xff]
        %v360 = vld [vmem:[%s295 + $0x90] sm:$0xff]
        %v361 = vld [vmem:[%s295 + $0x98] sm:$0xff]
        %v362 = vld [vmem:[%s295 + $0xa0] sm:$0xff]
        %v363 = vld [vmem:[%s295 + $0xa8] sm:$0xff]
        %v364 = vld [vmem:[%s295 + $0xb0] sm:$0xff]
        %v365 = vld [vmem:[%s295 + $0xb8] sm:$0xff]
        %v366 = vld [vmem:[%s295 + $0xc0] sm:$0xff]
        %v367 = vld [vmem:[%s295 + $0xc8] sm:$0xff]
        %v368 = vld [vmem:[%s295 + $0xd0] sm:$0xff]
        %v369 = vld [vmem:[%s295 + $0xd8] sm:$0xff]
        %v370 = vld [vmem:[%s295 + $0xe0] sm:$0xff]
        %v371 = vld [vmem:[%s295 + $0xe8] sm:$0xff]
        %v372 = vld [vmem:[%s295 + $0xf0] sm:$0xff]
        %v373 = vld [vmem:[%s295 + $0xf8] sm:$0xff]
        %v374 = vld [vmem:[%s295 + $0x100] sm:$0xff]
        %v375 = vld [vmem:[%s295 + $0x108] sm:$0xff]
        %v376 = vld [vmem:[%s295 + $0x110] sm:$0xff]
        %v377 = vld [vmem:[%s295 + $0x118] sm:$0xff]
        %v378 = vld [vmem:[%s295 + $0x120] sm:$0xff]
        %v379 = vld [vmem:[%s295 + $0x128] sm:$0xff]
        %v380 = vld [vmem:[%s295 + $0x130] sm:$0xff]
        %v381 = vld [vmem:[%s295 + $0x138] sm:$0xff]
        %v382 = vld [vmem:[%s295 + $0x140] sm:$0xff]
        %v383 = vld [vmem:[%s295 + $0x148] sm:$0xff]
        %v384 = vld [vmem:[%s295 + $0x150] sm:$0xff]
        %v385 = vld [vmem:[%s295 + $0x158] sm:$0xff]
        %v386 = vld [vmem:[%s295 + $0x160] sm:$0xff]
        %v387 = vld [vmem:[%s295 + $0x168] sm:$0xff]
        %v388 = vld [vmem:[%s295 + $0x170] sm:$0xff]
        %v389 = vld [vmem:[%s295 + $0x178] sm:$0xff]
        %v390 = vld [vmem:[%s295 + $0x180] sm:$0xff]
        %v391 = vld [vmem:[%s295 + $0x188] sm:$0xff]
        %v392 = vld [vmem:[%s295 + $0x190] sm:$0xff]
        %v393 = vld [vmem:[%s295 + $0x198] sm:$0xff]
        %v394 = vld [vmem:[%s295 + $0x1a0] sm:$0xff]
        %v395 = vld [vmem:[%s295 + $0x1a8] sm:$0xff]
        %v396 = vld [vmem:[%s295 + $0x1b0] sm:$0xff]
        %v397 = vld [vmem:[%s295 + $0x1b8] sm:$0xff]
        %v398 = vld [vmem:[%s295 + $0x1c0] sm:$0xff]
        %v399 = vld [vmem:[%s295 + $0x1c8] sm:$0xff]
        %v400 = vld [vmem:[%s295 + $0x1d0] sm:$0xff]
        %v401 = vld [vmem:[%s295 + $0x1d8] sm:$0xff]
        %v402 = vld [vmem:[%s295 + $0x1e0] sm:$0xff]
        %v403 = vld [vmem:[%s295 + $0x1e8] sm:$0xff]
        %v404 = vld [vmem:[%s295 + $0x1f0] sm:$0xff]
        %v405 = vld [vmem:[%s295 + $0x1f8] sm:$0xff]
        %v406 = vld [vmem:[%s295 + $0x200] sm:$0xff]
        %v407 = vld [vmem:[%s295 + $0x208] sm:$0xff]
        %v408 = vld [vmem:[%s295 + $0x210] sm:$0xff]
        %v409 = vld [vmem:[%s295 + $0x218] sm:$0xff]
        %v410 = vld [vmem:[%s295 + $0x220] sm:$0xff]
        %v411 = vld [vmem:[%s295 + $0x228] sm:$0xff]
        %v412 = vld [vmem:[%s295 + $0x230] sm:$0xff]
        %v413 = vld [vmem:[%s295 + $0x238] sm:$0xff]
        %v414 = vld [vmem:[%s295 + $0x240] sm:$0xff]
        %v415 = vld [vmem:[%s295 + $0x248] sm:$0xff]
        %v416 = vld [vmem:[%s295 + $0x250] sm:$0xff]
        %v417 = vld [vmem:[%s295 + $0x258] sm:$0xff]
        %v418 = vld [vmem:[%s295 + $0x260] sm:$0xff]
        %v419 = vld [vmem:[%s295 + $0x268] sm:$0xff]
        %v420 = vld [vmem:[%s295 + $0x270] sm:$0xff]
        %v421 = vld [vmem:[%s295 + $0x278] sm:$0xff]
        %v422 = vld [vmem:[%s295 + $0x280] sm:$0xff]
        %v423 = vld [vmem:[%s295 + $0x288] sm:$0xff]
        %v424 = vld [vmem:[%s295 + $0x290] sm:$0xff]
        %v425 = vld [vmem:[%s295 + $0x298] sm:$0xff]
        %v426 = vld [vmem:[%s295 + $0x2a0] sm:$0xff]
        %v427 = vld [vmem:[%s295 + $0x2a8] sm:$0xff]
        %v428 = vld [vmem:[%s295 + $0x2b0] sm:$0xff]
        %v429 = vld [vmem:[%s295 + $0x2b8] sm:$0xff]
        %v430 = vld [vmem:[%s295 + $0x2c0] sm:$0xff]
        %v431 = vld [vmem:[%s295 + $0x2c8] sm:$0xff]
        %v432 = vld [vmem:[%s295 + $0x2d0] sm:$0xff]
        %v433 = vld [vmem:[%s295 + $0x2d8] sm:$0xff]
        %v434 = vld [vmem:[%s295 + $0x2e0] sm:$0xff]
        %v435 = vld [vmem:[%s295 + $0x2e8] sm:$0xff]
        %v436 = vld [vmem:[%s295 + $0x2f0] sm:$0xff]
        %v437 = vld [vmem:[%s295 + $0x2f8] sm:$0xff]
        %v438 = vld [vmem:[%s295 + $0x300] sm:$0xff]
        %v439 = vld [vmem:[%s295 + $0x308] sm:$0xff]
        %v440 = vld [vmem:[%s295 + $0x310] sm:$0xff]
        %v441 = vld [vmem:[%s295 + $0x318] sm:$0xff]
        %v442 = vld [vmem:[%s295 + $0x320] sm:$0xff]
        %v443 = vld [vmem:[%s295 + $0x328] sm:$0xff]
        %v444 = vld [vmem:[%s295 + $0x330] sm:$0xff]
        %v445 = vld [vmem:[%s295 + $0x338] sm:$0xff]
        %v446 = vld [vmem:[%s295 + $0x340] sm:$0xff]
        %v447 = vld [vmem:[%s295 + $0x348] sm:$0xff]
        %v448 = vld [vmem:[%s295 + $0x350] sm:$0xff]
        %v449 = vld [vmem:[%s295 + $0x358] sm:$0xff]
        %v450 = vld [vmem:[%s295 + $0x360] sm:$0xff]
        %v451 = vld [vmem:[%s295 + $0x368] sm:$0xff]
        %v452 = vld [vmem:[%s295 + $0x370] sm:$0xff]
        %v453 = vld [vmem:[%s295 + $0x378] sm:$0xff]
        %v454 = vld [vmem:[%s295 + $0x380] sm:$0xff]
        %v455 = vld [vmem:[%s295 + $0x388] sm:$0xff]
        %v456 = vld [vmem:[%s295 + $0x390] sm:$0xff]
        %v457 = vld [vmem:[%s295 + $0x398] sm:$0xff]
        %v458 = vld [vmem:[%s295 + $0x3a0] sm:$0xff]
        %v459 = vld [vmem:[%s295 + $0x3a8] sm:$0xff]
        %v460 = vld [vmem:[%s295 + $0x3b0] sm:$0xff]
        %v461 = vld [vmem:[%s295 + $0x3b8] sm:$0xff]
        %v462 = vld [vmem:[%s295 + $0x3c0] sm:$0xff]
        %v463 = vld [vmem:[%s295 + $0x3c8] sm:$0xff]
        %v464 = vld [vmem:[%s295 + $0x3d0] sm:$0xff]
        %v465 = vld [vmem:[%s295 + $0x3d8] sm:$0xff]
        %v466 = vld [vmem:[%s295 + $0x3e0] sm:$0xff]
        %v467 = vld [vmem:[%s295 + $0x3e8] sm:$0xff]
        %v468 = vld [vmem:[%s295 + $0x3f0] sm:$0xff]
        %v469 = vld [vmem:[%s295 + $0x3f8] sm:$0xff]
        %v470 = vld [vmem:[%s295 + $0x400] sm:$0xff]
        %v471 = vld [vmem:[%s295 + $0x408] sm:$0xff]
        %v472 = vld [vmem:[%s295 + $0x410] sm:$0xff]
        %v473 = vld [vmem:[%s295 + $0x418] sm:$0xff]
        %v474 = vld [vmem:[%s295 + $0x420] sm:$0xff]
        %v475 = vld [vmem:[%s295 + $0x428] sm:$0xff]
        %v476 = vld [vmem:[%s295 + $0x430] sm:$0xff]
        %v477 = vld [vmem:[%s295 + $0x438] sm:$0xff]
        %v478 = vld [vmem:[%s295 + $0x440] sm:$0xff]
        %v479 = vld [vmem:[%s295 + $0x448] sm:$0xff]
        %v480 = vld [vmem:[%s295 + $0x450] sm:$0xff]
        %v481 = vld [vmem:[%s295 + $0x458] sm:$0xff]
        %v482 = vld [vmem:[%s295 + $0x460] sm:$0xff]
        %v483 = vld [vmem:[%s295 + $0x468] sm:$0xff]
        %v484 = vld [vmem:[%s295 + $0x470] sm:$0xff]
        %v485 = vld [vmem:[%s295 + $0x478] sm:$0xff]
        %v486 = vld [vmem:[%s295 + $0x480] sm:$0xff]
        %v487 = vld [vmem:[%s295 + $0x488] sm:$0xff]
        %v488 = vld [vmem:[%s295 + $0x490] sm:$0xff]
        %v489 = vld [vmem:[%s295 + $0x498] sm:$0xff]
        %v490 = vld [vmem:[%s295 + $0x4a0] sm:$0xff]
        %v491 = vld [vmem:[%s295 + $0x4a8] sm:$0xff]
        %v492 = vld [vmem:[%s295 + $0x4b0] sm:$0xff]
        %v493 = vld [vmem:[%s295 + $0x4b8] sm:$0xff]
        %v494 = vld [vmem:[%s295 + $0x4c0] sm:$0xff]
        %v495 = vld [vmem:[%s295 + $0x4c8] sm:$0xff]
        %v496 = vld [vmem:[%s295 + $0x4d0] sm:$0xff]
        %v497 = vld [vmem:[%s295 + $0x4d8] sm:$0xff]
        %v498 = vld [vmem:[%s295 + $0x4e0] sm:$0xff]
        %v499 = vld [vmem:[%s295 + $0x4e8] sm:$0xff]
        %v500 = vld [vmem:[%s295 + $0x4f0] sm:$0xff]
        %v501 = vld [vmem:[%s295 + $0x4f8] sm:$0xff]
        %v502 = vld [vmem:[%s295 + $0x500] sm:$0xff]
        %v503 = vld [vmem:[%s295 + $0x508] sm:$0xff]
        %v504 = vld [vmem:[%s295 + $0x510] sm:$0xff]
        %v505 = vld [vmem:[%s295 + $0x518] sm:$0xff]
        %v506 = vld [vmem:[%s295 + $0x520] sm:$0xff]
        %v507 = vld [vmem:[%s295 + $0x528] sm:$0xff]
        %v508 = vld [vmem:[%s295 + $0x530] sm:$0xff]
        %v509 = vld [vmem:[%s295 + $0x538] sm:$0xff]
        %v510 = vld [vmem:[%s295 + $0x540] sm:$0xff]
        %v511 = vld [vmem:[%s295 + $0x548] sm:$0xff]
        %v512 = vld [vmem:[%s295 + $0x550] sm:$0xff]
        %v513 = vld [vmem:[%s295 + $0x558] sm:$0xff]
        %v514 = vld [vmem:[%s295 + $0x560] sm:$0xff]
        %v515 = vld [vmem:[%s295 + $0x568] sm:$0xff]
        %v516 = vld [vmem:[%s295 + $0x570] sm:$0xff]
        %v517 = vld [vmem:[%s295 + $0x578] sm:$0xff]
        %v518 = vld [vmem:[%s295 + $0x580] sm:$0xff]
        %v519 = vld [vmem:[%s295 + $0x588] sm:$0xff]
        %v520 = vld [vmem:[%s295 + $0x590] sm:$0xff]
        %v521 = vld [vmem:[%s295 + $0x598] sm:$0xff]
        %v522 = vld [vmem:[%s295 + $0x5a0] sm:$0xff]
        %v523 = vld [vmem:[%s295 + $0x5a8] sm:$0xff]
        %v524 = vld [vmem:[%s295 + $0x5b0] sm:$0xff]
        %v525 = vld [vmem:[%s295 + $0x5b8] sm:$0xff]
        %v526 = vld [vmem:[%s295 + $0x5c0] sm:$0xff]
        %v527 = vld [vmem:[%s295 + $0x5c8] sm:$0xff]
        %v528 = vld [vmem:[%s295 + $0x5d0] sm:$0xff]
        %v529 = vld [vmem:[%s295 + $0x5d8] sm:$0xff]
        %v530 = vld [vmem:[%s295 + $0x5e0] sm:$0xff]
        %v531 = vld [vmem:[%s295 + $0x5e8] sm:$0xff]
        %v532 = vld [vmem:[%s295 + $0x5f0] sm:$0xff]
        %v533 = vld [vmem:[%s295 + $0x5f8] sm:$0xff]
        %v534 = vld [vmem:[%s295 + $0x600] sm:$0xff]
        %v535 = vld [vmem:[%s295 + $0x608] sm:$0xff]
        %v536 = vld [vmem:[%s295 + $0x610] sm:$0xff]
        %v537 = vld [vmem:[%s295 + $0x618] sm:$0xff]
        %v538 = vld [vmem:[%s295 + $0x620] sm:$0xff]
        %v539 = vld [vmem:[%s295 + $0x628] sm:$0xff]
        %v540 = vld [vmem:[%s295 + $0x630] sm:$0xff]
        %v541 = vld [vmem:[%s295 + $0x638] sm:$0xff]
        %v542 = vld [vmem:[%s295 + $0x640] sm:$0xff]
        %v543 = vld [vmem:[%s295 + $0x648] sm:$0xff]
        %v544 = vld [vmem:[%s295 + $0x650] sm:$0xff]
        %v545 = vld [vmem:[%s295 + $0x658] sm:$0xff]
        %v546 = vld [vmem:[%s295 + $0x660] sm:$0xff]
        %v547 = vld [vmem:[%s295 + $0x668] sm:$0xff]
        %v548 = vld [vmem:[%s295 + $0x670] sm:$0xff]
        %v549 = vld [vmem:[%s295 + $0x678] sm:$0xff]
        %v550 = vld [vmem:[%s295 + $0x680] sm:$0xff]
        %v551 = vld [vmem:[%s295 + $0x688] sm:$0xff]
        %v552 = vld [vmem:[%s295 + $0x690] sm:$0xff]
        %v553 = vld [vmem:[%s295 + $0x698] sm:$0xff]
        %v554 = vld [vmem:[%s295 + $0x6a0] sm:$0xff]
        %v555 = vld [vmem:[%s295 + $0x6a8] sm:$0xff]
        %v556 = vld [vmem:[%s295 + $0x6b0] sm:$0xff]
        %v557 = vld [vmem:[%s295 + $0x6b8] sm:$0xff]
        %v558 = vld [vmem:[%s295 + $0x6c0] sm:$0xff]
        %v559 = vld [vmem:[%s295 + $0x6c8] sm:$0xff]
        %v560 = vld [vmem:[%s295 + $0x6d0] sm:$0xff]
        %v561 = vld [vmem:[%s295 + $0x6d8] sm:$0xff]
        %v562 = vld [vmem:[%s295 + $0x6e0] sm:$0xff]
        %v563 = vld [vmem:[%s295 + $0x6e8] sm:$0xff]
        %v564 = vld [vmem:[%s295 + $0x6f0] sm:$0xff]
        %v565 = vld [vmem:[%s295 + $0x6f8] sm:$0xff]
        %v566 = vld [vmem:[%s295 + $0x700] sm:$0xff]
        %v567 = vld [vmem:[%s295 + $0x708] sm:$0xff]
        %v568 = vld [vmem:[%s295 + $0x710] sm:$0xff]
        %v569 = vld [vmem:[%s295 + $0x718] sm:$0xff]
        %v570 = vld [vmem:[%s295 + $0x720] sm:$0xff]
        %v571 = vld [vmem:[%s295 + $0x728] sm:$0xff]
        %v572 = vld [vmem:[%s295 + $0x730] sm:$0xff]
        %v573 = vld [vmem:[%s295 + $0x738] sm:$0xff]
        %v574 = vld [vmem:[%s295 + $0x740] sm:$0xff]
        %v575 = vld [vmem:[%s295 + $0x748] sm:$0xff]
        %v576 = vld [vmem:[%s295 + $0x750] sm:$0xff]
        %v577 = vld [vmem:[%s295 + $0x758] sm:$0xff]
        %v578 = vld [vmem:[%s295 + $0x760] sm:$0xff]
        %v579 = vld [vmem:[%s295 + $0x768] sm:$0xff]
        %v580 = vld [vmem:[%s295 + $0x770] sm:$0xff]
        %v581 = vld [vmem:[%s295 + $0x778] sm:$0xff]
        %v582 = vld [vmem:[%s295 + $0x780] sm:$0xff]
        %v583 = vld [vmem:[%s295 + $0x788] sm:$0xff]
        %v584 = vld [vmem:[%s295 + $0x790] sm:$0xff]
        %v585 = vld [vmem:[%s295 + $0x798] sm:$0xff]
        %v586 = vld [vmem:[%s295 + $0x7a0] sm:$0xff]
        %v587 = vld [vmem:[%s295 + $0x7a8] sm:$0xff]
        %v588 = vld [vmem:[%s295 + $0x7b0] sm:$0xff]
        %v589 = vld [vmem:[%s295 + $0x7b8] sm:$0xff]
        %v590 = vld [vmem:[%s295 + $0x7c0] sm:$0xff]
        %v591 = vld [vmem:[%s295 + $0x7c8] sm:$0xff]
        %v592 = vld [vmem:[%s295 + $0x7d0] sm:$0xff]
        %v593 = vld [vmem:[%s295 + $0x7d8] sm:$0xff]
        %v594 = vld [vmem:[%s295 + $0x7e0] sm:$0xff]
        %v595 = vld [vmem:[%s295 + $0x7e8] sm:$0xff]
        %v596 = vld [vmem:[%s295 + $0x7f0] sm:$0xff]
        %v597 = vld [vmem:[%s295 + $0x7f8] sm:$0xff]
        %v598 = vld [vmem:[%s295 + $0x800] sm:$0xff]
        %v599 = vld [vmem:[%s295 + $0x808] sm:$0xff]
        %v600 = vld [vmem:[%s295 + $0x810] sm:$0xff]
        %v601 = vld [vmem:[%s295 + $0x818] sm:$0xff]
        %v602 = vld [vmem:[%s295 + $0x820] sm:$0xff]
        %v603 = vld [vmem:[%s295 + $0x828] sm:$0xff]
        %v604 = vld [vmem:[%s295 + $0x830] sm:$0xff]
        %v605 = vld [vmem:[%s295 + $0x838] sm:$0xff]
        %v606 = vld [vmem:[%s295 + $0x840] sm:$0xff]
        %v607 = vld [vmem:[%s295 + $0x848] sm:$0xff]
        %v608 = vld [vmem:[%s295 + $0x850] sm:$0xff]
        %v609 = vld [vmem:[%s295 + $0x858] sm:$0xff]
        %v610 = vld [vmem:[%s295 + $0x860] sm:$0xff]
        %v611 = vld [vmem:[%s295 + $0x868] sm:$0xff]
        %v612 = vld [vmem:[%s295 + $0x870] sm:$0xff]
        %v613 = vld [vmem:[%s295 + $0x878] sm:$0xff]
        %v614 = vld [vmem:[%s295 + $0x880] sm:$0xff]
        %v615 = vld [vmem:[%s295 + $0x888] sm:$0xff]
        %v616 = vld [vmem:[%s295 + $0x890] sm:$0xff]
        %v617 = vld [vmem:[%s295 + $0x898] sm:$0xff]
        %v618 = vld [vmem:[%s295 + $0x8a0] sm:$0xff]
        %v619 = vld [vmem:[%s295 + $0x8a8] sm:$0xff]
        %v620 = vld [vmem:[%s295 + $0x8b0] sm:$0xff]
        %v621 = vld [vmem:[%s295 + $0x8b8] sm:$0xff]
        %v622 = vld [vmem:[%s295 + $0x8c0] sm:$0xff]
        %v623 = vld [vmem:[%s295 + $0x8c8] sm:$0xff]
        %v624 = vld [vmem:[%s295 + $0x8d0] sm:$0xff]
        %v625 = vld [vmem:[%s295 + $0x8d8] sm:$0xff]
        %v626 = vld [vmem:[%s295 + $0x8e0] sm:$0xff]
        %v627 = vld [vmem:[%s295 + $0x8e8] sm:$0xff]
        %v628 = vld [vmem:[%s295 + $0x8f0] sm:$0xff]
        %v629 = vld [vmem:[%s295 + $0x8f8] sm:$0xff]
        %v630 = vld [vmem:[%s295 + $0x900] sm:$0xff]
        %v631 = vld [vmem:[%s295 + $0x908] sm:$0xff]
        %v632 = vld [vmem:[%s295 + $0x910] sm:$0xff]
        %v633 = vld [vmem:[%s295 + $0x918] sm:$0xff]
        %v634 = vld [vmem:[%s295 + $0x920] sm:$0xff]
        %v635 = vld [vmem:[%s295 + $0x928] sm:$0xff]
        %v636 = vld [vmem:[%s295 + $0x930] sm:$0xff]
        %v637 = vld [vmem:[%s295 + $0x938] sm:$0xff]
        %v638 = vld [vmem:[%s295 + $0x940] sm:$0xff]
        %v639 = vld [vmem:[%s295 + $0x948] sm:$0xff]
        %v640 = vld [vmem:[%s295 + $0x950] sm:$0xff]
        %v641 = vld [vmem:[%s295 + $0x958] sm:$0xff]
        %v642 = vld [vmem:[%s295 + $0x960] sm:$0xff]
        %v643 = vld [vmem:[%s295 + $0x968] sm:$0xff]
        %v644 = vld [vmem:[%s295 + $0x970] sm:$0xff]
        %v645 = vld [vmem:[%s295 + $0x978] sm:$0xff]
        %v646 = vld [vmem:[%s295 + $0x980] sm:$0xff]
        %v647 = vld [vmem:[%s295 + $0x988] sm:$0xff]
        %v648 = vld [vmem:[%s295 + $0x990] sm:$0xff]
        %v649 = vld [vmem:[%s295 + $0x998] sm:$0xff]
        %v650 = vld [vmem:[%s295 + $0x9a0] sm:$0xff]
        %v651 = vld [vmem:[%s295 + $0x9a8] sm:$0xff]
        %v652 = vld [vmem:[%s295 + $0x9b0] sm:$0xff]
        %v653 = vld [vmem:[%s295 + $0x9b8] sm:$0xff]
        %v654 = vld [vmem:[%s295 + $0x9c0] sm:$0xff]
        %v655 = vld [vmem:[%s295 + $0x9c8] sm:$0xff]
        %v656 = vld [vmem:[%s295 + $0x9d0] sm:$0xff]
        %v657 = vld [vmem:[%s295 + $0x9d8] sm:$0xff]
        %v658 = vld [vmem:[%s295 + $0x9e0] sm:$0xff]
        %v659 = vld [vmem:[%s295 + $0x9e8] sm:$0xff]
        %v660 = vld [vmem:[%s295 + $0x9f0] sm:$0xff]
        %v661 = vld [vmem:[%s295 + $0x9f8] sm:$0xff]
        %v662 = vld [vmem:[%s295 + $0xa00] sm:$0xff]
        %v663 = vld [vmem:[%s295 + $0xa08] sm:$0xff]
        %v664 = vld [vmem:[%s295 + $0xa10] sm:$0xff]
        %v665 = vld [vmem:[%s295 + $0xa18] sm:$0xff]
        %v666 = vld [vmem:[%s295 + $0xa20] sm:$0xff]
        %v667 = vld [vmem:[%s295 + $0xa28] sm:$0xff]
        %v668 = vld [vmem:[%s295 + $0xa30] sm:$0xff]
        %v669 = vld [vmem:[%s295 + $0xa38] sm:$0xff]
        %v670 = vld [vmem:[%s295 + $0xa40] sm:$0xff]
        %v671 = vld [vmem:[%s295 + $0xa48] sm:$0xff]
        %v672 = vld [vmem:[%s295 + $0xa50] sm:$0xff]
        %v673 = vld [vmem:[%s295 + $0xa58] sm:$0xff]
        %v674 = vld [vmem:[%s295 + $0xa60] sm:$0xff]
        %v675 = vld [vmem:[%s295 + $0xa68] sm:$0xff]
        %v676 = vld [vmem:[%s295 + $0xa70] sm:$0xff]
        %v677 = vld [vmem:[%s295 + $0xa78] sm:$0xff]
        %v678 = vld [vmem:[%s295 + $0xa80] sm:$0xff]
        %v679 = vld [vmem:[%s295 + $0xa88] sm:$0xff]
        %v680 = vld [vmem:[%s295 + $0xa90] sm:$0xff]
        %v681 = vld [vmem:[%s295 + $0xa98] sm:$0xff]
        %v682 = vld [vmem:[%s295 + $0xaa0] sm:$0xff]
        %v683 = vld [vmem:[%s295 + $0xaa8] sm:$0xff]
        %v684 = vld [vmem:[%s295 + $0xab0] sm:$0xff]
        %v685 = vld [vmem:[%s295 + $0xab8] sm:$0xff]
        %v686 = vld [vmem:[%s295 + $0xac0] sm:$0xff]
        %v687 = vld [vmem:[%s295 + $0xac8] sm:$0xff]
        %v688 = vld [vmem:[%s295 + $0xad0] sm:$0xff]
        %v689 = vld [vmem:[%s295 + $0xad8] sm:$0xff]
        %v690 = vld [vmem:[%s295 + $0xae0] sm:$0xff]
        %v691 = vld [vmem:[%s295 + $0xae8] sm:$0xff]
        %v692 = vld [vmem:[%s295 + $0xaf0] sm:$0xff]
        %v693 = vld [vmem:[%s295 + $0xaf8] sm:$0xff]
        %v694 = vld [vmem:[%s295 + $0xb00] sm:$0xff]
        %v695 = vld [vmem:[%s295 + $0xb08] sm:$0xff]
        %v696 = vld [vmem:[%s295 + $0xb10] sm:$0xff]
        %v697 = vld [vmem:[%s295 + $0xb18] sm:$0xff]
        %v698 = vld [vmem:[%s295 + $0xb20] sm:$0xff]
        %v699 = vld [vmem:[%s295 + $0xb28] sm:$0xff]
        %v700 = vld [vmem:[%s295 + $0xb30] sm:$0xff]
        %v701 = vld [vmem:[%s295 + $0xb38] sm:$0xff]
        %v702 = vld [vmem:[%s295 + $0xb40] sm:$0xff]
        %v703 = vld [vmem:[%s295 + $0xb48] sm:$0xff]
        %v704 = vld [vmem:[%s295 + $0xb50] sm:$0xff]
        %v705 = vld [vmem:[%s295 + $0xb58] sm:$0xff]
        %v706 = vld [vmem:[%s295 + $0xb60] sm:$0xff]
        %v707 = vld [vmem:[%s295 + $0xb68] sm:$0xff]
        %v708 = vld [vmem:[%s295 + $0xb70] sm:$0xff]
        %v709 = vld [vmem:[%s295 + $0xb78] sm:$0xff]
        %v710 = vld [vmem:[%s295 + $0xb80] sm:$0xff]
        %v711 = vld [vmem:[%s295 + $0xb88] sm:$0xff]
        %v712 = vld [vmem:[%s295 + $0xb90] sm:$0xff]
        %v713 = vld [vmem:[%s295 + $0xb98] sm:$0xff]
        %v714 = vld [vmem:[%s295 + $0xba0] sm:$0xff]
        %v715 = vld [vmem:[%s295 + $0xba8] sm:$0xff]
        %v716 = vld [vmem:[%s295 + $0xbb0] sm:$0xff]
        %v717 = vld [vmem:[%s295 + $0xbb8] sm:$0xff]
        %v718 = vld [vmem:[%s295 + $0xbc0] sm:$0xff]
        %v719 = vld [vmem:[%s295 + $0xbc8] sm:$0xff]
        %v720 = vld [vmem:[%s295 + $0xbd0] sm:$0xff]
        %v721 = vld [vmem:[%s295 + $0xbd8] sm:$0xff]
        %v722 = vld [vmem:[%s295 + $0xbe0] sm:$0xff]
        %v723 = vld [vmem:[%s295 + $0xbe8] sm:$0xff]
        %v724 = vld [vmem:[%s295 + $0xbf0] sm:$0xff]
        %v725 = vld [vmem:[%s295 + $0xbf8] sm:$0xff]
        %v726 = vld [vmem:[%s295 + $0xc00] sm:$0xff]
        %v727 = vld [vmem:[%s295 + $0xc08] sm:$0xff]
        %v728 = vld [vmem:[%s295 + $0xc10] sm:$0xff]
        %v729 = vld [vmem:[%s295 + $0xc18] sm:$0xff]
        %v730 = vld [vmem:[%s295 + $0xc20] sm:$0xff]
        %v731 = vld [vmem:[%s295 + $0xc28] sm:$0xff]
        %v732 = vld [vmem:[%s295 + $0xc30] sm:$0xff]
        %v733 = vld [vmem:[%s295 + $0xc38] sm:$0xff]
        %v734 = vld [vmem:[%s295 + $0xc40] sm:$0xff]
        %v735 = vld [vmem:[%s295 + $0xc48] sm:$0xff]
        %v736 = vld [vmem:[%s295 + $0xc50] sm:$0xff]
        %v737 = vld [vmem:[%s295 + $0xc58] sm:$0xff]
        %v738 = vld [vmem:[%s295 + $0xc60] sm:$0xff]
        %v739 = vld [vmem:[%s295 + $0xc68] sm:$0xff]
        %v740 = vld [vmem:[%s295 + $0xc70] sm:$0xff]
        %v741 = vld [vmem:[%s295 + $0xc78] sm:$0xff]
        %v742 = vld [vmem:[%s295 + $0xc80] sm:$0xff]
        %v743 = vld [vmem:[%s295 + $0xc88] sm:$0xff]
        %v744 = vld [vmem:[%s295 + $0xc90] sm:$0xff]
        %v745 = vld [vmem:[%s295 + $0xc98] sm:$0xff]
        %v746 = vld [vmem:[%s295 + $0xca0] sm:$0xff]
        %v747 = vld [vmem:[%s295 + $0xca8] sm:$0xff]
        %v748 = vld [vmem:[%s295 + $0xcb0] sm:$0xff]
        %v749 = vld [vmem:[%s295 + $0xcb8] sm:$0xff]
        %v750 = vld [vmem:[%s295 + $0xcc0] sm:$0xff]
        %v751 = vld [vmem:[%s295 + $0xcc8] sm:$0xff]
        %v752 = vld [vmem:[%s295 + $0xcd0] sm:$0xff]
        %v753 = vld [vmem:[%s295 + $0xcd8] sm:$0xff]
        %v754 = vld [vmem:[%s295 + $0xce0] sm:$0xff]
        %v755 = vld [vmem:[%s295 + $0xce8] sm:$0xff]
        %v756 = vld [vmem:[%s295 + $0xcf0] sm:$0xff]
        %v757 = vld [vmem:[%s295 + $0xcf8] sm:$0xff]
        %v758 = vld [vmem:[%s295 + $0xd00] sm:$0xff]
        %v759 = vld [vmem:[%s295 + $0xd08] sm:$0xff]
        %v760 = vld [vmem:[%s295 + $0xd10] sm:$0xff]
        %v761 = vld [vmem:[%s295 + $0xd18] sm:$0xff]
        %v762 = vld [vmem:[%s295 + $0xd20] sm:$0xff]
        %v763 = vld [vmem:[%s295 + $0xd28] sm:$0xff]
        %v764 = vld [vmem:[%s295 + $0xd30] sm:$0xff]
        %v765 = vld [vmem:[%s295 + $0xd38] sm:$0xff]
        %v766 = vld [vmem:[%s295 + $0xd40] sm:$0xff]
        %v767 = vld [vmem:[%s295 + $0xd48] sm:$0xff]
        %v768 = vld [vmem:[%s295 + $0xd50] sm:$0xff]
        %v769 = vld [vmem:[%s295 + $0xd58] sm:$0xff]
        %v770 = vld [vmem:[%s295 + $0xd60] sm:$0xff]
        %v771 = vld [vmem:[%s295 + $0xd68] sm:$0xff]
        %v772 = vld [vmem:[%s295 + $0xd70] sm:$0xff]
        %v773 = vld [vmem:[%s295 + $0xd78] sm:$0xff]
        %v774 = vld [vmem:[%s295 + $0xd80] sm:$0xff]
        %v775 = vld [vmem:[%s295 + $0xd88] sm:$0xff]
        %v776 = vld [vmem:[%s295 + $0xd90] sm:$0xff]
        %v777 = vld [vmem:[%s295 + $0xd98] sm:$0xff]
        %v778 = vld [vmem:[%s295 + $0xda0] sm:$0xff]
        %v779 = vld [vmem:[%s295 + $0xda8] sm:$0xff]
        %v780 = vld [vmem:[%s295 + $0xdb0] sm:$0xff]
        %v781 = vld [vmem:[%s295 + $0xdb8] sm:$0xff]
        %v782 = vld [vmem:[%s295 + $0xdc0] sm:$0xff]
        %v783 = vld [vmem:[%s295 + $0xdc8] sm:$0xff]
        %v784 = vld [vmem:[%s295 + $0xdd0] sm:$0xff]
        %v785 = vld [vmem:[%s295 + $0xdd8] sm:$0xff]
        %v786 = vld [vmem:[%s295 + $0xde0] sm:$0xff]
        %v787 = vld [vmem:[%s295 + $0xde8] sm:$0xff]
        %v788 = vld [vmem:[%s295 + $0xdf0] sm:$0xff]
        %v789 = vld [vmem:[%s295 + $0xdf8] sm:$0xff]
        %v790 = vld [vmem:[%s295 + $0xe00] sm:$0xff]
        %v791 = vld [vmem:[%s295 + $0xe08] sm:$0xff]
        %v792 = vld [vmem:[%s295 + $0xe10] sm:$0xff]
        %v793 = vld [vmem:[%s295 + $0xe18] sm:$0xff]
        %v794 = vld [vmem:[%s295 + $0xe20] sm:$0xff]
        %v795 = vld [vmem:[%s295 + $0xe28] sm:$0xff]
        %v796 = vld [vmem:[%s295 + $0xe30] sm:$0xff]
        %v797 = vld [vmem:[%s295 + $0xe38] sm:$0xff]
        %v798 = vld [vmem:[%s295 + $0xe40] sm:$0xff]
        %v799 = vld [vmem:[%s295 + $0xe48] sm:$0xff]
        %v800 = vld [vmem:[%s295 + $0xe50] sm:$0xff]
        %v801 = vld [vmem:[%s295 + $0xe58] sm:$0xff]
        %v802 = vld [vmem:[%s295 + $0xe60] sm:$0xff]
        %v803 = vld [vmem:[%s295 + $0xe68] sm:$0xff]
        %v804 = vld [vmem:[%s295 + $0xe70] sm:$0xff]
        %v805 = vld [vmem:[%s295 + $0xe78] sm:$0xff]
        %v806 = vld [vmem:[%s295 + $0xe80] sm:$0xff]
        %v807 = vld [vmem:[%s295 + $0xe88] sm:$0xff]
        %v808 = vld [vmem:[%s295 + $0xe90] sm:$0xff]
        %v809 = vld [vmem:[%s295 + $0xe98] sm:$0xff]
        %v810 = vld [vmem:[%s295 + $0xea0] sm:$0xff]
        %v811 = vld [vmem:[%s295 + $0xea8] sm:$0xff]
        %v812 = vld [vmem:[%s295 + $0xeb0] sm:$0xff]
        %v813 = vld [vmem:[%s295 + $0xeb8] sm:$0xff]
        %v814 = vld [vmem:[%s295 + $0xec0] sm:$0xff]
        %v815 = vld [vmem:[%s295 + $0xec8] sm:$0xff]
        %v816 = vld [vmem:[%s295 + $0xed0] sm:$0xff]
        %v817 = vld [vmem:[%s295 + $0xed8] sm:$0xff]
        %v818 = vld [vmem:[%s295 + $0xee0] sm:$0xff]
        %v819 = vld [vmem:[%s295 + $0xee8] sm:$0xff]
        %v820 = vld [vmem:[%s295 + $0xef0] sm:$0xff]
        %v821 = vld [vmem:[%s295 + $0xef8] sm:$0xff]
        %v822 = vld [vmem:[%s295 + $0xf00] sm:$0xff]
        %v823 = vld [vmem:[%s295 + $0xf08] sm:$0xff]
        %v824 = vld [vmem:[%s295 + $0xf10] sm:$0xff]
        %v825 = vld [vmem:[%s295 + $0xf18] sm:$0xff]
        %v826 = vld [vmem:[%s295 + $0xf20] sm:$0xff]
        %v827 = vld [vmem:[%s295 + $0xf28] sm:$0xff]
        %v828 = vld [vmem:[%s295 + $0xf30] sm:$0xff]
        %v829 = vld [vmem:[%s295 + $0xf38] sm:$0xff]
        %v830 = vld [vmem:[%s295 + $0xf40] sm:$0xff]
        %v831 = vld [vmem:[%s295 + $0xf48] sm:$0xff]
        %v832 = vld [vmem:[%s295 + $0xf50] sm:$0xff]
        %v833 = vld [vmem:[%s295 + $0xf58] sm:$0xff]
        %v834 = vld [vmem:[%s295 + $0xf60] sm:$0xff]
        %v835 = vld [vmem:[%s295 + $0xf68] sm:$0xff]
        %v836 = vld [vmem:[%s295 + $0xf70] sm:$0xff]
        %v837 = vld [vmem:[%s295 + $0xf78] sm:$0xff]
        %v838 = vld [vmem:[%s295 + $0xf80] sm:$0xff]
        %v839 = vld [vmem:[%s295 + $0xf88] sm:$0xff]
        %v840 = vld [vmem:[%s295 + $0xf90] sm:$0xff]
        %v841 = vld [vmem:[%s295 + $0xf98] sm:$0xff]
        %v842 = vld [vmem:[%s295 + $0xfa0] sm:$0xff]
        %v843 = vld [vmem:[%s295 + $0xfa8] sm:$0xff]
        %v844 = vld [vmem:[%s295 + $0xfb0] sm:$0xff]
        %v845 = vld [vmem:[%s295 + $0xfb8] sm:$0xff]
        %v846 = vld [vmem:[%s295 + $0xfc0] sm:$0xff]
        %v847 = vld [vmem:[%s295 + $0xfc8] sm:$0xff]
        %v848 = vld [vmem:[%s295 + $0xfd0] sm:$0xff]
        %v849 = vld [vmem:[%s295 + $0xfd8] sm:$0xff]
        %v850 = vld [vmem:[%s295 + $0xfe0] sm:$0xff]
        %v851 = vld [vmem:[%s295 + $0xfe8] sm:$0xff]
        %v852 = vld [vmem:[%s295 + $0xff0] sm:$0xff]
        %v853 = vld [vmem:[%s295 + $0xff8] sm:$0xff]
        %v854 = vld [vmem:[#allocation2] sm:$0xff]
        %v855 = vld [vmem:[#allocation2 + $0x8] sm:$0xff]
        %v856 = vld [vmem:[#allocation2 + $0x10] sm:$0xff]
        %v857 = vld [vmem:[#allocation2 + $0x18] sm:$0xff]
        %v858 = vld [vmem:[#allocation2 + $0x20] sm:$0x3]
        %v859 = vld [vmem:[#allocation2 + $0x28] sm:$0x3]
        %v860 = vld [vmem:[#allocation4] sm:$0xff]
        %v861 = vld [vmem:[#allocation4 + $0x8] sm:$0xff]
        %v862 = vld [vmem:[#allocation4 + $0x10] sm:$0xff]
        %v863 = vld [vmem:[#allocation4 + $0x18] sm:$0xff]
        %v864 = vld [vmem:[#allocation4 + $0x20] sm:$0xff]
        %v865 = vld [vmem:[#allocation4 + $0x28] sm:$0xff]
        %v866 = vld [vmem:[#allocation4 + $0x30] sm:$0xff]
        %v867 = vld [vmem:[#allocation4 + $0x38] sm:$0xff]
        %v868 = vld [vmem:[#allocation4 + $0x40] sm:$0xf]
        %v869 = vld [vmem:[#allocation4 + $0x48] sm:$0xf]
        %v870 = vld [vmem:[%s1] sm:$0xff]
        %v871 = vld [vmem:[%s1 + $0x8] sm:$0xff]
        %v872 = vld [vmem:[%s1 + $0x10] sm:$0x3]
        %874 = vset.pattern.permute.xlu0 0
        %875 = vperm.xlu0 %874, %v870
        %v876 = vpop.permute.xlu0 %875
        %879 = vset.pattern.permute.xlu0 0
        %880 = vperm.xlu0 %879, %v871
        %v881 = vpop.permute.xlu0 %880
        %884 = vset.pattern.permute.xlu0 0
        %885 = vperm.xlu0 %884, %v872
        %v886 = vpop.permute.xlu0 %885
        %888 = vmatprep.subr.mxu0 %v343
        %889 = vmatpush1.msra.mxu0 %v342
        %890 = vmatprep.subr.mxu0 %v359
        %891 = vmatpush1.msra.mxu0 %v358
        %892 = vmatprep.subr.mxu0 %v375
        %893 = vmatpush1.msra.mxu0 %v374
        %894 = vmatprep.subr.mxu0 %v391
        %895 = vmatpush1.msra.mxu0 %v390
        %896 = vmatprep.subr.mxu0 %v407
        %897 = vmatpush1.msra.mxu0 %v406
        %898 = vmatprep.subr.mxu0 %v423
        %899 = vmatpush1.msra.mxu0 %v422
        %900 = vmatprep.subr.mxu0 %v439
        %901 = vmatpush1.msra.mxu0 %v438
        %902 = vmatprep.subr.mxu0 %v455
        %903 = vmatpush1.msra.mxu0 %v454
        %904 = vmatprep.subr.mxu0 %v471
        %905 = vmatpush1.msra.mxu0 %v470
        %906 = vmatprep.subr.mxu0 %v487
        %907 = vmatpush1.msra.mxu0 %v486
        %908 = vmatprep.subr.mxu0 %v503
        %909 = vmatpush1.msra.mxu0 %v502
        %910 = vmatprep.subr.mxu0 %v519
        %911 = vmatpush1.msra.mxu0 %v518
        %912 = vmatprep.subr.mxu0 %v535
        %913 = vmatpush1.msra.mxu0 %v534
        %914 = vmatprep.subr.mxu0 %v551
        %915 = vmatpush1.msra.mxu0 %v550
        %916 = vmatprep.subr.mxu0 %v567
        %917 = vmatpush1.msra.mxu0 %v566
        %918 = vmatprep.subr.mxu0 %v583
        %919 = vmatpush1.msra.mxu0 %v582
        %920 = vmatprep.subr.mxu0 %v599
        %921 = vmatpush1.msra.mxu0 %v598
        %922 = vmatprep.subr.mxu0 %v615
        %923 = vmatpush1.msra.mxu0 %v614
        %924 = vmatprep.subr.mxu0 %v631
        %925 = vmatpush1.msra.mxu0 %v630
        %926 = vmatprep.subr.mxu0 %v647
        %927 = vmatpush1.msra.mxu0 %v646
        %928 = vmatprep.subr.mxu0 %v663
        %929 = vmatpush1.msra.mxu0 %v662
        %930 = vmatprep.subr.mxu0 %v679
        %931 = vmatpush1.msra.mxu0 %v678
        %932 = vmatprep.subr.mxu0 %v695
        %933 = vmatpush1.msra.mxu0 %v694
        %934 = vmatprep.subr.mxu0 %v711
        %935 = vmatpush1.msra.mxu0 %v710
        %936 = vmatprep.subr.mxu0 %v727
        %937 = vmatpush1.msra.mxu0 %v726
        %938 = vmatprep.subr.mxu0 %v743
        %939 = vmatpush1.msra.mxu0 %v742
        %940 = vmatprep.subr.mxu0 %v759
        %941 = vmatpush1.msra.mxu0 %v758
        %942 = vmatprep.subr.mxu0 %v775
        %943 = vmatpush1.msra.mxu0 %v774
        %944 = vmatprep.subr.mxu0 %v791
        %945 = vmatpush1.msra.mxu0 %v790
        %946 = vmatprep.subr.mxu0 %v807
        %947 = vmatpush1.msra.mxu0 %v806
        %948 = vmatprep.subr.mxu0 %v823
        %949 = vmatpush1.msra.mxu0 %v822
        %950 = vmatprep.subr.mxu0 %v839
        %951 = vmatpush1.msra.mxu0 %v838
        %952 = vmatprep.mubr.f32.mxu0 %v855
        %953 = vmatmul.mubr.f32.gmra.mrb[0].mxu0 %v854
        %v954 = vpop.f32.mrb[0].mxu0
        %v955 = vadd.f32 %v876, %v954
        %v956 = vpop.f32.mrb[0].mxu0
        %v957 = vadd.f32 %v876, %v956
        %958 = vmatprep.mubr.f32.mxu0 %v857
        %959 = vmatmul.mubr.f32.gmra.mrb[0].mxu0 %v856
        %v960 = vpop.f32.mrb[0].mxu0
        %v961 = vadd.f32 %v881, %v960
        %v962 = vpop.f32.mrb[0].mxu0
        %v963 = vadd.f32 %v881, %v962
        %964 = vmatprep.mubr.f32.mxu0 %v859
        %965 = vmatmul.mubr.f32.gmra.mrb[0].mxu0 %v858
        %v966 = vpop.f32.mrb[0].mxu0
        %v967 = vadd.f32 %v886, %v966
        %v968 = vpop.f32.mrb[0].mxu0
        %v969 = vadd.f32 %v886, %v968
        %970 = vdwg.mxu0
        %971 = vmatprep.subr.mxu0 %v345
        %972 = vmatpush1.msra.mxu0 %v344
        %973 = vmatprep.subr.mxu0 %v361
        %974 = vmatpush1.msra.mxu0 %v360
        %975 = vmatprep.subr.mxu0 %v377
        %976 = vmatpush1.msra.mxu0 %v376
        %977 = vmatprep.subr.mxu0 %v393
        %978 = vmatpush1.msra.mxu0 %v392
        %979 = vmatprep.subr.mxu0 %v409
        %980 = vmatpush1.msra.mxu0 %v408
        %981 = vmatprep.subr.mxu0 %v425
        %982 = vmatpush1.msra.mxu0 %v424
        %983 = vmatprep.subr.mxu0 %v441
        %984 = vmatpush1.msra.mxu0 %v440
        %985 = vmatprep.subr.mxu0 %v457
        %986 = vmatpush1.msra.mxu0 %v456
        %987 = vmatprep.subr.mxu0 %v473
        %988 = vmatpush1.msra.mxu0 %v472
        %989 = vmatprep.subr.mxu0 %v489
        %990 = vmatpush1.msra.mxu0 %v488
        %991 = vmatprep.subr.mxu0 %v505
        %992 = vmatpush1.msra.mxu0 %v504
        %993 = vmatprep.subr.mxu0 %v521
        %994 = vmatpush1.msra.mxu0 %v520
        %995 = vmatprep.subr.mxu0 %v537
        %996 = vmatpush1.msra.mxu0 %v536
        %997 = vmatprep.subr.mxu0 %v553
        %998 = vmatpush1.msra.mxu0 %v552
        %999 = vmatprep.subr.mxu0 %v569
        %1000 = vmatpush1.msra.mxu0 %v568
        %1001 = vmatprep.subr.mxu0 %v585
        %1002 = vmatpush1.msra.mxu0 %v584
        %1003 = vmatprep.subr.mxu0 %v601
        %1004 = vmatpush1.msra.mxu0 %v600
        %1005 = vmatprep.subr.mxu0 %v617
        %1006 = vmatpush1.msra.mxu0 %v616
        %1007 = vmatprep.subr.mxu0 %v633
        %1008 = vmatpush1.msra.mxu0 %v632
        %1009 = vmatprep.subr.mxu0 %v649
        %1010 = vmatpush1.msra.mxu0 %v648
        %1011 = vmatprep.subr.mxu0 %v665
        %1012 = vmatpush1.msra.mxu0 %v664
        %1013 = vmatprep.subr.mxu0 %v681
        %1014 = vmatpush1.msra.mxu0 %v680
        %1015 = vmatprep.subr.mxu0 %v697
        %1016 = vmatpush1.msra.mxu0 %v696
        %1017 = vmatprep.subr.mxu0 %v713
        %1018 = vmatpush1.msra.mxu0 %v712
        %1019 = vmatprep.subr.mxu0 %v729
        %1020 = vmatpush1.msra.mxu0 %v728
        %1021 = vmatprep.subr.mxu0 %v745
        %1022 = vmatpush1.msra.mxu0 %v744
        %1023 = vmatprep.subr.mxu0 %v761
        %1024 = vmatpush1.msra.mxu0 %v760
        %1025 = vmatprep.subr.mxu0 %v777
        %1026 = vmatpush1.msra.mxu0 %v776
        %1027 = vmatprep.subr.mxu0 %v793
        %1028 = vmatpush1.msra.mxu0 %v792
        %1029 = vmatprep.subr.mxu0 %v809
        %1030 = vmatpush1.msra.mxu0 %v808
        %1031 = vmatprep.subr.mxu0 %v825
        %1032 = vmatpush1.msra.mxu0 %v824
        %1033 = vmatprep.subr.mxu0 %v841
        %1034 = vmatpush1.msra.mxu0 %v840
        %1035 = vmatprep.mubr.f32.mxu0 %v855
        %1036 = vmatmul.mubr.f32.gmra.mrb[0].mxu0 %v854
        %v1037 = vpop.f32.mrb[0].mxu0
        %v1038 = vadd.f32 %v876, %v1037
        %v1039 = vpop.f32.mrb[0].mxu0
        %v1040 = vadd.f32 %v876, %v1039
        %1041 = vmatprep.mubr.f32.mxu0 %v857
        %1042 = vmatmul.mubr.f32.gmra.mrb[0].mxu0 %v856
        %v1043 = vpop.f32.mrb[0].mxu0
        %v1044 = vadd.f32 %v881, %v1043
        %v1045 = vpop.f32.mrb[0].mxu0
        %v1046 = vadd.f32 %v881, %v1045
        %1047 = vmatprep.mubr.f32.mxu0 %v859
        %1048 = vmatmul.mubr.f32.gmra.mrb[0].mxu0 %v858
        %v1049 = vpop.f32.mrb[0].mxu0
        %v1050 = vadd.f32 %v886, %v1049
        %v1051 = vpop.f32.mrb[0].mxu0
        %v1052 = vadd.f32 %v886, %v1051
        %1053 = vdwg.mxu0
        %1054 = vmatprep.subr.mxu0 %v347
        %1055 = vmatpush1.msra.mxu0 %v346
        %1056 = vmatprep.subr.mxu0 %v363
        %1057 = vmatpush1.msra.mxu0 %v362
        %1058 = vmatprep.subr.mxu0 %v379
        %1059 = vmatpush1.msra.mxu0 %v378
        %1060 = vmatprep.subr.mxu0 %v395
        %1061 = vmatpush1.msra.mxu0 %v394
        %1062 = vmatprep.subr.mxu0 %v411
        %1063 = vmatpush1.msra.mxu0 %v410
        %1064 = vmatprep.subr.mxu0 %v427
        %1065 = vmatpush1.msra.mxu0 %v426
        %1066 = vmatprep.subr.mxu0 %v443
        %1067 = vmatpush1.msra.mxu0 %v442
        %1068 = vmatprep.subr.mxu0 %v459
        %1069 = vmatpush1.msra.mxu0 %v458
        %1070 = vmatprep.subr.mxu0 %v475
        %1071 = vmatpush1.msra.mxu0 %v474
        %1072 = vmatprep.subr.mxu0 %v491
        %1073 = vmatpush1.msra.mxu0 %v490
        %1074 = vmatprep.subr.mxu0 %v507
        %1075 = vmatpush1.msra.mxu0 %v506
        %1076 = vmatprep.subr.mxu0 %v523
        %1077 = vmatpush1.msra.mxu0 %v522
        %1078 = vmatprep.subr.mxu0 %v539
        %1079 = vmatpush1.msra.mxu0 %v538
        %1080 = vmatprep.subr.mxu0 %v555
        %1081 = vmatpush1.msra.mxu0 %v554
        %1082 = vmatprep.subr.mxu0 %v571
        %1083 = vmatpush1.msra.mxu0 %v570
        %1084 = vmatprep.subr.mxu0 %v587
        %1085 = vmatpush1.msra.mxu0 %v586
        %1086 = vmatprep.subr.mxu0 %v603
        %1087 = vmatpush1.msra.mxu0 %v602
        %1088 = vmatprep.subr.mxu0 %v619
        %1089 = vmatpush1.msra.mxu0 %v618
        %1090 = vmatprep.subr.mxu0 %v635
        %1091 = vmatpush1.msra.mxu0 %v634
        %1092 = vmatprep.subr.mxu0 %v651
        %1093 = vmatpush1.msra.mxu0 %v650
        %1094 = vmatprep.subr.mxu0 %v667
        %1095 = vmatpush1.msra.mxu0 %v666
        %1096 = vmatprep.subr.mxu0 %v683
        %1097 = vmatpush1.msra.mxu0 %v682
        %1098 = vmatprep.subr.mxu0 %v699
        %1099 = vmatpush1.msra.mxu0 %v698
        %1100 = vmatprep.subr.mxu0 %v715
        %1101 = vmatpush1.msra.mxu0 %v714
        %1102 = vmatprep.subr.mxu0 %v731
        %1103 = vmatpush1.msra.mxu0 %v730
        %1104 = vmatprep.subr.mxu0 %v747
        %1105 = vmatpush1.msra.mxu0 %v746
        %1106 = vmatprep.subr.mxu0 %v763
        %1107 = vmatpush1.msra.mxu0 %v762
        %1108 = vmatprep.subr.mxu0 %v779
        %1109 = vmatpush1.msra.mxu0 %v778
        %1110 = vmatprep.subr.mxu0 %v795
        %1111 = vmatpush1.msra.mxu0 %v794
        %1112 = vmatprep.subr.mxu0 %v811
        %1113 = vmatpush1.msra.mxu0 %v810
        %1114 = vmatprep.subr.mxu0 %v827
        %1115 = vmatpush1.msra.mxu0 %v826
        %1116 = vmatprep.subr.mxu0 %v843
        %1117 = vmatpush1.msra.mxu0 %v842
        %1118 = vmatprep.mubr.f32.mxu0 %v855
        %1119 = vmatmul.mubr.f32.gmra.mrb[0].mxu0 %v854
        %v1120 = vpop.f32.mrb[0].mxu0
        %v1121 = vadd.f32 %v876, %v1120
        %v1122 = vpop.f32.mrb[0].mxu0
        %v1123 = vadd.f32 %v876, %v1122
        %1124 = vmatprep.mubr.f32.mxu0 %v857
        %1125 = vmatmul.mubr.f32.gmra.mrb[0].mxu0 %v856
        %v1126 = vpop.f32.mrb[0].mxu0
        %v1127 = vadd.f32 %v881, %v1126
        %v1128 = vpop.f32.mrb[0].mxu0
        %v1129 = vadd.f32 %v881, %v1128
        %1130 = vmatprep.mubr.f32.mxu0 %v859
        %1131 = vmatmul.mubr.f32.gmra.mrb[0].mxu0 %v858
        %v1132 = vpop.f32.mrb[0].mxu0
        %v1133 = vadd.f32 %v886, %v1132
        %v1134 = vpop.f32.mrb[0].mxu0
        %v1135 = vadd.f32 %v886, %v1134
        %1136 = vdwg.mxu0
        %1137 = vmatprep.subr.mxu0 %v349
        %1138 = vmatpush1.msra.mxu0 %v348
        %1139 = vmatprep.subr.mxu0 %v365
        %1140 = vmatpush1.msra.mxu0 %v364
        %1141 = vmatprep.subr.mxu0 %v381
        %1142 = vmatpush1.msra.mxu0 %v380
        %1143 = vmatprep.subr.mxu0 %v397
        %1144 = vmatpush1.msra.mxu0 %v396
        %1145 = vmatprep.subr.mxu0 %v413
        %1146 = vmatpush1.msra.mxu0 %v412
        %1147 = vmatprep.subr.mxu0 %v429
        %1148 = vmatpush1.msra.mxu0 %v428
        %1149 = vmatprep.subr.mxu0 %v445
        %1150 = vmatpush1.msra.mxu0 %v444
        %1151 = vmatprep.subr.mxu0 %v461
        %1152 = vmatpush1.msra.mxu0 %v460
        %1153 = vmatprep.subr.mxu0 %v477
        %1154 = vmatpush1.msra.mxu0 %v476
        %1155 = vmatprep.subr.mxu0 %v493
        %1156 = vmatpush1.msra.mxu0 %v492
        %1157 = vmatprep.subr.mxu0 %v509
        %1158 = vmatpush1.msra.mxu0 %v508
        %1159 = vmatprep.subr.mxu0 %v525
        %1160 = vmatpush1.msra.mxu0 %v524
        %1161 = vmatprep.subr.mxu0 %v541
        %1162 = vmatpush1.msra.mxu0 %v540
        %1163 = vmatprep.subr.mxu0 %v557
        %1164 = vmatpush1.msra.mxu0 %v556
        %1165 = vmatprep.subr.mxu0 %v573
        %1166 = vmatpush1.msra.mxu0 %v572
        %1167 = vmatprep.subr.mxu0 %v589
        %1168 = vmatpush1.msra.mxu0 %v588
        %1169 = vmatprep.subr.mxu0 %v605
        %1170 = vmatpush1.msra.mxu0 %v604
        %1171 = vmatprep.subr.mxu0 %v621
        %1172 = vmatpush1.msra.mxu0 %v620
        %1173 = vmatprep.subr.mxu0 %v637
        %1174 = vmatpush1.msra.mxu0 %v636
        %1175 = vmatprep.subr.mxu0 %v653
        %1176 = vmatpush1.msra.mxu0 %v652
        %1177 = vmatprep.subr.mxu0 %v669
        %1178 = vmatpush1.msra.mxu0 %v668
        %1179 = vmatprep.subr.mxu0 %v685
        %1180 = vmatpush1.msra.mxu0 %v684
        %1181 = vmatprep.subr.mxu0 %v701
        %1182 = vmatpush1.msra.mxu0 %v700
        %1183 = vmatprep.subr.mxu0 %v717
        %1184 = vmatpush1.msra.mxu0 %v716
        %1185 = vmatprep.subr.mxu0 %v733
        %1186 = vmatpush1.msra.mxu0 %v732
        %1187 = vmatprep.subr.mxu0 %v749
        %1188 = vmatpush1.msra.mxu0 %v748
        %1189 = vmatprep.subr.mxu0 %v765
        %1190 = vmatpush1.msra.mxu0 %v764
        %1191 = vmatprep.subr.mxu0 %v781
        %1192 = vmatpush1.msra.mxu0 %v780
        %1193 = vmatprep.subr.mxu0 %v797
        %1194 = vmatpush1.msra.mxu0 %v796
        %1195 = vmatprep.subr.mxu0 %v813
        %1196 = vmatpush1.msra.mxu0 %v812
        %1197 = vmatprep.subr.mxu0 %v829
        %1198 = vmatpush1.msra.mxu0 %v828
        %1199 = vmatprep.subr.mxu0 %v845
        %1200 = vmatpush1.msra.mxu0 %v844
        %1201 = vmatprep.mubr.f32.mxu0 %v855
        %1202 = vmatmul.mubr.f32.gmra.mrb[0].mxu0 %v854
        %v1203 = vpop.f32.mrb[0].mxu0
        %v1204 = vadd.f32 %v876, %v1203
        %v1205 = vpop.f32.mrb[0].mxu0
        %v1206 = vadd.f32 %v876, %v1205
        %1207 = vmatprep.mubr.f32.mxu0 %v857
        %1208 = vmatmul.mubr.f32.gmra.mrb[0].mxu0 %v856
        %v1209 = vpop.f32.mrb[0].mxu0
        %v1210 = vadd.f32 %v881, %v1209
        %v1211 = vpop.f32.mrb[0].mxu0
        %v1212 = vadd.f32 %v881, %v1211
        %1213 = vmatprep.mubr.f32.mxu0 %v859
        %1214 = vmatmul.mubr.f32.gmra.mrb[0].mxu0 %v858
        %v1215 = vpop.f32.mrb[0].mxu0
        %v1216 = vadd.f32 %v886, %v1215
        %v1217 = vpop.f32.mrb[0].mxu0
        %v1218 = vadd.f32 %v886, %v1217
        %1219 = vdwg.mxu0
        %1220 = vmatprep.subr.mxu0 %v351
        %1221 = vmatpush1.msra.mxu0 %v350
        %1222 = vmatprep.subr.mxu0 %v367
        %1223 = vmatpush1.msra.mxu0 %v366
        %1224 = vmatprep.subr.mxu0 %v383
        %1225 = vmatpush1.msra.mxu0 %v382
        %1226 = vmatprep.subr.mxu0 %v399
        %1227 = vmatpush1.msra.mxu0 %v398
        %1228 = vmatprep.subr.mxu0 %v415
        %1229 = vmatpush1.msra.mxu0 %v414
        %1230 = vmatprep.subr.mxu0 %v431
        %1231 = vmatpush1.msra.mxu0 %v430
        %1232 = vmatprep.subr.mxu0 %v447
        %1233 = vmatpush1.msra.mxu0 %v446
        %1234 = vmatprep.subr.mxu0 %v463
        %1235 = vmatpush1.msra.mxu0 %v462
        %1236 = vmatprep.subr.mxu0 %v479
        %1237 = vmatpush1.msra.mxu0 %v478
        %1238 = vmatprep.subr.mxu0 %v495
        %1239 = vmatpush1.msra.mxu0 %v494
        %1240 = vmatprep.subr.mxu0 %v511
        %1241 = vmatpush1.msra.mxu0 %v510
        %1242 = vmatprep.subr.mxu0 %v527
        %1243 = vmatpush1.msra.mxu0 %v526
        %1244 = vmatprep.subr.mxu0 %v543
        %1245 = vmatpush1.msra.mxu0 %v542
        %1246 = vmatprep.subr.mxu0 %v559
        %1247 = vmatpush1.msra.mxu0 %v558
        %1248 = vmatprep.subr.mxu0 %v575
        %1249 = vmatpush1.msra.mxu0 %v574
        %1250 = vmatprep.subr.mxu0 %v591
        %1251 = vmatpush1.msra.mxu0 %v590
        %1252 = vmatprep.subr.mxu0 %v607
        %1253 = vmatpush1.msra.mxu0 %v606
        %1254 = vmatprep.subr.mxu0 %v623
        %1255 = vmatpush1.msra.mxu0 %v622
        %1256 = vmatprep.subr.mxu0 %v639
        %1257 = vmatpush1.msra.mxu0 %v638
        %1258 = vmatprep.subr.mxu0 %v655
        %1259 = vmatpush1.msra.mxu0 %v654
        %1260 = vmatprep.subr.mxu0 %v671
        %1261 = vmatpush1.msra.mxu0 %v670
        %1262 = vmatprep.subr.mxu0 %v687
        %1263 = vmatpush1.msra.mxu0 %v686
        %1264 = vmatprep.subr.mxu0 %v703
        %1265 = vmatpush1.msra.mxu0 %v702
        %1266 = vmatprep.subr.mxu0 %v719
        %1267 = vmatpush1.msra.mxu0 %v718
        %1268 = vmatprep.subr.mxu0 %v735
        %1269 = vmatpush1.msra.mxu0 %v734
        %1270 = vmatprep.subr.mxu0 %v751
        %1271 = vmatpush1.msra.mxu0 %v750
        %1272 = vmatprep.subr.mxu0 %v767
        %1273 = vmatpush1.msra.mxu0 %v766
        %1274 = vmatprep.subr.mxu0 %v783
        %1275 = vmatpush1.msra.mxu0 %v782
        %1276 = vmatprep.subr.mxu0 %v799
        %1277 = vmatpush1.msra.mxu0 %v798
        %1278 = vmatprep.subr.mxu0 %v815
        %1279 = vmatpush1.msra.mxu0 %v814
        %1280 = vmatprep.subr.mxu0 %v831
        %1281 = vmatpush1.msra.mxu0 %v830
        %1282 = vmatprep.subr.mxu0 %v847
        %1283 = vmatpush1.msra.mxu0 %v846
        %1284 = vmatprep.mubr.f32.mxu0 %v855
        %1285 = vmatmul.mubr.f32.gmra.mrb[0].mxu0 %v854
        %v1286 = vpop.f32.mrb[0].mxu0
        %v1287 = vadd.f32 %v876, %v1286
        %v1288 = vpop.f32.mrb[0].mxu0
        %v1289 = vadd.f32 %v876, %v1288
        %1290 = vmatprep.mubr.f32.mxu0 %v857
        %1291 = vmatmul.mubr.f32.gmra.mrb[0].mxu0 %v856
        %v1292 = vpop.f32.mrb[0].mxu0
        %v1293 = vadd.f32 %v881, %v1292
        %v1294 = vpop.f32.mrb[0].mxu0
        %v1295 = vadd.f32 %v881, %v1294
        %1296 = vmatprep.mubr.f32.mxu0 %v859
        %1297 = vmatmul.mubr.f32.gmra.mrb[0].mxu0 %v858
        %v1298 = vpop.f32.mrb[0].mxu0
        %v1299 = vadd.f32 %v886, %v1298
        %v1300 = vpop.f32.mrb[0].mxu0
        %v1301 = vadd.f32 %v886, %v1300
        %1302 = vdwg.mxu0
        %1303 = vmatprep.subr.mxu0 %v353
        %1304 = vmatpush1.msra.mxu0 %v352
        %1305 = vmatprep.subr.mxu0 %v369
        %1306 = vmatpush1.msra.mxu0 %v368
        %1307 = vmatprep.subr.mxu0 %v385
        %1308 = vmatpush1.msra.mxu0 %v384
        %1309 = vmatprep.subr.mxu0 %v401
        %1310 = vmatpush1.msra.mxu0 %v400
        %1311 = vmatprep.subr.mxu0 %v417
        %1312 = vmatpush1.msra.mxu0 %v416
        %1313 = vmatprep.subr.mxu0 %v433
        %1314 = vmatpush1.msra.mxu0 %v432
        %1315 = vmatprep.subr.mxu0 %v449
        %1316 = vmatpush1.msra.mxu0 %v448
        %1317 = vmatprep.subr.mxu0 %v465
        %1318 = vmatpush1.msra.mxu0 %v464
        %1319 = vmatprep.subr.mxu0 %v481
        %1320 = vmatpush1.msra.mxu0 %v480
        %1321 = vmatprep.subr.mxu0 %v497
        %1322 = vmatpush1.msra.mxu0 %v496
        %1323 = vmatprep.subr.mxu0 %v513
        %1324 = vmatpush1.msra.mxu0 %v512
        %1325 = vmatprep.subr.mxu0 %v529
        %1326 = vmatpush1.msra.mxu0 %v528
        %1327 = vmatprep.subr.mxu0 %v545
        %1328 = vmatpush1.msra.mxu0 %v544
        %1329 = vmatprep.subr.mxu0 %v561
        %1330 = vmatpush1.msra.mxu0 %v560
        %1331 = vmatprep.subr.mxu0 %v577
        %1332 = vmatpush1.msra.mxu0 %v576
        %1333 = vmatprep.subr.mxu0 %v593
        %1334 = vmatpush1.msra.mxu0 %v592
        %1335 = vmatprep.subr.mxu0 %v609
        %1336 = vmatpush1.msra.mxu0 %v608
        %1337 = vmatprep.subr.mxu0 %v625
        %1338 = vmatpush1.msra.mxu0 %v624
        %1339 = vmatprep.subr.mxu0 %v641
        %1340 = vmatpush1.msra.mxu0 %v640
        %1341 = vmatprep.subr.mxu0 %v657
        %1342 = vmatpush1.msra.mxu0 %v656
        %1343 = vmatprep.subr.mxu0 %v673
        %1344 = vmatpush1.msra.mxu0 %v672
        %1345 = vmatprep.subr.mxu0 %v689
        %1346 = vmatpush1.msra.mxu0 %v688
        %1347 = vmatprep.subr.mxu0 %v705
        %1348 = vmatpush1.msra.mxu0 %v704
        %1349 = vmatprep.subr.mxu0 %v721
        %1350 = vmatpush1.msra.mxu0 %v720
        %1351 = vmatprep.subr.mxu0 %v737
        %1352 = vmatpush1.msra.mxu0 %v736
        %1353 = vmatprep.subr.mxu0 %v753
        %1354 = vmatpush1.msra.mxu0 %v752
        %1355 = vmatprep.subr.mxu0 %v769
        %1356 = vmatpush1.msra.mxu0 %v768
        %1357 = vmatprep.subr.mxu0 %v785
        %1358 = vmatpush1.msra.mxu0 %v784
        %1359 = vmatprep.subr.mxu0 %v801
        %1360 = vmatpush1.msra.mxu0 %v800
        %1361 = vmatprep.subr.mxu0 %v817
        %1362 = vmatpush1.msra.mxu0 %v816
        %1363 = vmatprep.subr.mxu0 %v833
        %1364 = vmatpush1.msra.mxu0 %v832
        %1365 = vmatprep.subr.mxu0 %v849
        %1366 = vmatpush1.msra.mxu0 %v848
        %1367 = vmatprep.mubr.f32.mxu0 %v855
        %1368 = vmatmul.mubr.f32.gmra.mrb[0].mxu0 %v854
        %v1369 = vpop.f32.mrb[0].mxu0
        %v1370 = vadd.f32 %v876, %v1369
        %v1371 = vpop.f32.mrb[0].mxu0
        %v1372 = vadd.f32 %v876, %v1371
        %1373 = vmatprep.mubr.f32.mxu0 %v857
        %1374 = vmatmul.mubr.f32.gmra.mrb[0].mxu0 %v856
        %v1375 = vpop.f32.mrb[0].mxu0
        %v1376 = vadd.f32 %v881, %v1375
        %v1377 = vpop.f32.mrb[0].mxu0
        %v1378 = vadd.f32 %v881, %v1377
        %1379 = vmatprep.mubr.f32.mxu0 %v859
        %1380 = vmatmul.mubr.f32.gmra.mrb[0].mxu0 %v858
        %v1381 = vpop.f32.mrb[0].mxu0
        %v1382 = vadd.f32 %v886, %v1381
        %v1383 = vpop.f32.mrb[0].mxu0
        %v1384 = vadd.f32 %v886, %v1383
        %1385 = vdwg.mxu0
        %1386 = vmatprep.subr.mxu0 %v355
        %1387 = vmatpush1.msra.mxu0 %v354
        %1388 = vmatprep.subr.mxu0 %v371
        %1389 = vmatpush1.msra.mxu0 %v370
        %1390 = vmatprep.subr.mxu0 %v387
        %1391 = vmatpush1.msra.mxu0 %v386
        %1392 = vmatprep.subr.mxu0 %v403
        %1393 = vmatpush1.msra.mxu0 %v402
        %1394 = vmatprep.subr.mxu0 %v419
        %1395 = vmatpush1.msra.mxu0 %v418
        %1396 = vmatprep.subr.mxu0 %v435
        %1397 = vmatpush1.msra.mxu0 %v434
        %1398 = vmatprep.subr.mxu0 %v451
        %1399 = vmatpush1.msra.mxu0 %v450
        %1400 = vmatprep.subr.mxu0 %v467
        %1401 = vmatpush1.msra.mxu0 %v466
        %1402 = vmatprep.subr.mxu0 %v483
        %1403 = vmatpush1.msra.mxu0 %v482
        %1404 = vmatprep.subr.mxu0 %v499
        %1405 = vmatpush1.msra.mxu0 %v498
        %1406 = vmatprep.subr.mxu0 %v515
        %1407 = vmatpush1.msra.mxu0 %v514
        %1408 = vmatprep.subr.mxu0 %v531
        %1409 = vmatpush1.msra.mxu0 %v530
        %1410 = vmatprep.subr.mxu0 %v547
        %1411 = vmatpush1.msra.mxu0 %v546
        %1412 = vmatprep.subr.mxu0 %v563
        %1413 = vmatpush1.msra.mxu0 %v562
        %1414 = vmatprep.subr.mxu0 %v579
        %1415 = vmatpush1.msra.mxu0 %v578
        %1416 = vmatprep.subr.mxu0 %v595
        %1417 = vmatpush1.msra.mxu0 %v594
        %1418 = vmatprep.subr.mxu0 %v611
        %1419 = vmatpush1.msra.mxu0 %v610
        %1420 = vmatprep.subr.mxu0 %v627
        %1421 = vmatpush1.msra.mxu0 %v626
        %1422 = vmatprep.subr.mxu0 %v643
        %1423 = vmatpush1.msra.mxu0 %v642
        %1424 = vmatprep.subr.mxu0 %v659
        %1425 = vmatpush1.msra.mxu0 %v658
        %1426 = vmatprep.subr.mxu0 %v675
        %1427 = vmatpush1.msra.mxu0 %v674
        %1428 = vmatprep.subr.mxu0 %v691
        %1429 = vmatpush1.msra.mxu0 %v690
        %1430 = vmatprep.subr.mxu0 %v707
        %1431 = vmatpush1.msra.mxu0 %v706
        %1432 = vmatprep.subr.mxu0 %v723
        %1433 = vmatpush1.msra.mxu0 %v722
        %1434 = vmatprep.subr.mxu0 %v739
        %1435 = vmatpush1.msra.mxu0 %v738
        %1436 = vmatprep.subr.mxu0 %v755
        %1437 = vmatpush1.msra.mxu0 %v754
        %1438 = vmatprep.subr.mxu0 %v771
        %1439 = vmatpush1.msra.mxu0 %v770
        %1440 = vmatprep.subr.mxu0 %v787
        %1441 = vmatpush1.msra.mxu0 %v786
        %1442 = vmatprep.subr.mxu0 %v803
        %1443 = vmatpush1.msra.mxu0 %v802
        %1444 = vmatprep.subr.mxu0 %v819
        %1445 = vmatpush1.msra.mxu0 %v818
        %1446 = vmatprep.subr.mxu0 %v835
        %1447 = vmatpush1.msra.mxu0 %v834
        %1448 = vmatprep.subr.mxu0 %v851
        %1449 = vmatpush1.msra.mxu0 %v850
        %1450 = vmatprep.mubr.f32.mxu0 %v855
        %1451 = vmatmul.mubr.f32.gmra.mrb[0].mxu0 %v854
        %v1452 = vpop.f32.mrb[0].mxu0
        %v1453 = vadd.f32 %v876, %v1452
        %v1454 = vpop.f32.mrb[0].mxu0
        %v1455 = vadd.f32 %v876, %v1454
        %1456 = vmatprep.mubr.f32.mxu0 %v857
        %1457 = vmatmul.mubr.f32.gmra.mrb[0].mxu0 %v856
        %v1458 = vpop.f32.mrb[0].mxu0
        %v1459 = vadd.f32 %v881, %v1458
        %v1460 = vpop.f32.mrb[0].mxu0
        %v1461 = vadd.f32 %v881, %v1460
        %1462 = vmatprep.mubr.f32.mxu0 %v859
        %1463 = vmatmul.mubr.f32.gmra.mrb[0].mxu0 %v858
        %v1464 = vpop.f32.mrb[0].mxu0
        %v1465 = vadd.f32 %v886, %v1464
        %v1466 = vpop.f32.mrb[0].mxu0
        %v1467 = vadd.f32 %v886, %v1466
        %1468 = vdwg.mxu0
        %1469 = vmatprep.subr.mxu0 %v357
        %1470 = vmatpush1.msra.mxu0 %v356
        %1471 = vmatprep.subr.mxu0 %v373
        %1472 = vmatpush1.msra.mxu0 %v372
        %1473 = vmatprep.subr.mxu0 %v389
        %1474 = vmatpush1.msra.mxu0 %v388
        %1475 = vmatprep.subr.mxu0 %v405
        %1476 = vmatpush1.msra.mxu0 %v404
        %1477 = vmatprep.subr.mxu0 %v421
        %1478 = vmatpush1.msra.mxu0 %v420
        %1479 = vmatprep.subr.mxu0 %v437
        %1480 = vmatpush1.msra.mxu0 %v436
        %1481 = vmatprep.subr.mxu0 %v453
        %1482 = vmatpush1.msra.mxu0 %v452
        %1483 = vmatprep.subr.mxu0 %v469
        %1484 = vmatpush1.msra.mxu0 %v468
        %1485 = vmatprep.subr.mxu0 %v485
        %1486 = vmatpush1.msra.mxu0 %v484
        %1487 = vmatprep.subr.mxu0 %v501
        %1488 = vmatpush1.msra.mxu0 %v500
        %1489 = vmatprep.subr.mxu0 %v517
        %1490 = vmatpush1.msra.mxu0 %v516
        %1491 = vmatprep.subr.mxu0 %v533
        %1492 = vmatpush1.msra.mxu0 %v532
        %1493 = vmatprep.subr.mxu0 %v549
        %1494 = vmatpush1.msra.mxu0 %v548
        %1495 = vmatprep.subr.mxu0 %v565
        %1496 = vmatpush1.msra.mxu0 %v564
        %1497 = vmatprep.subr.mxu0 %v581
        %1498 = vmatpush1.msra.mxu0 %v580
        %1499 = vmatprep.subr.mxu0 %v597
        %1500 = vmatpush1.msra.mxu0 %v596
        %1501 = vmatprep.subr.mxu0 %v613
        %1502 = vmatpush1.msra.mxu0 %v612
        %1503 = vmatprep.subr.mxu0 %v629
        %1504 = vmatpush1.msra.mxu0 %v628
        %1505 = vmatprep.subr.mxu0 %v645
        %1506 = vmatpush1.msra.mxu0 %v644
        %1507 = vmatprep.subr.mxu0 %v661
        %1508 = vmatpush1.msra.mxu0 %v660
        %1509 = vmatprep.subr.mxu0 %v677
        %1510 = vmatpush1.msra.mxu0 %v676
        %1511 = vmatprep.subr.mxu0 %v693
        %1512 = vmatpush1.msra.mxu0 %v692
        %1513 = vmatprep.subr.mxu0 %v709
        %1514 = vmatpush1.msra.mxu0 %v708
        %1515 = vmatprep.subr.mxu0 %v725
        %1516 = vmatpush1.msra.mxu0 %v724
        %1517 = vmatprep.subr.mxu0 %v741
        %1518 = vmatpush1.msra.mxu0 %v740
        %1519 = vmatprep.subr.mxu0 %v757
        %1520 = vmatpush1.msra.mxu0 %v756
        %1521 = vmatprep.subr.mxu0 %v773
        %1522 = vmatpush1.msra.mxu0 %v772
        %1523 = vmatprep.subr.mxu0 %v789
        %1524 = vmatpush1.msra.mxu0 %v788
        %1525 = vmatprep.subr.mxu0 %v805
        %1526 = vmatpush1.msra.mxu0 %v804
        %1527 = vmatprep.subr.mxu0 %v821
        %1528 = vmatpush1.msra.mxu0 %v820
        %1529 = vmatprep.subr.mxu0 %v837
        %1530 = vmatpush1.msra.mxu0 %v836
        %1531 = vmatprep.subr.mxu0 %v853
        %1532 = vmatpush1.msra.mxu0 %v852
        %1533 = vmatprep.mubr.f32.mxu0 %v855
        %1534 = vmatmul.mubr.f32.gmra.mrb[0].mxu0 %v854
        %v1535 = vpop.f32.mrb[0].mxu0
        %v1536 = vadd.f32 %v876, %v1535
        %v1537 = vpop.f32.mrb[0].mxu0
        %v1538 = vadd.f32 %v876, %v1537
        %1539 = vmatprep.mubr.f32.mxu0 %v857
        %1540 = vmatmul.mubr.f32.gmra.mrb[0].mxu0 %v856
        %v1541 = vpop.f32.mrb[0].mxu0
        %v1542 = vadd.f32 %v881, %v1541
        %v1543 = vpop.f32.mrb[0].mxu0
        %v1544 = vadd.f32 %v881, %v1543
        %1545 = vmatprep.mubr.f32.mxu0 %v859
        %1546 = vmatmul.mubr.f32.gmra.mrb[0].mxu0 %v858
        %v1547 = vpop.f32.mrb[0].mxu0
        %v1548 = vadd.f32 %v886, %v1547
        %v1549 = vpop.f32.mrb[0].mxu0
        %v1550 = vadd.f32 %v886, %v1549
        %1551 = vdwg.mxu0
        %1552 = vst [vmem:[%s320] sm:$0xff] %v955
        %1553 = vst [vmem:[%s320 + $0x8] sm:$0xff] %v957
        %1554 = vst [vmem:[%s320 + $0x10] sm:$0xff] %v1038
        %1555 = vst [vmem:[%s320 + $0x18] sm:$0xff] %v1040
        %1556 = vst [vmem:[%s320 + $0x20] sm:$0xff] %v1121
        %1557 = vst [vmem:[%s320 + $0x28] sm:$0xff] %v1123
        %1558 = vst [vmem:[%s320 + $0x30] sm:$0xff] %v1204
        %1559 = vst [vmem:[%s320 + $0x38] sm:$0xff] %v1206
        %1560 = vst [vmem:[%s320 + $0x40] sm:$0xff] %v1287
        %1561 = vst [vmem:[%s320 + $0x48] sm:$0xff] %v1289
        %1562 = vst [vmem:[%s320 + $0x50] sm:$0xff] %v1370
        %1563 = vst [vmem:[%s320 + $0x58] sm:$0xff] %v1372
        %1564 = vst [vmem:[%s320 + $0x60] sm:$0xff] %v1453
        %1565 = vst [vmem:[%s320 + $0x68] sm:$0xff] %v1455
        %1566 = vst [vmem:[%s320 + $0x70] sm:$0xff] %v1536
        %1567 = vst [vmem:[%s320 + $0x78] sm:$0xff] %v1538
        %1568 = vst [vmem:[%s320 + $0x80] sm:$0xff] %v961
        %1569 = vst [vmem:[%s320 + $0x88] sm:$0xff] %v963
        %1570 = vst [vmem:[%s320 + $0x90] sm:$0xff] %v1044
        %1571 = vst [vmem:[%s320 + $0x98] sm:$0xff] %v1046
        %1572 = vst [vmem:[%s320 + $0xa0] sm:$0xff] %v1127
        %1573 = vst [vmem:[%s320 + $0xa8] sm:$0xff] %v1129
        %1574 = vst [vmem:[%s320 + $0xb0] sm:$0xff] %v1210
        %1575 = vst [vmem:[%s320 + $0xb8] sm:$0xff] %v1212
        %1576 = vst [vmem:[%s320 + $0xc0] sm:$0xff] %v1293
        %1577 = vst [vmem:[%s320 + $0xc8] sm:$0xff] %v1295
        %1578 = vst [vmem:[%s320 + $0xd0] sm:$0xff] %v1376
        %1579 = vst [vmem:[%s320 + $0xd8] sm:$0xff] %v1378
        %1580 = vst [vmem:[%s320 + $0xe0] sm:$0xff] %v1459
        %1581 = vst [vmem:[%s320 + $0xe8] sm:$0xff] %v1461
        %1582 = vst [vmem:[%s320 + $0xf0] sm:$0xff] %v1542
        %1583 = vst [vmem:[%s320 + $0xf8] sm:$0xff] %v1544
        %1584 = vst [vmem:[%s320 + $0x100] sm:$0x3] %v967
        %1585 = vst [vmem:[%s320 + $0x108] sm:$0x3] %v969
        %1586 = vst [vmem:[%s320 + $0x110] sm:$0x3] %v1050
        %1587 = vst [vmem:[%s320 + $0x118] sm:$0x3] %v1052
        %1588 = vst [vmem:[%s320 + $0x120] sm:$0x3] %v1133
        %1589 = vst [vmem:[%s320 + $0x128] sm:$0x3] %v1135
        %1590 = vst [vmem:[%s320 + $0x130] sm:$0x3] %v1216
        %1591 = vst [vmem:[%s320 + $0x138] sm:$0x3] %v1218
        %1592 = vst [vmem:[%s320 + $0x140] sm:$0x3] %v1299
        %1593 = vst [vmem:[%s320 + $0x148] sm:$0x3] %v1301
        %1594 = vst [vmem:[%s320 + $0x150] sm:$0x3] %v1382
        %1595 = vst [vmem:[%s320 + $0x158] sm:$0x3] %v1384
        %1596 = vst [vmem:[%s320 + $0x160] sm:$0x3] %v1465
        %1597 = vst [vmem:[%s320 + $0x168] sm:$0x3] %v1467
        %1598 = vst [vmem:[%s320 + $0x170] sm:$0x3] %v1548
        %1599 = vst [vmem:[%s320 + $0x178] sm:$0x3] %v1550
        %v1600 = vld [vmem:[%s3] sm:$0xff]
        %v1601 = vld [vmem:[%s3 + $0x8] sm:$0xff]
        %v1602 = vld [vmem:[%s3 + $0x10] sm:$0xff]
        %v1603 = vld [vmem:[%s3 + $0x18] sm:$0xff]
        %v1604 = vld [vmem:[%s3 + $0x20] sm:$0xf]
        %1606 = vset.pattern.permute.xlu0 0
        %1607 = vperm.xlu0 %1606, %v1600
        %v1608 = vpop.permute.xlu0 %1607
        %1611 = vset.pattern.permute.xlu0 0
        %1612 = vperm.xlu0 %1611, %v1601
        %v1613 = vpop.permute.xlu0 %1612
        %1616 = vset.pattern.permute.xlu0 0
        %1617 = vperm.xlu0 %1616, %v1602
        %v1618 = vpop.permute.xlu0 %1617
        %1621 = vset.pattern.permute.xlu0 0
        %1622 = vperm.xlu0 %1621, %v1603
        %v1623 = vpop.permute.xlu0 %1622
        %1626 = vset.pattern.permute.xlu0 0
        %1627 = vperm.xlu0 %1626, %v1604
        %v1628 = vpop.permute.xlu0 %1627
        %1630 = vmatprep.subr.mxu0 %v343
        %1631 = vmatpush1.msra.mxu0 %v342
        %1632 = vmatprep.subr.mxu0 %v359
        %1633 = vmatpush1.msra.mxu0 %v358
        %1634 = vmatprep.subr.mxu0 %v375
        %1635 = vmatpush1.msra.mxu0 %v374
        %1636 = vmatprep.subr.mxu0 %v391
        %1637 = vmatpush1.msra.mxu0 %v390
        %1638 = vmatprep.subr.mxu0 %v407
        %1639 = vmatpush1.msra.mxu0 %v406
        %1640 = vmatprep.subr.mxu0 %v423
        %1641 = vmatpush1.msra.mxu0 %v422
        %1642 = vmatprep.subr.mxu0 %v439
        %1643 = vmatpush1.msra.mxu0 %v438
        %1644 = vmatprep.subr.mxu0 %v455
        %1645 = vmatpush1.msra.mxu0 %v454
        %1646 = vmatprep.subr.mxu0 %v471
        %1647 = vmatpush1.msra.mxu0 %v470
        %1648 = vmatprep.subr.mxu0 %v487
        %1649 = vmatpush1.msra.mxu0 %v486
        %1650 = vmatprep.subr.mxu0 %v503
        %1651 = vmatpush1.msra.mxu0 %v502
        %1652 = vmatprep.subr.mxu0 %v519
        %1653 = vmatpush1.msra.mxu0 %v518
        %1654 = vmatprep.subr.mxu0 %v535
        %1655 = vmatpush1.msra.mxu0 %v534
        %1656 = vmatprep.subr.mxu0 %v551
        %1657 = vmatpush1.msra.mxu0 %v550
        %1658 = vmatprep.subr.mxu0 %v567
        %1659 = vmatpush1.msra.mxu0 %v566
        %1660 = vmatprep.subr.mxu0 %v583
        %1661 = vmatpush1.msra.mxu0 %v582
        %1662 = vmatprep.subr.mxu0 %v599
        %1663 = vmatpush1.msra.mxu0 %v598
        %1664 = vmatprep.subr.mxu0 %v615
        %1665 = vmatpush1.msra.mxu0 %v614
        %1666 = vmatprep.subr.mxu0 %v631
        %1667 = vmatpush1.msra.mxu0 %v630
        %1668 = vmatprep.subr.mxu0 %v647
        %1669 = vmatpush1.msra.mxu0 %v646
        %1670 = vmatprep.subr.mxu0 %v663
        %1671 = vmatpush1.msra.mxu0 %v662
        %1672 = vmatprep.subr.mxu0 %v679
        %1673 = vmatpush1.msra.mxu0 %v678
        %1674 = vmatprep.subr.mxu0 %v695
        %1675 = vmatpush1.msra.mxu0 %v694
        %1676 = vmatprep.subr.mxu0 %v711
        %1677 = vmatpush1.msra.mxu0 %v710
        %1678 = vmatprep.subr.mxu0 %v727
        %1679 = vmatpush1.msra.mxu0 %v726
        %1680 = vmatprep.subr.mxu0 %v743
        %1681 = vmatpush1.msra.mxu0 %v742
        %1682 = vmatprep.subr.mxu0 %v759
        %1683 = vmatpush1.msra.mxu0 %v758
        %1684 = vmatprep.subr.mxu0 %v775
        %1685 = vmatpush1.msra.mxu0 %v774
        %1686 = vmatprep.subr.mxu0 %v791
        %1687 = vmatpush1.msra.mxu0 %v790
        %1688 = vmatprep.subr.mxu0 %v807
        %1689 = vmatpush1.msra.mxu0 %v806
        %1690 = vmatprep.subr.mxu0 %v823
        %1691 = vmatpush1.msra.mxu0 %v822
        %1692 = vmatprep.subr.mxu0 %v839
        %1693 = vmatpush1.msra.mxu0 %v838
        %1694 = vmatprep.mubr.f32.mxu0 %v861
        %1695 = vmatmul.mubr.f32.gmra.mrb[0].mxu0 %v860
        %v1696 = vpop.f32.mrb[0].mxu0
        %v1697 = vadd.f32 %v1608, %v1696
        %v1698 = vpop.f32.mrb[0].mxu0
        %v1699 = vadd.f32 %v1608, %v1698
        %1700 = vmatprep.mubr.f32.mxu0 %v863
        %1701 = vmatmul.mubr.f32.gmra.mrb[0].mxu0 %v862
        %v1702 = vpop.f32.mrb[0].mxu0
        %v1703 = vadd.f32 %v1613, %v1702
        %v1704 = vpop.f32.mrb[0].mxu0
        %v1705 = vadd.f32 %v1613, %v1704
        %1706 = vmatprep.mubr.f32.mxu0 %v865
        %1707 = vmatmul.mubr.f32.gmra.mrb[0].mxu0 %v864
        %v1708 = vpop.f32.mrb[0].mxu0
        %v1709 = vadd.f32 %v1618, %v1708
        %v1710 = vpop.f32.mrb[0].mxu0
        %v1711 = vadd.f32 %v1618, %v1710
        %1712 = vmatprep.mubr.f32.mxu0 %v867
        %1713 = vmatmul.mubr.f32.gmra.mrb[0].mxu0 %v866
        %v1714 = vpop.f32.mrb[0].mxu0
        %v1715 = vadd.f32 %v1623, %v1714
        %v1716 = vpop.f32.mrb[0].mxu0
        %v1717 = vadd.f32 %v1623, %v1716
        %1718 = vmatprep.mubr.f32.mxu0 %v869
        %1719 = vmatmul.mubr.f32.gmra.mrb[0].mxu0 %v868
        %v1720 = vpop.f32.mrb[0].mxu0
        %v1721 = vadd.f32 %v1628, %v1720
        %v1722 = vpop.f32.mrb[0].mxu0
        %v1723 = vadd.f32 %v1628, %v1722
        %1724 = vdwg.mxu0
        %1725 = vmatprep.subr.mxu0 %v345
        %1726 = vmatpush1.msra.mxu0 %v344
        %1727 = vmatprep.subr.mxu0 %v361
        %1728 = vmatpush1.msra.mxu0 %v360
        %1729 = vmatprep.subr.mxu0 %v377
        %1730 = vmatpush1.msra.mxu0 %v376
        %1731 = vmatprep.subr.mxu0 %v393
        %1732 = vmatpush1.msra.mxu0 %v392
        %1733 = vmatprep.subr.mxu0 %v409
        %1734 = vmatpush1.msra.mxu0 %v408
        %1735 = vmatprep.subr.mxu0 %v425
        %1736 = vmatpush1.msra.mxu0 %v424
        %1737 = vmatprep.subr.mxu0 %v441
        %1738 = vmatpush1.msra.mxu0 %v440
        %1739 = vmatprep.subr.mxu0 %v457
        %1740 = vmatpush1.msra.mxu0 %v456
        %1741 = vmatprep.subr.mxu0 %v473
        %1742 = vmatpush1.msra.mxu0 %v472
        %1743 = vmatprep.subr.mxu0 %v489
        %1744 = vmatpush1.msra.mxu0 %v488
        %1745 = vmatprep.subr.mxu0 %v505
        %1746 = vmatpush1.msra.mxu0 %v504
        %1747 = vmatprep.subr.mxu0 %v521
        %1748 = vmatpush1.msra.mxu0 %v520
        %1749 = vmatprep.subr.mxu0 %v537
        %1750 = vmatpush1.msra.mxu0 %v536
        %1751 = vmatprep.subr.mxu0 %v553
        %1752 = vmatpush1.msra.mxu0 %v552
        %1753 = vmatprep.subr.mxu0 %v569
        %1754 = vmatpush1.msra.mxu0 %v568
        %1755 = vmatprep.subr.mxu0 %v585
        %1756 = vmatpush1.msra.mxu0 %v584
        %1757 = vmatprep.subr.mxu0 %v601
        %1758 = vmatpush1.msra.mxu0 %v600
        %1759 = vmatprep.subr.mxu0 %v617
        %1760 = vmatpush1.msra.mxu0 %v616
        %1761 = vmatprep.subr.mxu0 %v633
        %1762 = vmatpush1.msra.mxu0 %v632
        %1763 = vmatprep.subr.mxu0 %v649
        %1764 = vmatpush1.msra.mxu0 %v648
        %1765 = vmatprep.subr.mxu0 %v665
        %1766 = vmatpush1.msra.mxu0 %v664
        %1767 = vmatprep.subr.mxu0 %v681
        %1768 = vmatpush1.msra.mxu0 %v680
        %1769 = vmatprep.subr.mxu0 %v697
        %1770 = vmatpush1.msra.mxu0 %v696
        %1771 = vmatprep.subr.mxu0 %v713
        %1772 = vmatpush1.msra.mxu0 %v712
        %1773 = vmatprep.subr.mxu0 %v729
        %1774 = vmatpush1.msra.mxu0 %v728
        %1775 = vmatprep.subr.mxu0 %v745
        %1776 = vmatpush1.msra.mxu0 %v744
        %1777 = vmatprep.subr.mxu0 %v761
        %1778 = vmatpush1.msra.mxu0 %v760
        %1779 = vmatprep.subr.mxu0 %v777
        %1780 = vmatpush1.msra.mxu0 %v776
        %1781 = vmatprep.subr.mxu0 %v793
        %1782 = vmatpush1.msra.mxu0 %v792
        %1783 = vmatprep.subr.mxu0 %v809
        %1784 = vmatpush1.msra.mxu0 %v808
        %1785 = vmatprep.subr.mxu0 %v825
        %1786 = vmatpush1.msra.mxu0 %v824
        %1787 = vmatprep.subr.mxu0 %v841
        %1788 = vmatpush1.msra.mxu0 %v840
        %1789 = vmatprep.mubr.f32.mxu0 %v861
        %1790 = vmatmul.mubr.f32.gmra.mrb[0].mxu0 %v860
        %v1791 = vpop.f32.mrb[0].mxu0
        %v1792 = vadd.f32 %v1608, %v1791
        %v1793 = vpop.f32.mrb[0].mxu0
        %v1794 = vadd.f32 %v1608, %v1793
        %1795 = vmatprep.mubr.f32.mxu0 %v863
        %1796 = vmatmul.mubr.f32.gmra.mrb[0].mxu0 %v862
        %v1797 = vpop.f32.mrb[0].mxu0
        %v1798 = vadd.f32 %v1613, %v1797
        %v1799 = vpop.f32.mrb[0].mxu0
        %v1800 = vadd.f32 %v1613, %v1799
        %1801 = vmatprep.mubr.f32.mxu0 %v865
        %1802 = vmatmul.mubr.f32.gmra.mrb[0].mxu0 %v864
        %v1803 = vpop.f32.mrb[0].mxu0
        %v1804 = vadd.f32 %v1618, %v1803
        %v1805 = vpop.f32.mrb[0].mxu0
        %v1806 = vadd.f32 %v1618, %v1805
        %1807 = vmatprep.mubr.f32.mxu0 %v867
        %1808 = vmatmul.mubr.f32.gmra.mrb[0].mxu0 %v866
        %v1809 = vpop.f32.mrb[0].mxu0
        %v1810 = vadd.f32 %v1623, %v1809
        %v1811 = vpop.f32.mrb[0].mxu0
        %v1812 = vadd.f32 %v1623, %v1811
        %1813 = vmatprep.mubr.f32.mxu0 %v869
        %1814 = vmatmul.mubr.f32.gmra.mrb[0].mxu0 %v868
        %v1815 = vpop.f32.mrb[0].mxu0
        %v1816 = vadd.f32 %v1628, %v1815
        %v1817 = vpop.f32.mrb[0].mxu0
        %v1818 = vadd.f32 %v1628, %v1817
        %1819 = vdwg.mxu0
        %1820 = vmatprep.subr.mxu0 %v347
        %1821 = vmatpush1.msra.mxu0 %v346
        %1822 = vmatprep.subr.mxu0 %v363
        %1823 = vmatpush1.msra.mxu0 %v362
        %1824 = vmatprep.subr.mxu0 %v379
        %1825 = vmatpush1.msra.mxu0 %v378
        %1826 = vmatprep.subr.mxu0 %v395
        %1827 = vmatpush1.msra.mxu0 %v394
        %1828 = vmatprep.subr.mxu0 %v411
        %1829 = vmatpush1.msra.mxu0 %v410
        %1830 = vmatprep.subr.mxu0 %v427
        %1831 = vmatpush1.msra.mxu0 %v426
        %1832 = vmatprep.subr.mxu0 %v443
        %1833 = vmatpush1.msra.mxu0 %v442
        %1834 = vmatprep.subr.mxu0 %v459
        %1835 = vmatpush1.msra.mxu0 %v458
        %1836 = vmatprep.subr.mxu0 %v475
        %1837 = vmatpush1.msra.mxu0 %v474
        %1838 = vmatprep.subr.mxu0 %v491
        %1839 = vmatpush1.msra.mxu0 %v490
        %1840 = vmatprep.subr.mxu0 %v507
        %1841 = vmatpush1.msra.mxu0 %v506
        %1842 = vmatprep.subr.mxu0 %v523
        %1843 = vmatpush1.msra.mxu0 %v522
        %1844 = vmatprep.subr.mxu0 %v539
        %1845 = vmatpush1.msra.mxu0 %v538
        %1846 = vmatprep.subr.mxu0 %v555
        %1847 = vmatpush1.msra.mxu0 %v554
        %1848 = vmatprep.subr.mxu0 %v571
        %1849 = vmatpush1.msra.mxu0 %v570
        %1850 = vmatprep.subr.mxu0 %v587
        %1851 = vmatpush1.msra.mxu0 %v586
        %1852 = vmatprep.subr.mxu0 %v603
        %1853 = vmatpush1.msra.mxu0 %v602
        %1854 = vmatprep.subr.mxu0 %v619
        %1855 = vmatpush1.msra.mxu0 %v618
        %1856 = vmatprep.subr.mxu0 %v635
        %1857 = vmatpush1.msra.mxu0 %v634
        %1858 = vmatprep.subr.mxu0 %v651
        %1859 = vmatpush1.msra.mxu0 %v650
        %1860 = vmatprep.subr.mxu0 %v667
        %1861 = vmatpush1.msra.mxu0 %v666
        %1862 = vmatprep.subr.mxu0 %v683
        %1863 = vmatpush1.msra.mxu0 %v682
        %1864 = vmatprep.subr.mxu0 %v699
        %1865 = vmatpush1.msra.mxu0 %v698
        %1866 = vmatprep.subr.mxu0 %v715
        %1867 = vmatpush1.msra.mxu0 %v714
        %1868 = vmatprep.subr.mxu0 %v731
        %1869 = vmatpush1.msra.mxu0 %v730
        %1870 = vmatprep.subr.mxu0 %v747
        %1871 = vmatpush1.msra.mxu0 %v746
        %1872 = vmatprep.subr.mxu0 %v763
        %1873 = vmatpush1.msra.mxu0 %v762
        %1874 = vmatprep.subr.mxu0 %v779
        %1875 = vmatpush1.msra.mxu0 %v778
        %1876 = vmatprep.subr.mxu0 %v795
        %1877 = vmatpush1.msra.mxu0 %v794
        %1878 = vmatprep.subr.mxu0 %v811
        %1879 = vmatpush1.msra.mxu0 %v810
        %1880 = vmatprep.subr.mxu0 %v827
        %1881 = vmatpush1.msra.mxu0 %v826
        %1882 = vmatprep.subr.mxu0 %v843
        %1883 = vmatpush1.msra.mxu0 %v842
        %1884 = vmatprep.mubr.f32.mxu0 %v861
        %1885 = vmatmul.mubr.f32.gmra.mrb[0].mxu0 %v860
        %v1886 = vpop.f32.mrb[0].mxu0
        %v1887 = vadd.f32 %v1608, %v1886
        %v1888 = vpop.f32.mrb[0].mxu0
        %v1889 = vadd.f32 %v1608, %v1888
        %1890 = vmatprep.mubr.f32.mxu0 %v863
        %1891 = vmatmul.mubr.f32.gmra.mrb[0].mxu0 %v862
        %v1892 = vpop.f32.mrb[0].mxu0
        %v1893 = vadd.f32 %v1613, %v1892
        %v1894 = vpop.f32.mrb[0].mxu0
        %v1895 = vadd.f32 %v1613, %v1894
        %1896 = vmatprep.mubr.f32.mxu0 %v865
        %1897 = vmatmul.mubr.f32.gmra.mrb[0].mxu0 %v864
        %v1898 = vpop.f32.mrb[0].mxu0
        %v1899 = vadd.f32 %v1618, %v1898
        %v1900 = vpop.f32.mrb[0].mxu0
        %v1901 = vadd.f32 %v1618, %v1900
        %1902 = vmatprep.mubr.f32.mxu0 %v867
        %1903 = vmatmul.mubr.f32.gmra.mrb[0].mxu0 %v866
        %v1904 = vpop.f32.mrb[0].mxu0
        %v1905 = vadd.f32 %v1623, %v1904
        %v1906 = vpop.f32.mrb[0].mxu0
        %v1907 = vadd.f32 %v1623, %v1906
        %1908 = vmatprep.mubr.f32.mxu0 %v869
        %1909 = vmatmul.mubr.f32.gmra.mrb[0].mxu0 %v868
        %v1910 = vpop.f32.mrb[0].mxu0
        %v1911 = vadd.f32 %v1628, %v1910
        %v1912 = vpop.f32.mrb[0].mxu0
        %v1913 = vadd.f32 %v1628, %v1912
        %1914 = vdwg.mxu0
        %1915 = vmatprep.subr.mxu0 %v349
        %1916 = vmatpush1.msra.mxu0 %v348
        %1917 = vmatprep.subr.mxu0 %v365
        %1918 = vmatpush1.msra.mxu0 %v364
        %1919 = vmatprep.subr.mxu0 %v381
        %1920 = vmatpush1.msra.mxu0 %v380
        %1921 = vmatprep.subr.mxu0 %v397
        %1922 = vmatpush1.msra.mxu0 %v396
        %1923 = vmatprep.subr.mxu0 %v413
        %1924 = vmatpush1.msra.mxu0 %v412
        %1925 = vmatprep.subr.mxu0 %v429
        %1926 = vmatpush1.msra.mxu0 %v428
        %1927 = vmatprep.subr.mxu0 %v445
        %1928 = vmatpush1.msra.mxu0 %v444
        %1929 = vmatprep.subr.mxu0 %v461
        %1930 = vmatpush1.msra.mxu0 %v460
        %1931 = vmatprep.subr.mxu0 %v477
        %1932 = vmatpush1.msra.mxu0 %v476
        %1933 = vmatprep.subr.mxu0 %v493
        %1934 = vmatpush1.msra.mxu0 %v492
        %1935 = vmatprep.subr.mxu0 %v509
        %1936 = vmatpush1.msra.mxu0 %v508
        %1937 = vmatprep.subr.mxu0 %v525
        %1938 = vmatpush1.msra.mxu0 %v524
        %1939 = vmatprep.subr.mxu0 %v541
        %1940 = vmatpush1.msra.mxu0 %v540
        %1941 = vmatprep.subr.mxu0 %v557
        %1942 = vmatpush1.msra.mxu0 %v556
        %1943 = vmatprep.subr.mxu0 %v573
        %1944 = vmatpush1.msra.mxu0 %v572
        %1945 = vmatprep.subr.mxu0 %v589
        %1946 = vmatpush1.msra.mxu0 %v588
        %1947 = vmatprep.subr.mxu0 %v605
        %1948 = vmatpush1.msra.mxu0 %v604
        %1949 = vmatprep.subr.mxu0 %v621
        %1950 = vmatpush1.msra.mxu0 %v620
        %1951 = vmatprep.subr.mxu0 %v637
        %1952 = vmatpush1.msra.mxu0 %v636
        %1953 = vmatprep.subr.mxu0 %v653
        %1954 = vmatpush1.msra.mxu0 %v652
        %1955 = vmatprep.subr.mxu0 %v669
        %1956 = vmatpush1.msra.mxu0 %v668
        %1957 = vmatprep.subr.mxu0 %v685
        %1958 = vmatpush1.msra.mxu0 %v684
        %1959 = vmatprep.subr.mxu0 %v701
        %1960 = vmatpush1.msra.mxu0 %v700
        %1961 = vmatprep.subr.mxu0 %v717
        %1962 = vmatpush1.msra.mxu0 %v716
        %1963 = vmatprep.subr.mxu0 %v733
        %1964 = vmatpush1.msra.mxu0 %v732
        %1965 = vmatprep.subr.mxu0 %v749
        %1966 = vmatpush1.msra.mxu0 %v748
        %1967 = vmatprep.subr.mxu0 %v765
        %1968 = vmatpush1.msra.mxu0 %v764
        %1969 = vmatprep.subr.mxu0 %v781
        %1970 = vmatpush1.msra.mxu0 %v780
        %1971 = vmatprep.subr.mxu0 %v797
        %1972 = vmatpush1.msra.mxu0 %v796
        %1973 = vmatprep.subr.mxu0 %v813
        %1974 = vmatpush1.msra.mxu0 %v812
        %1975 = vmatprep.subr.mxu0 %v829
        %1976 = vmatpush1.msra.mxu0 %v828
        %1977 = vmatprep.subr.mxu0 %v845
        %1978 = vmatpush1.msra.mxu0 %v844
        %1979 = vmatprep.mubr.f32.mxu0 %v861
        %1980 = vmatmul.mubr.f32.gmra.mrb[0].mxu0 %v860
        %v1981 = vpop.f32.mrb[0].mxu0
        %v1982 = vadd.f32 %v1608, %v1981
        %v1983 = vpop.f32.mrb[0].mxu0
        %v1984 = vadd.f32 %v1608, %v1983
        %1985 = vmatprep.mubr.f32.mxu0 %v863
        %1986 = vmatmul.mubr.f32.gmra.mrb[0].mxu0 %v862
        %v1987 = vpop.f32.mrb[0].mxu0
        %v1988 = vadd.f32 %v1613, %v1987
        %v1989 = vpop.f32.mrb[0].mxu0
        %v1990 = vadd.f32 %v1613, %v1989
        %1991 = vmatprep.mubr.f32.mxu0 %v865
        %1992 = vmatmul.mubr.f32.gmra.mrb[0].mxu0 %v864
        %v1993 = vpop.f32.mrb[0].mxu0
        %v1994 = vadd.f32 %v1618, %v1993
        %v1995 = vpop.f32.mrb[0].mxu0
        %v1996 = vadd.f32 %v1618, %v1995
        %1997 = vmatprep.mubr.f32.mxu0 %v867
        %1998 = vmatmul.mubr.f32.gmra.mrb[0].mxu0 %v866
        %v1999 = vpop.f32.mrb[0].mxu0
        %v2000 = vadd.f32 %v1623, %v1999
        %v2001 = vpop.f32.mrb[0].mxu0
        %v2002 = vadd.f32 %v1623, %v2001
        %2003 = vmatprep.mubr.f32.mxu0 %v869
        %2004 = vmatmul.mubr.f32.gmra.mrb[0].mxu0 %v868
        %v2005 = vpop.f32.mrb[0].mxu0
        %v2006 = vadd.f32 %v1628, %v2005
        %v2007 = vpop.f32.mrb[0].mxu0
        %v2008 = vadd.f32 %v1628, %v2007
        %2009 = vdwg.mxu0
        %2010 = vmatprep.subr.mxu0 %v351
        %2011 = vmatpush1.msra.mxu0 %v350
        %2012 = vmatprep.subr.mxu0 %v367
        %2013 = vmatpush1.msra.mxu0 %v366
        %2014 = vmatprep.subr.mxu0 %v383
        %2015 = vmatpush1.msra.mxu0 %v382
        %2016 = vmatprep.subr.mxu0 %v399
        %2017 = vmatpush1.msra.mxu0 %v398
        %2018 = vmatprep.subr.mxu0 %v415
        %2019 = vmatpush1.msra.mxu0 %v414
        %2020 = vmatprep.subr.mxu0 %v431
        %2021 = vmatpush1.msra.mxu0 %v430
        %2022 = vmatprep.subr.mxu0 %v447
        %2023 = vmatpush1.msra.mxu0 %v446
        %2024 = vmatprep.subr.mxu0 %v463
        %2025 = vmatpush1.msra.mxu0 %v462
        %2026 = vmatprep.subr.mxu0 %v479
        %2027 = vmatpush1.msra.mxu0 %v478
        %2028 = vmatprep.subr.mxu0 %v495
        %2029 = vmatpush1.msra.mxu0 %v494
        %2030 = vmatprep.subr.mxu0 %v511
        %2031 = vmatpush1.msra.mxu0 %v510
        %2032 = vmatprep.subr.mxu0 %v527
        %2033 = vmatpush1.msra.mxu0 %v526
        %2034 = vmatprep.subr.mxu0 %v543
        %2035 = vmatpush1.msra.mxu0 %v542
        %2036 = vmatprep.subr.mxu0 %v559
        %2037 = vmatpush1.msra.mxu0 %v558
        %2038 = vmatprep.subr.mxu0 %v575
        %2039 = vmatpush1.msra.mxu0 %v574
        %2040 = vmatprep.subr.mxu0 %v591
        %2041 = vmatpush1.msra.mxu0 %v590
        %2042 = vmatprep.subr.mxu0 %v607
        %2043 = vmatpush1.msra.mxu0 %v606
        %2044 = vmatprep.subr.mxu0 %v623
        %2045 = vmatpush1.msra.mxu0 %v622
        %2046 = vmatprep.subr.mxu0 %v639
        %2047 = vmatpush1.msra.mxu0 %v638
        %2048 = vmatprep.subr.mxu0 %v655
        %2049 = vmatpush1.msra.mxu0 %v654
        %2050 = vmatprep.subr.mxu0 %v671
        %2051 = vmatpush1.msra.mxu0 %v670
        %2052 = vmatprep.subr.mxu0 %v687
        %2053 = vmatpush1.msra.mxu0 %v686
        %2054 = vmatprep.subr.mxu0 %v703
        %2055 = vmatpush1.msra.mxu0 %v702
        %2056 = vmatprep.subr.mxu0 %v719
        %2057 = vmatpush1.msra.mxu0 %v718
        %2058 = vmatprep.subr.mxu0 %v735
        %2059 = vmatpush1.msra.mxu0 %v734
        %2060 = vmatprep.subr.mxu0 %v751
        %2061 = vmatpush1.msra.mxu0 %v750
        %2062 = vmatprep.subr.mxu0 %v767
        %2063 = vmatpush1.msra.mxu0 %v766
        %2064 = vmatprep.subr.mxu0 %v783
        %2065 = vmatpush1.msra.mxu0 %v782
        %2066 = vmatprep.subr.mxu0 %v799
        %2067 = vmatpush1.msra.mxu0 %v798
        %2068 = vmatprep.subr.mxu0 %v815
        %2069 = vmatpush1.msra.mxu0 %v814
        %2070 = vmatprep.subr.mxu0 %v831
        %2071 = vmatpush1.msra.mxu0 %v830
        %2072 = vmatprep.subr.mxu0 %v847
        %2073 = vmatpush1.msra.mxu0 %v846
        %2074 = vmatprep.mubr.f32.mxu0 %v861
        %2075 = vmatmul.mubr.f32.gmra.mrb[0].mxu0 %v860
        %v2076 = vpop.f32.mrb[0].mxu0
        %v2077 = vadd.f32 %v1608, %v2076
        %v2078 = vpop.f32.mrb[0].mxu0
        %v2079 = vadd.f32 %v1608, %v2078
        %2080 = vmatprep.mubr.f32.mxu0 %v863
        %2081 = vmatmul.mubr.f32.gmra.mrb[0].mxu0 %v862
        %v2082 = vpop.f32.mrb[0].mxu0
        %v2083 = vadd.f32 %v1613, %v2082
        %v2084 = vpop.f32.mrb[0].mxu0
        %v2085 = vadd.f32 %v1613, %v2084
        %2086 = vmatprep.mubr.f32.mxu0 %v865
        %2087 = vmatmul.mubr.f32.gmra.mrb[0].mxu0 %v864
        %v2088 = vpop.f32.mrb[0].mxu0
        %v2089 = vadd.f32 %v1618, %v2088
        %v2090 = vpop.f32.mrb[0].mxu0
        %v2091 = vadd.f32 %v1618, %v2090
        %2092 = vmatprep.mubr.f32.mxu0 %v867
        %2093 = vmatmul.mubr.f32.gmra.mrb[0].mxu0 %v866
        %v2094 = vpop.f32.mrb[0].mxu0
        %v2095 = vadd.f32 %v1623, %v2094
        %v2096 = vpop.f32.mrb[0].mxu0
        %v2097 = vadd.f32 %v1623, %v2096
        %2098 = vmatprep.mubr.f32.mxu0 %v869
        %2099 = vmatmul.mubr.f32.gmra.mrb[0].mxu0 %v868
        %v2100 = vpop.f32.mrb[0].mxu0
        %v2101 = vadd.f32 %v1628, %v2100
        %v2102 = vpop.f32.mrb[0].mxu0
        %v2103 = vadd.f32 %v1628, %v2102
        %2104 = vdwg.mxu0
        %2105 = vmatprep.subr.mxu0 %v353
        %2106 = vmatpush1.msra.mxu0 %v352
        %2107 = vmatprep.subr.mxu0 %v369
        %2108 = vmatpush1.msra.mxu0 %v368
        %2109 = vmatprep.subr.mxu0 %v385
        %2110 = vmatpush1.msra.mxu0 %v384
        %2111 = vmatprep.subr.mxu0 %v401
        %2112 = vmatpush1.msra.mxu0 %v400
        %2113 = vmatprep.subr.mxu0 %v417
        %2114 = vmatpush1.msra.mxu0 %v416
        %2115 = vmatprep.subr.mxu0 %v433
        %2116 = vmatpush1.msra.mxu0 %v432
        %2117 = vmatprep.subr.mxu0 %v449
        %2118 = vmatpush1.msra.mxu0 %v448
        %2119 = vmatprep.subr.mxu0 %v465
        %2120 = vmatpush1.msra.mxu0 %v464
        %2121 = vmatprep.subr.mxu0 %v481
        %2122 = vmatpush1.msra.mxu0 %v480
        %2123 = vmatprep.subr.mxu0 %v497
        %2124 = vmatpush1.msra.mxu0 %v496
        %2125 = vmatprep.subr.mxu0 %v513
        %2126 = vmatpush1.msra.mxu0 %v512
        %2127 = vmatprep.subr.mxu0 %v529
        %2128 = vmatpush1.msra.mxu0 %v528
        %2129 = vmatprep.subr.mxu0 %v545
        %2130 = vmatpush1.msra.mxu0 %v544
        %2131 = vmatprep.subr.mxu0 %v561
        %2132 = vmatpush1.msra.mxu0 %v560
        %2133 = vmatprep.subr.mxu0 %v577
        %2134 = vmatpush1.msra.mxu0 %v576
        %2135 = vmatprep.subr.mxu0 %v593
        %2136 = vmatpush1.msra.mxu0 %v592
        %2137 = vmatprep.subr.mxu0 %v609
        %2138 = vmatpush1.msra.mxu0 %v608
        %2139 = vmatprep.subr.mxu0 %v625
        %2140 = vmatpush1.msra.mxu0 %v624
        %2141 = vmatprep.subr.mxu0 %v641
        %2142 = vmatpush1.msra.mxu0 %v640
        %2143 = vmatprep.subr.mxu0 %v657
        %2144 = vmatpush1.msra.mxu0 %v656
        %2145 = vmatprep.subr.mxu0 %v673
        %2146 = vmatpush1.msra.mxu0 %v672
        %2147 = vmatprep.subr.mxu0 %v689
        %2148 = vmatpush1.msra.mxu0 %v688
        %2149 = vmatprep.subr.mxu0 %v705
        %2150 = vmatpush1.msra.mxu0 %v704
        %2151 = vmatprep.subr.mxu0 %v721
        %2152 = vmatpush1.msra.mxu0 %v720
        %2153 = vmatprep.subr.mxu0 %v737
        %2154 = vmatpush1.msra.mxu0 %v736
        %2155 = vmatprep.subr.mxu0 %v753
        %2156 = vmatpush1.msra.mxu0 %v752
        %2157 = vmatprep.subr.mxu0 %v769
        %2158 = vmatpush1.msra.mxu0 %v768
        %2159 = vmatprep.subr.mxu0 %v785
        %2160 = vmatpush1.msra.mxu0 %v784
        %2161 = vmatprep.subr.mxu0 %v801
        %2162 = vmatpush1.msra.mxu0 %v800
        %2163 = vmatprep.subr.mxu0 %v817
        %2164 = vmatpush1.msra.mxu0 %v816
        %2165 = vmatprep.subr.mxu0 %v833
        %2166 = vmatpush1.msra.mxu0 %v832
        %2167 = vmatprep.subr.mxu0 %v849
        %2168 = vmatpush1.msra.mxu0 %v848
        %2169 = vmatprep.mubr.f32.mxu0 %v861
        %2170 = vmatmul.mubr.f32.gmra.mrb[0].mxu0 %v860
        %v2171 = vpop.f32.mrb[0].mxu0
        %v2172 = vadd.f32 %v1608, %v2171
        %v2173 = vpop.f32.mrb[0].mxu0
        %v2174 = vadd.f32 %v1608, %v2173
        %2175 = vmatprep.mubr.f32.mxu0 %v863
        %2176 = vmatmul.mubr.f32.gmra.mrb[0].mxu0 %v862
        %v2177 = vpop.f32.mrb[0].mxu0
        %v2178 = vadd.f32 %v1613, %v2177
        %v2179 = vpop.f32.mrb[0].mxu0
        %v2180 = vadd.f32 %v1613, %v2179
        %2181 = vmatprep.mubr.f32.mxu0 %v865
        %2182 = vmatmul.mubr.f32.gmra.mrb[0].mxu0 %v864
        %v2183 = vpop.f32.mrb[0].mxu0
        %v2184 = vadd.f32 %v1618, %v2183
        %v2185 = vpop.f32.mrb[0].mxu0
        %v2186 = vadd.f32 %v1618, %v2185
        %2187 = vmatprep.mubr.f32.mxu0 %v867
        %2188 = vmatmul.mubr.f32.gmra.mrb[0].mxu0 %v866
        %v2189 = vpop.f32.mrb[0].mxu0
        %v2190 = vadd.f32 %v1623, %v2189
        %v2191 = vpop.f32.mrb[0].mxu0
        %v2192 = vadd.f32 %v1623, %v2191
        %2193 = vmatprep.mubr.f32.mxu0 %v869
        %2194 = vmatmul.mubr.f32.gmra.mrb[0].mxu0 %v868
        %v2195 = vpop.f32.mrb[0].mxu0
        %v2196 = vadd.f32 %v1628, %v2195
        %v2197 = vpop.f32.mrb[0].mxu0
        %v2198 = vadd.f32 %v1628, %v2197
        %2199 = vdwg.mxu0
        %2200 = vmatprep.subr.mxu0 %v355
        %2201 = vmatpush1.msra.mxu0 %v354
        %2202 = vmatprep.subr.mxu0 %v371
        %2203 = vmatpush1.msra.mxu0 %v370
        %2204 = vmatprep.subr.mxu0 %v387
        %2205 = vmatpush1.msra.mxu0 %v386
        %2206 = vmatprep.subr.mxu0 %v403
        %2207 = vmatpush1.msra.mxu0 %v402
        %2208 = vmatprep.subr.mxu0 %v419
        %2209 = vmatpush1.msra.mxu0 %v418
        %2210 = vmatprep.subr.mxu0 %v435
        %2211 = vmatpush1.msra.mxu0 %v434
        %2212 = vmatprep.subr.mxu0 %v451
        %2213 = vmatpush1.msra.mxu0 %v450
        %2214 = vmatprep.subr.mxu0 %v467
        %2215 = vmatpush1.msra.mxu0 %v466
        %2216 = vmatprep.subr.mxu0 %v483
        %2217 = vmatpush1.msra.mxu0 %v482
        %2218 = vmatprep.subr.mxu0 %v499
        %2219 = vmatpush1.msra.mxu0 %v498
        %2220 = vmatprep.subr.mxu0 %v515
        %2221 = vmatpush1.msra.mxu0 %v514
        %2222 = vmatprep.subr.mxu0 %v531
        %2223 = vmatpush1.msra.mxu0 %v530
        %2224 = vmatprep.subr.mxu0 %v547
        %2225 = vmatpush1.msra.mxu0 %v546
        %2226 = vmatprep.subr.mxu0 %v563
        %2227 = vmatpush1.msra.mxu0 %v562
        %2228 = vmatprep.subr.mxu0 %v579
        %2229 = vmatpush1.msra.mxu0 %v578
        %2230 = vmatprep.subr.mxu0 %v595
        %2231 = vmatpush1.msra.mxu0 %v594
        %2232 = vmatprep.subr.mxu0 %v611
        %2233 = vmatpush1.msra.mxu0 %v610
        %2234 = vmatprep.subr.mxu0 %v627
        %2235 = vmatpush1.msra.mxu0 %v626
        %2236 = vmatprep.subr.mxu0 %v643
        %2237 = vmatpush1.msra.mxu0 %v642
        %2238 = vmatprep.subr.mxu0 %v659
        %2239 = vmatpush1.msra.mxu0 %v658
        %2240 = vmatprep.subr.mxu0 %v675
        %2241 = vmatpush1.msra.mxu0 %v674
        %2242 = vmatprep.subr.mxu0 %v691
        %2243 = vmatpush1.msra.mxu0 %v690
        %2244 = vmatprep.subr.mxu0 %v707
        %2245 = vmatpush1.msra.mxu0 %v706
        %2246 = vmatprep.subr.mxu0 %v723
        %2247 = vmatpush1.msra.mxu0 %v722
        %2248 = vmatprep.subr.mxu0 %v739
        %2249 = vmatpush1.msra.mxu0 %v738
        %2250 = vmatprep.subr.mxu0 %v755
        %2251 = vmatpush1.msra.mxu0 %v754
        %2252 = vmatprep.subr.mxu0 %v771
        %2253 = vmatpush1.msra.mxu0 %v770
        %2254 = vmatprep.subr.mxu0 %v787
        %2255 = vmatpush1.msra.mxu0 %v786
        %2256 = vmatprep.subr.mxu0 %v803
        %2257 = vmatpush1.msra.mxu0 %v802
        %2258 = vmatprep.subr.mxu0 %v819
        %2259 = vmatpush1.msra.mxu0 %v818
        %2260 = vmatprep.subr.mxu0 %v835
        %2261 = vmatpush1.msra.mxu0 %v834
        %2262 = vmatprep.subr.mxu0 %v851
        %2263 = vmatpush1.msra.mxu0 %v850
        %2264 = vmatprep.mubr.f32.mxu0 %v861
        %2265 = vmatmul.mubr.f32.gmra.mrb[0].mxu0 %v860
        %v2266 = vpop.f32.mrb[0].mxu0
        %v2267 = vadd.f32 %v1608, %v2266
        %v2268 = vpop.f32.mrb[0].mxu0
        %v2269 = vadd.f32 %v1608, %v2268
        %2270 = vmatprep.mubr.f32.mxu0 %v863
        %2271 = vmatmul.mubr.f32.gmra.mrb[0].mxu0 %v862
        %v2272 = vpop.f32.mrb[0].mxu0
        %v2273 = vadd.f32 %v1613, %v2272
        %v2274 = vpop.f32.mrb[0].mxu0
        %v2275 = vadd.f32 %v1613, %v2274
        %2276 = vmatprep.mubr.f32.mxu0 %v865
        %2277 = vmatmul.mubr.f32.gmra.mrb[0].mxu0 %v864
        %v2278 = vpop.f32.mrb[0].mxu0
        %v2279 = vadd.f32 %v1618, %v2278
        %v2280 = vpop.f32.mrb[0].mxu0
        %v2281 = vadd.f32 %v1618, %v2280
        %2282 = vmatprep.mubr.f32.mxu0 %v867
        %2283 = vmatmul.mubr.f32.gmra.mrb[0].mxu0 %v866
        %v2284 = vpop.f32.mrb[0].mxu0
        %v2285 = vadd.f32 %v1623, %v2284
        %v2286 = vpop.f32.mrb[0].mxu0
        %v2287 = vadd.f32 %v1623, %v2286
        %2288 = vmatprep.mubr.f32.mxu0 %v869
        %2289 = vmatmul.mubr.f32.gmra.mrb[0].mxu0 %v868
        %v2290 = vpop.f32.mrb[0].mxu0
        %v2291 = vadd.f32 %v1628, %v2290
        %v2292 = vpop.f32.mrb[0].mxu0
        %v2293 = vadd.f32 %v1628, %v2292
        %2294 = vdwg.mxu0
        %2295 = vmatprep.subr.mxu0 %v357
        %2296 = vmatpush1.msra.mxu0 %v356
        %2297 = vmatprep.subr.mxu0 %v373
        %2298 = vmatpush1.msra.mxu0 %v372
        %2299 = vmatprep.subr.mxu0 %v389
        %2300 = vmatpush1.msra.mxu0 %v388
        %2301 = vmatprep.subr.mxu0 %v405
        %2302 = vmatpush1.msra.mxu0 %v404
        %2303 = vmatprep.subr.mxu0 %v421
        %2304 = vmatpush1.msra.mxu0 %v420
        %2305 = vmatprep.subr.mxu0 %v437
        %2306 = vmatpush1.msra.mxu0 %v436
        %2307 = vmatprep.subr.mxu0 %v453
        %2308 = vmatpush1.msra.mxu0 %v452
        %2309 = vmatprep.subr.mxu0 %v469
        %2310 = vmatpush1.msra.mxu0 %v468
        %2311 = vmatprep.subr.mxu0 %v485
        %2312 = vmatpush1.msra.mxu0 %v484
        %2313 = vmatprep.subr.mxu0 %v501
        %2314 = vmatpush1.msra.mxu0 %v500
        %2315 = vmatprep.subr.mxu0 %v517
        %2316 = vmatpush1.msra.mxu0 %v516
        %2317 = vmatprep.subr.mxu0 %v533
        %2318 = vmatpush1.msra.mxu0 %v532
        %2319 = vmatprep.subr.mxu0 %v549
        %2320 = vmatpush1.msra.mxu0 %v548
        %2321 = vmatprep.subr.mxu0 %v565
        %2322 = vmatpush1.msra.mxu0 %v564
        %2323 = vmatprep.subr.mxu0 %v581
        %2324 = vmatpush1.msra.mxu0 %v580
        %2325 = vmatprep.subr.mxu0 %v597
        %2326 = vmatpush1.msra.mxu0 %v596
        %2327 = vmatprep.subr.mxu0 %v613
        %2328 = vmatpush1.msra.mxu0 %v612
        %2329 = vmatprep.subr.mxu0 %v629
        %2330 = vmatpush1.msra.mxu0 %v628
        %2331 = vmatprep.subr.mxu0 %v645
        %2332 = vmatpush1.msra.mxu0 %v644
        %2333 = vmatprep.subr.mxu0 %v661
        %2334 = vmatpush1.msra.mxu0 %v660
        %2335 = vmatprep.subr.mxu0 %v677
        %2336 = vmatpush1.msra.mxu0 %v676
        %2337 = vmatprep.subr.mxu0 %v693
        %2338 = vmatpush1.msra.mxu0 %v692
        %2339 = vmatprep.subr.mxu0 %v709
        %2340 = vmatpush1.msra.mxu0 %v708
        %2341 = vmatprep.subr.mxu0 %v725
        %2342 = vmatpush1.msra.mxu0 %v724
        %2343 = vmatprep.subr.mxu0 %v741
        %2344 = vmatpush1.msra.mxu0 %v740
        %2345 = vmatprep.subr.mxu0 %v757
        %2346 = vmatpush1.msra.mxu0 %v756
        %2347 = vmatprep.subr.mxu0 %v773
        %2348 = vmatpush1.msra.mxu0 %v772
        %2349 = vmatprep.subr.mxu0 %v789
        %2350 = vmatpush1.msra.mxu0 %v788
        %2351 = vmatprep.subr.mxu0 %v805
        %2352 = vmatpush1.msra.mxu0 %v804
        %2353 = vmatprep.subr.mxu0 %v821
        %2354 = vmatpush1.msra.mxu0 %v820
        %2355 = vmatprep.subr.mxu0 %v837
        %2356 = vmatpush1.msra.mxu0 %v836
        %2357 = vmatprep.subr.mxu0 %v853
        %2358 = vmatpush1.msra.mxu0 %v852
        %2359 = vmatprep.mubr.f32.mxu0 %v861
        %2360 = vmatmul.mubr.f32.gmra.mrb[0].mxu0 %v860
        %v2361 = vpop.f32.mrb[0].mxu0
        %v2362 = vadd.f32 %v1608, %v2361
        %v2363 = vpop.f32.mrb[0].mxu0
        %v2364 = vadd.f32 %v1608, %v2363
        %2365 = vmatprep.mubr.f32.mxu0 %v863
        %2366 = vmatmul.mubr.f32.gmra.mrb[0].mxu0 %v862
        %v2367 = vpop.f32.mrb[0].mxu0
        %v2368 = vadd.f32 %v1613, %v2367
        %v2369 = vpop.f32.mrb[0].mxu0
        %v2370 = vadd.f32 %v1613, %v2369
        %2371 = vmatprep.mubr.f32.mxu0 %v865
        %2372 = vmatmul.mubr.f32.gmra.mrb[0].mxu0 %v864
        %v2373 = vpop.f32.mrb[0].mxu0
        %v2374 = vadd.f32 %v1618, %v2373
        %v2375 = vpop.f32.mrb[0].mxu0
        %v2376 = vadd.f32 %v1618, %v2375
        %2377 = vmatprep.mubr.f32.mxu0 %v867
        %2378 = vmatmul.mubr.f32.gmra.mrb[0].mxu0 %v866
        %v2379 = vpop.f32.mrb[0].mxu0
        %v2380 = vadd.f32 %v1623, %v2379
        %v2381 = vpop.f32.mrb[0].mxu0
        %v2382 = vadd.f32 %v1623, %v2381
        %2383 = vmatprep.mubr.f32.mxu0 %v869
        %2384 = vmatmul.mubr.f32.gmra.mrb[0].mxu0 %v868
        %v2385 = vpop.f32.mrb[0].mxu0
        %v2386 = vadd.f32 %v1628, %v2385
        %v2387 = vpop.f32.mrb[0].mxu0
        %v2388 = vadd.f32 %v1628, %v2387
        %2389 = vdwg.mxu0
        %2390 = vst [vmem:[%s326] sm:$0xff] %v1697
        %2391 = vst [vmem:[%s326 + $0x8] sm:$0xff] %v1699
        %2392 = vst [vmem:[%s326 + $0x10] sm:$0xff] %v1792
        %2393 = vst [vmem:[%s326 + $0x18] sm:$0xff] %v1794
        %2394 = vst [vmem:[%s326 + $0x20] sm:$0xff] %v1887
        %2395 = vst [vmem:[%s326 + $0x28] sm:$0xff] %v1889
        %2396 = vst [vmem:[%s326 + $0x30] sm:$0xff] %v1982
        %2397 = vst [vmem:[%s326 + $0x38] sm:$0xff] %v1984
        %2398 = vst [vmem:[%s326 + $0x40] sm:$0xff] %v2077
        %2399 = vst [vmem:[%s326 + $0x48] sm:$0xff] %v2079
        %2400 = vst [vmem:[%s326 + $0x50] sm:$0xff] %v2172
        %2401 = vst [vmem:[%s326 + $0x58] sm:$0xff] %v2174
        %2402 = vst [vmem:[%s326 + $0x60] sm:$0xff] %v2267
        %2403 = vst [vmem:[%s326 + $0x68] sm:$0xff] %v2269
        %2404 = vst [vmem:[%s326 + $0x70] sm:$0xff] %v2362
        %2405 = vst [vmem:[%s326 + $0x78] sm:$0xff] %v2364
        %2406 = vst [vmem:[%s326 + $0x80] sm:$0xff] %v1703
        %2407 = vst [vmem:[%s326 + $0x88] sm:$0xff] %v1705
        %2408 = vst [vmem:[%s326 + $0x90] sm:$0xff] %v1798
        %2409 = vst [vmem:[%s326 + $0x98] sm:$0xff] %v1800
        %2410 = vst [vmem:[%s326 + $0xa0] sm:$0xff] %v1893
        %2411 = vst [vmem:[%s326 + $0xa8] sm:$0xff] %v1895
        %2412 = vst [vmem:[%s326 + $0xb0] sm:$0xff] %v1988
        %2413 = vst [vmem:[%s326 + $0xb8] sm:$0xff] %v1990
        %2414 = vst [vmem:[%s326 + $0xc0] sm:$0xff] %v2083
        %2415 = vst [vmem:[%s326 + $0xc8] sm:$0xff] %v2085
        %2416 = vst [vmem:[%s326 + $0xd0] sm:$0xff] %v2178
        %2417 = vst [vmem:[%s326 + $0xd8] sm:$0xff] %v2180
        %2418 = vst [vmem:[%s326 + $0xe0] sm:$0xff] %v2273
        %2419 = vst [vmem:[%s326 + $0xe8] sm:$0xff] %v2275
        %2420 = vst [vmem:[%s326 + $0xf0] sm:$0xff] %v2368
        %2421 = vst [vmem:[%s326 + $0xf8] sm:$0xff] %v2370
        %2422 = vst [vmem:[%s326 + $0x100] sm:$0xff] %v1709
        %2423 = vst [vmem:[%s326 + $0x108] sm:$0xff] %v1711
        %2424 = vst [vmem:[%s326 + $0x110] sm:$0xff] %v1804
        %2425 = vst [vmem:[%s326 + $0x118] sm:$0xff] %v1806
        %2426 = vst [vmem:[%s326 + $0x120] sm:$0xff] %v1899
        %2427 = vst [vmem:[%s326 + $0x128] sm:$0xff] %v1901
        %2428 = vst [vmem:[%s326 + $0x130] sm:$0xff] %v1994
        %2429 = vst [vmem:[%s326 + $0x138] sm:$0xff] %v1996
        %2430 = vst [vmem:[%s326 + $0x140] sm:$0xff] %v2089
        %2431 = vst [vmem:[%s326 + $0x148] sm:$0xff] %v2091
        %2432 = vst [vmem:[%s326 + $0x150] sm:$0xff] %v2184
        %2433 = vst [vmem:[%s326 + $0x158] sm:$0xff] %v2186
        %2434 = vst [vmem:[%s326 + $0x160] sm:$0xff] %v2279
        %2435 = vst [vmem:[%s326 + $0x168] sm:$0xff] %v2281
        %2436 = vst [vmem:[%s326 + $0x170] sm:$0xff] %v2374
        %2437 = vst [vmem:[%s326 + $0x178] sm:$0xff] %v2376
        %2438 = vst [vmem:[%s326 + $0x180] sm:$0xff] %v1715
        %2439 = vst [vmem:[%s326 + $0x188] sm:$0xff] %v1717
        %2440 = vst [vmem:[%s326 + $0x190] sm:$0xff] %v1810
        %2441 = vst [vmem:[%s326 + $0x198] sm:$0xff] %v1812
        %2442 = vst [vmem:[%s326 + $0x1a0] sm:$0xff] %v1905
        %2443 = vst [vmem:[%s326 + $0x1a8] sm:$0xff] %v1907
        %2444 = vst [vmem:[%s326 + $0x1b0] sm:$0xff] %v2000
        %2445 = vst [vmem:[%s326 + $0x1b8] sm:$0xff] %v2002
        %2446 = vst [vmem:[%s326 + $0x1c0] sm:$0xff] %v2095
        %2447 = vst [vmem:[%s326 + $0x1c8] sm:$0xff] %v2097
        %2448 = vst [vmem:[%s326 + $0x1d0] sm:$0xff] %v2190
        %2449 = vst [vmem:[%s326 + $0x1d8] sm:$0xff] %v2192
        %2450 = vst [vmem:[%s326 + $0x1e0] sm:$0xff] %v2285
        %2451 = vst [vmem:[%s326 + $0x1e8] sm:$0xff] %v2287
        %2452 = vst [vmem:[%s326 + $0x1f0] sm:$0xff] %v2380
        %2453 = vst [vmem:[%s326 + $0x1f8] sm:$0xff] %v2382
        %2454 = vst [vmem:[%s326 + $0x200] sm:$0xf] %v1721
        %2455 = vst [vmem:[%s326 + $0x208] sm:$0xf] %v1723
        %2456 = vst [vmem:[%s326 + $0x210] sm:$0xf] %v1816
        %2457 = vst [vmem:[%s326 + $0x218] sm:$0xf] %v1818
        %2458 = vst [vmem:[%s326 + $0x220] sm:$0xf] %v1911
        %2459 = vst [vmem:[%s326 + $0x228] sm:$0xf] %v1913
        %2460 = vst [vmem:[%s326 + $0x230] sm:$0xf] %v2006
        %2461 = vst [vmem:[%s326 + $0x238] sm:$0xf] %v2008
        %2462 = vst [vmem:[%s326 + $0x240] sm:$0xf] %v2101
        %2463 = vst [vmem:[%s326 + $0x248] sm:$0xf] %v2103
        %2464 = vst [vmem:[%s326 + $0x250] sm:$0xf] %v2196
        %2465 = vst [vmem:[%s326 + $0x258] sm:$0xf] %v2198
        %2466 = vst [vmem:[%s326 + $0x260] sm:$0xf] %v2291
        %2467 = vst [vmem:[%s326 + $0x268] sm:$0xf] %v2293
        %2468 = vst [vmem:[%s326 + $0x270] sm:$0xf] %v2386
        %2469 = vst [vmem:[%s326 + $0x278] sm:$0xf] %v2388
        %s2470 = sand.u32 %s154, 1
        %s2471 = sand.u32 %s154, 1
        %s2472 = smul.addr %s2471, 384
        %s2473 = scalar_lea.vmem [#allocation7], %s2472
        %s2474 = sand.u32 %s182, 1
        %s2475 = sand.u32 %s182, 1
        %s2476 = smul.addr %s2475, 640
        %s2477 = scalar_lea.vmem [#allocation8], %s2476
        // Predicated region
        $region53: #{tpu_custom_call.1} parent=39 // pred_check
          %p2478 = pneg %p164
        $region54: #{tpu_custom_call.1} parent=39 // pred_check_branch
          %2480 = sbr.rel (%p2478) target = $region56
        $region55: #{tpu_custom_call.1} parent=39 // pred_region
          %s2481 = smul.u32 16, %s25
          %s2482 = ssub.s32 18, %s2481
          %p2483 = scmp.lt.s32.totalorder %s2482, 16
          %s2484 = scalar_select %p2483, %s2482, 16
          %s2485 = smul.u32 384, %s2484
          %p2486 = scmp.ne.s32.totalorder 0, %s2485
          %s2487 = smul.addr %s24, 54
          %s2488 = sadd.s32 %s2481, %s2487
          %s2489 = smul.addr %s2488, 8
          %s2490 = scalar_lea.vmem %s5, %s2489
          %s2491 = smul.u32 %s2484, 8
          // Predicated region
          $region57: #{tpu_custom_call.1} parent=55 // pred_check
            %p2492 = pneg %p2486
          $region58: #{tpu_custom_call.1} parent=55 // pred_check_branch
            %2494 = sbr.rel (%p2492) target = $region60
          $region59: #{tpu_custom_call.1} parent=55 // pred_region
            %p2495 = scmp.lt.u32.totalorder %s2491, 8
            %p2496 = pneg %p2495
            // Predicated region
            $region61: #{tpu_custom_call.1} parent=59 // pred_check
              _
            $region62: #{tpu_custom_call.1} parent=59 // pred_check_branch
              %2498 = sbr.rel (%p2495) target = $region64
            $region63: #{tpu_custom_call.1} parent=59 // pred_region
              %s2517 = sand.u32 %s2491, 7
              %p2518 = scmp.eq.s32.totalorder %s2517, 0
              // Predicated region
              $region76: #{tpu_custom_call.1} parent=63 // pred_check
                %p2519 = pneg %p2518
              $region77: #{tpu_custom_call.1} parent=63 // pred_check_branch
                %2521 = sbr.rel (%p2519) target = $region79
              $region78: #{tpu_custom_call.1} parent=63 // pred_region
                %s2522 = sshrl.u32 %s2491, 3
                %s2523 = sdiv.u32.pop %s2522, 24
                %s2524 = srem.u32.pop %s2522, 24
                // While loop
                $region80: #{tpu_custom_call.1} parent=78 // loop_pre_header
                  _
                $region81: #{tpu_custom_call.1} parent=78 // loop_header
                  %s2528 = sphi 0, %s2530
                  %p2529 = scmp.ge.s32.totalorder %s2528, %s2523
                  %s2533 = sphi 0, %s2682
                  %s2534 = sphi %s2473, %s2685
                  %s2535 = sphi %s2490, %s2686
                $region82: #{tpu_custom_call.1} parent=78 // loop_header_branch
                  %2532 = sbr.rel (%p2529) target = $region86
                $region83: #{tpu_custom_call.1} parent=78 // loop_body
                  %v2536 = vld [vmem:[%s2534] sm:$0xff]
                  %2537 = vst [vmem:[%s2535] sm:$0xff] %v2536
                  %v2538 = vld [vmem:[%s2534 + $0x8] sm:$0xff]
                  %2539 = vst [vmem:[%s2535 + $0x8] sm:$0xff] %v2538
                  %v2540 = vld [vmem:[%s2534 + $0x10] sm:$0xff]
                  %2541 = vst [vmem:[%s2535 + $0x10] sm:$0xff] %v2540
                  %v2542 = vld [vmem:[%s2534 + $0x18] sm:$0xff]
                  %2543 = vst [vmem:[%s2535 + $0x18] sm:$0xff] %v2542
                  %v2544 = vld [vmem:[%s2534 + $0x20] sm:$0xff]
                  %2545 = vst [vmem:[%s2535 + $0x20] sm:$0xff] %v2544
                  %v2546 = vld [vmem:[%s2534 + $0x28] sm:$0xff]
                  %2547 = vst [vmem:[%s2535 + $0x28] sm:$0xff] %v2546
                  %v2548 = vld [vmem:[%s2534 + $0x30] sm:$0xff]
                  %2549 = vst [vmem:[%s2535 + $0x30] sm:$0xff] %v2548
                  %v2550 = vld [vmem:[%s2534 + $0x38] sm:$0xff]
                  %2551 = vst [vmem:[%s2535 + $0x38] sm:$0xff] %v2550
                  %v2552 = vld [vmem:[%s2534 + $0x40] sm:$0xff]
                  %2553 = vst [vmem:[%s2535 + $0x40] sm:$0xff] %v2552
                  %v2554 = vld [vmem:[%s2534 + $0x48] sm:$0xff]
                  %2555 = vst [vmem:[%s2535 + $0x48] sm:$0xff] %v2554
                  %v2556 = vld [vmem:[%s2534 + $0x50] sm:$0xff]
                  %2557 = vst [vmem:[%s2535 + $0x50] sm:$0xff] %v2556
                  %v2558 = vld [vmem:[%s2534 + $0x58] sm:$0xff]
                  %2559 = vst [vmem:[%s2535 + $0x58] sm:$0xff] %v2558
                  %v2560 = vld [vmem:[%s2534 + $0x60] sm:$0xff]
                  %2561 = vst [vmem:[%s2535 + $0x60] sm:$0xff] %v2560
                  %v2562 = vld [vmem:[%s2534 + $0x68] sm:$0xff]
                  %2563 = vst [vmem:[%s2535 + $0x68] sm:$0xff] %v2562
                  %v2564 = vld [vmem:[%s2534 + $0x70] sm:$0xff]
                  %2565 = vst [vmem:[%s2535 + $0x70] sm:$0xff] %v2564
                  %v2566 = vld [vmem:[%s2534 + $0x78] sm:$0xff]
                  %2567 = vst [vmem:[%s2535 + $0x78] sm:$0xff] %v2566
                  %v2568 = vld [vmem:[%s2534 + $0x80] sm:$0xff]
                  %2569 = vst [vmem:[%s2535 + $0x80] sm:$0xff] %v2568
                  %v2570 = vld [vmem:[%s2534 + $0x88] sm:$0xff]
                  %2571 = vst [vmem:[%s2535 + $0x88] sm:$0xff] %v2570
                  %v2572 = vld [vmem:[%s2534 + $0x90] sm:$0xff]
                  %2573 = vst [vmem:[%s2535 + $0x90] sm:$0xff] %v2572
                  %v2574 = vld [vmem:[%s2534 + $0x98] sm:$0xff]
                  %2575 = vst [vmem:[%s2535 + $0x98] sm:$0xff] %v2574
                  %v2576 = vld [vmem:[%s2534 + $0xa0] sm:$0xff]
                  %2577 = vst [vmem:[%s2535 + $0xa0] sm:$0xff] %v2576
                  %v2578 = vld [vmem:[%s2534 + $0xa8] sm:$0xff]
                  %2579 = vst [vmem:[%s2535 + $0xa8] sm:$0xff] %v2578
                  %v2580 = vld [vmem:[%s2534 + $0xb0] sm:$0xff]
                  %2581 = vst [vmem:[%s2535 + $0xb0] sm:$0xff] %v2580
                  %v2582 = vld [vmem:[%s2534 + $0xb8] sm:$0xff]
                  %2583 = vst [vmem:[%s2535 + $0xb8] sm:$0xff] %v2582
                  %v2584 = vld [vmem:[%s2534 + $0x80] sm:$0xff]
                  %2585 = vst [vmem:[%s2535 + $0x90] sm:$0xff] %v2584
                  %v2586 = vld [vmem:[%s2534 + $0x88] sm:$0xff]
                  %2587 = vst [vmem:[%s2535 + $0x98] sm:$0xff] %v2586
                  %v2588 = vld [vmem:[%s2534 + $0x90] sm:$0xff]
                  %2589 = vst [vmem:[%s2535 + $0xa0] sm:$0xff] %v2588
                  %v2590 = vld [vmem:[%s2534 + $0x98] sm:$0xff]
                  %2591 = vst [vmem:[%s2535 + $0xa8] sm:$0xff] %v2590
                  %v2592 = vld [vmem:[%s2534 + $0xa0] sm:$0xff]
                  %2593 = vst [vmem:[%s2535 + $0xb0] sm:$0xff] %v2592
                  %v2594 = vld [vmem:[%s2534 + $0xa8] sm:$0xff]
                  %2595 = vst [vmem:[%s2535 + $0xb8] sm:$0xff] %v2594
                  %v2596 = vld [vmem:[%s2534 + $0xb0] sm:$0xff]
                  %2597 = vst [vmem:[%s2535 + $0xc0] sm:$0xff] %v2596
                  %v2598 = vld [vmem:[%s2534 + $0xb8] sm:$0xff]
                  %2599 = vst [vmem:[%s2535 + $0xc8] sm:$0xff] %v2598
                  %v2600 = vld [vmem:[%s2534 + $0xc0] sm:$0xff]
                  %2601 = vst [vmem:[%s2535 + $0xd0] sm:$0xff] %v2600
                  %v2602 = vld [vmem:[%s2534 + $0xc8] sm:$0xff]
                  %2603 = vst [vmem:[%s2535 + $0xd8] sm:$0xff] %v2602
                  %v2604 = vld [vmem:[%s2534 + $0xd0] sm:$0xff]
                  %2605 = vst [vmem:[%s2535 + $0xe0] sm:$0xff] %v2604
                  %v2606 = vld [vmem:[%s2534 + $0xd8] sm:$0xff]
                  %2607 = vst [vmem:[%s2535 + $0xe8] sm:$0xff] %v2606
                  %v2608 = vld [vmem:[%s2534 + $0xe0] sm:$0xff]
                  %2609 = vst [vmem:[%s2535 + $0xf0] sm:$0xff] %v2608
                  %v2610 = vld [vmem:[%s2534 + $0xe8] sm:$0xff]
                  %2611 = vst [vmem:[%s2535 + $0xf8] sm:$0xff] %v2610
                  %v2612 = vld [vmem:[%s2534 + $0xf0] sm:$0xff]
                  %2613 = vst [vmem:[%s2535 + $0x100] sm:$0xff] %v2612
                  %v2614 = vld [vmem:[%s2534 + $0xf8] sm:$0xff]
                  %2615 = vst [vmem:[%s2535 + $0x108] sm:$0xff] %v2614
                  %v2616 = vld [vmem:[%s2534 + $0x100] sm:$0xff]
                  %2617 = vst [vmem:[%s2535 + $0x110] sm:$0xff] %v2616
                  %v2618 = vld [vmem:[%s2534 + $0x108] sm:$0xff]
                  %2619 = vst [vmem:[%s2535 + $0x118] sm:$0xff] %v2618
                  %v2620 = vld [vmem:[%s2534 + $0x110] sm:$0xff]
                  %2621 = vst [vmem:[%s2535 + $0x120] sm:$0xff] %v2620
                  %v2622 = vld [vmem:[%s2534 + $0x118] sm:$0xff]
                  %2623 = vst [vmem:[%s2535 + $0x128] sm:$0xff] %v2622
                  %v2624 = vld [vmem:[%s2534 + $0x120] sm:$0xff]
                  %2625 = vst [vmem:[%s2535 + $0x130] sm:$0xff] %v2624
                  %v2626 = vld [vmem:[%s2534 + $0x128] sm:$0xff]
                  %2627 = vst [vmem:[%s2535 + $0x138] sm:$0xff] %v2626
                  %v2628 = vld [vmem:[%s2534 + $0x130] sm:$0xff]
                  %2629 = vst [vmem:[%s2535 + $0x140] sm:$0xff] %v2628
                  %v2630 = vld [vmem:[%s2534 + $0x138] sm:$0xff]
                  %2631 = vst [vmem:[%s2535 + $0x148] sm:$0xff] %v2630
                  %v2632 = vld [vmem:[%s2534 + $0x100] sm:$0xff]
                  %2633 = vst [vmem:[%s2535 + $0x120] sm:$0xff] %v2632
                  %v2634 = vld [vmem:[%s2534 + $0x108] sm:$0xff]
                  %2635 = vst [vmem:[%s2535 + $0x128] sm:$0xff] %v2634
                  %v2636 = vld [vmem:[%s2534 + $0x110] sm:$0xff]
                  %2637 = vst [vmem:[%s2535 + $0x130] sm:$0xff] %v2636
                  %v2638 = vld [vmem:[%s2534 + $0x118] sm:$0xff]
                  %2639 = vst [vmem:[%s2535 + $0x138] sm:$0xff] %v2638
                  %v2640 = vld [vmem:[%s2534 + $0x120] sm:$0xff]
                  %2641 = vst [vmem:[%s2535 + $0x140] sm:$0xff] %v2640
                  %v2642 = vld [vmem:[%s2534 + $0x128] sm:$0xff]
                  %2643 = vst [vmem:[%s2535 + $0x148] sm:$0xff] %v2642
                  %v2644 = vld [vmem:[%s2534 + $0x130] sm:$0xff]
                  %2645 = vst [vmem:[%s2535 + $0x150] sm:$0xff] %v2644
                  %v2646 = vld [vmem:[%s2534 + $0x138] sm:$0xff]
                  %2647 = vst [vmem:[%s2535 + $0x158] sm:$0xff] %v2646
                  %v2648 = vld [vmem:[%s2534 + $0x140] sm:$0xff]
                  %2649 = vst [vmem:[%s2535 + $0x160] sm:$0xff] %v2648
                  %v2650 = vld [vmem:[%s2534 + $0x148] sm:$0xff]
                  %2651 = vst [vmem:[%s2535 + $0x168] sm:$0xff] %v2650
                  %v2652 = vld [vmem:[%s2534 + $0x150] sm:$0xff]
                  %2653 = vst [vmem:[%s2535 + $0x170] sm:$0xff] %v2652
                  %v2654 = vld [vmem:[%s2534 + $0x158] sm:$0xff]
                  %2655 = vst [vmem:[%s2535 + $0x178] sm:$0xff] %v2654
                  %v2656 = vld [vmem:[%s2534 + $0x160] sm:$0xff]
                  %2657 = vst [vmem:[%s2535 + $0x180] sm:$0xff] %v2656
                  %v2658 = vld [vmem:[%s2534 + $0x168] sm:$0xff]
                  %2659 = vst [vmem:[%s2535 + $0x188] sm:$0xff] %v2658
                  %v2660 = vld [vmem:[%s2534 + $0x170] sm:$0xff]
                  %2661 = vst [vmem:[%s2535 + $0x190] sm:$0xff] %v2660
                  %v2662 = vld [vmem:[%s2534 + $0x178] sm:$0xff]
                  %2663 = vst [vmem:[%s2535 + $0x198] sm:$0xff] %v2662
                  %v2664 = vld [vmem:[%s2534 + $0x180] sm:$0xff]
                  %2665 = vst [vmem:[%s2535 + $0x1a0] sm:$0xff] %v2664
                  %v2666 = vld [vmem:[%s2534 + $0x188] sm:$0xff]
                  %2667 = vst [vmem:[%s2535 + $0x1a8] sm:$0xff] %v2666
                  %v2668 = vld [vmem:[%s2534 + $0x190] sm:$0xff]
                  %2669 = vst [vmem:[%s2535 + $0x1b0] sm:$0xff] %v2668
                  %v2670 = vld [vmem:[%s2534 + $0x198] sm:$0xff]
                  %2671 = vst [vmem:[%s2535 + $0x1b8] sm:$0xff] %v2670
                  %v2672 = vld [vmem:[%s2534 + $0x1a0] sm:$0xff]
                  %2673 = vst [vmem:[%s2535 + $0x1c0] sm:$0xff] %v2672
                  %v2674 = vld [vmem:[%s2534 + $0x1a8] sm:$0xff]
                  %2675 = vst [vmem:[%s2535 + $0x1c8] sm:$0xff] %v2674
                  %v2676 = vld [vmem:[%s2534 + $0x1b0] sm:$0xff]
                  %2677 = vst [vmem:[%s2535 + $0x1d0] sm:$0xff] %v2676
                  %v2678 = vld [vmem:[%s2534 + $0x1b8] sm:$0xff]
                  %2679 = vst [vmem:[%s2535 + $0x1d8] sm:$0xff] %v2678
                  %s2680 = sadd.s32 1, %s2533
                  %p2681 = scmp.ge.s32.totalorder %s2680, %s2523
                  %s2682 = scalar_select %p2681, 0, %s2680
                  %s2683 = smul.u32 %s2682, 192
                  %s2684 = smul.u32 %s2682, 192
                  %s2685 = scalar_lea.vmem %s2473, %s2683 [#allocation7]
                  %s2686 = scalar_lea.vmem %s2490, %s2684
                $region84: #{tpu_custom_call.1} parent=78 // loop_footer
                  %s2530 = sadd.s32 %s2528, 1
                $region85: #{tpu_custom_call.1} parent=78 // loop_footer_branch
                  %2527 = sbr.rel target = $region81
                $region86: #{tpu_custom_call.1} parent=78 // loop_exit
                  _
                %s2687 = sdiv.u32.pop %s2522, 24
                %s2688 = srem.u32.pop %s2522, 24
                %s2689 = smul.u32 %s2687, 24
                %s2690 = smul.u32 128, %s2689
                %s2691 = sshra.s32 %s2690, 4
                %s2692 = scalar_lea.vmem %s2473, %s2691 [#allocation7]
                %s2693 = smul.u32 128, %s2689
                %s2694 = sshra.s32 %s2693, 4
                %s2695 = scalar_lea.vmem %s2490, %s2694
                // While loop
                $region87: #{tpu_custom_call.1} parent=78 // loop_pre_header
                  _
                $region88: #{tpu_custom_call.1} parent=78 // loop_header
                  %s2699 = sphi 0, %s2701
                  %p2700 = scmp.ge.s32.totalorder %s2699, %s2688
                  %s2704 = sphi 0, %s2715
                  %s2705 = sphi %s2692, %s2718
                  %s2706 = sphi %s2695, %s2719
                $region89: #{tpu_custom_call.1} parent=78 // loop_header_branch
                  %2703 = sbr.rel (%p2700) target = $region93
                $region90: #{tpu_custom_call.1} parent=78 // loop_body
                  %v2707 = vld [vmem:[%s2705] sm:$0xff]
                  %2708 = vst [vmem:[%s2706] sm:$0xff] %v2707
                  %v2709 = vld [vmem:[%s2705 + $0x80] sm:$0xff]
                  %2710 = vst [vmem:[%s2706 + $0x90] sm:$0xff] %v2709
                  %v2711 = vld [vmem:[%s2705 + $0x100] sm:$0xff]
                  %2712 = vst [vmem:[%s2706 + $0x120] sm:$0xff] %v2711
                  %s2713 = sadd.s32 1, %s2704
                  %p2714 = scmp.ge.s32.totalorder %s2713, %s2688
                  %s2715 = scalar_select %p2714, 0, %s2713
                  %s2716 = smul.u32 %s2715, 8
                  %s2717 = smul.u32 %s2715, 8
                  %s2718 = scalar_lea.vmem %s2692, %s2716 [#allocation7]
                  %s2719 = scalar_lea.vmem %s2695, %s2717
                $region91: #{tpu_custom_call.1} parent=78 // loop_footer
                  %s2701 = sadd.s32 %s2699, 1
                $region92: #{tpu_custom_call.1} parent=78 // loop_footer_branch
                  %2698 = sbr.rel target = $region88
                $region93: #{tpu_custom_call.1} parent=78 // loop_exit
                  _
              $region79: #{tpu_custom_call.1} parent=63 // pred_fallthru
                _
              %p2720 = pneg %p2518
              // Predicated region
              $region94: #{tpu_custom_call.1} parent=63 // pred_check
                _
              $region95: #{tpu_custom_call.1} parent=63 // pred_check_branch
                %2722 = sbr.rel (%p2518) target = $region97
              $region96: #{tpu_custom_call.1} parent=63 // pred_region
                %s2723 = sand.u32 %s2491, 7
                %s2724 = ssub.s32 %s2491, %s2723
                %s2725 = scalar_lea.vmem %s2473, %s2724 [#allocation7]
                %s2726 = ssub.s32 %s2491, %s2723
                %s2727 = scalar_lea.vmem %s2490, %s2726
                %s2728 = sshrl.u32 %s2491, 3
                %s2729 = sdiv.u32.pop %s2728, 24
                %s2730 = srem.u32.pop %s2728, 24
                // While loop
                $region98: #{tpu_custom_call.1} parent=96 // loop_pre_header
                  _
                $region99: #{tpu_custom_call.1} parent=96 // loop_header
                  %s2734 = sphi 0, %s2736
                  %p2735 = scmp.ge.s32.totalorder %s2734, %s2729
                  %s2739 = sphi 0, %s2888
                  %s2740 = sphi %s2473, %s2891
                  %s2741 = sphi %s2490, %s2892
                $region100: #{tpu_custom_call.1} parent=96 // loop_header_branch
                  %2738 = sbr.rel (%p2735) target = $region104
                $region101: #{tpu_custom_call.1} parent=96 // loop_body
                  %v2742 = vld [vmem:[%s2740] sm:$0xff]
                  %2743 = vst [vmem:[%s2741] sm:$0xff] %v2742
                  %v2744 = vld [vmem:[%s2740 + $0x8] sm:$0xff]
                  %2745 = vst [vmem:[%s2741 + $0x8] sm:$0xff] %v2744
                  %v2746 = vld [vmem:[%s2740 + $0x10] sm:$0xff]
                  %2747 = vst [vmem:[%s2741 + $0x10] sm:$0xff] %v2746
                  %v2748 = vld [vmem:[%s2740 + $0x18] sm:$0xff]
                  %2749 = vst [vmem:[%s2741 + $0x18] sm:$0xff] %v2748
                  %v2750 = vld [vmem:[%s2740 + $0x20] sm:$0xff]
                  %2751 = vst [vmem:[%s2741 + $0x20] sm:$0xff] %v2750
                  %v2752 = vld [vmem:[%s2740 + $0x28] sm:$0xff]
                  %2753 = vst [vmem:[%s2741 + $0x28] sm:$0xff] %v2752
                  %v2754 = vld [vmem:[%s2740 + $0x30] sm:$0xff]
                  %2755 = vst [vmem:[%s2741 + $0x30] sm:$0xff] %v2754
                  %v2756 = vld [vmem:[%s2740 + $0x38] sm:$0xff]
                  %2757 = vst [vmem:[%s2741 + $0x38] sm:$0xff] %v2756
                  %v2758 = vld [vmem:[%s2740 + $0x40] sm:$0xff]
                  %2759 = vst [vmem:[%s2741 + $0x40] sm:$0xff] %v2758
                  %v2760 = vld [vmem:[%s2740 + $0x48] sm:$0xff]
                  %2761 = vst [vmem:[%s2741 + $0x48] sm:$0xff] %v2760
                  %v2762 = vld [vmem:[%s2740 + $0x50] sm:$0xff]
                  %2763 = vst [vmem:[%s2741 + $0x50] sm:$0xff] %v2762
                  %v2764 = vld [vmem:[%s2740 + $0x58] sm:$0xff]
                  %2765 = vst [vmem:[%s2741 + $0x58] sm:$0xff] %v2764
                  %v2766 = vld [vmem:[%s2740 + $0x60] sm:$0xff]
                  %2767 = vst [vmem:[%s2741 + $0x60] sm:$0xff] %v2766
                  %v2768 = vld [vmem:[%s2740 + $0x68] sm:$0xff]
                  %2769 = vst [vmem:[%s2741 + $0x68] sm:$0xff] %v2768
                  %v2770 = vld [vmem:[%s2740 + $0x70] sm:$0xff]
                  %2771 = vst [vmem:[%s2741 + $0x70] sm:$0xff] %v2770
                  %v2772 = vld [vmem:[%s2740 + $0x78] sm:$0xff]
                  %2773 = vst [vmem:[%s2741 + $0x78] sm:$0xff] %v2772
                  %v2774 = vld [vmem:[%s2740 + $0x80] sm:$0xff]
                  %2775 = vst [vmem:[%s2741 + $0x80] sm:$0xff] %v2774
                  %v2776 = vld [vmem:[%s2740 + $0x88] sm:$0xff]
                  %2777 = vst [vmem:[%s2741 + $0x88] sm:$0xff] %v2776
                  %v2778 = vld [vmem:[%s2740 + $0x90] sm:$0xff]
                  %2779 = vst [vmem:[%s2741 + $0x90] sm:$0xff] %v2778
                  %v2780 = vld [vmem:[%s2740 + $0x98] sm:$0xff]
                  %2781 = vst [vmem:[%s2741 + $0x98] sm:$0xff] %v2780
                  %v2782 = vld [vmem:[%s2740 + $0xa0] sm:$0xff]
                  %2783 = vst [vmem:[%s2741 + $0xa0] sm:$0xff] %v2782
                  %v2784 = vld [vmem:[%s2740 + $0xa8] sm:$0xff]
                  %2785 = vst [vmem:[%s2741 + $0xa8] sm:$0xff] %v2784
                  %v2786 = vld [vmem:[%s2740 + $0xb0] sm:$0xff]
                  %2787 = vst [vmem:[%s2741 + $0xb0] sm:$0xff] %v2786
                  %v2788 = vld [vmem:[%s2740 + $0xb8] sm:$0xff]
                  %2789 = vst [vmem:[%s2741 + $0xb8] sm:$0xff] %v2788
                  %v2790 = vld [vmem:[%s2740 + $0x80] sm:$0xff]
                  %2791 = vst [vmem:[%s2741 + $0x90] sm:$0xff] %v2790
                  %v2792 = vld [vmem:[%s2740 + $0x88] sm:$0xff]
                  %2793 = vst [vmem:[%s2741 + $0x98] sm:$0xff] %v2792
                  %v2794 = vld [vmem:[%s2740 + $0x90] sm:$0xff]
                  %2795 = vst [vmem:[%s2741 + $0xa0] sm:$0xff] %v2794
                  %v2796 = vld [vmem:[%s2740 + $0x98] sm:$0xff]
                  %2797 = vst [vmem:[%s2741 + $0xa8] sm:$0xff] %v2796
                  %v2798 = vld [vmem:[%s2740 + $0xa0] sm:$0xff]
                  %2799 = vst [vmem:[%s2741 + $0xb0] sm:$0xff] %v2798
                  %v2800 = vld [vmem:[%s2740 + $0xa8] sm:$0xff]
                  %2801 = vst [vmem:[%s2741 + $0xb8] sm:$0xff] %v2800
                  %v2802 = vld [vmem:[%s2740 + $0xb0] sm:$0xff]
                  %2803 = vst [vmem:[%s2741 + $0xc0] sm:$0xff] %v2802
                  %v2804 = vld [vmem:[%s2740 + $0xb8] sm:$0xff]
                  %2805 = vst [vmem:[%s2741 + $0xc8] sm:$0xff] %v2804
                  %v2806 = vld [vmem:[%s2740 + $0xc0] sm:$0xff]
                  %2807 = vst [vmem:[%s2741 + $0xd0] sm:$0xff] %v2806
                  %v2808 = vld [vmem:[%s2740 + $0xc8] sm:$0xff]
                  %2809 = vst [vmem:[%s2741 + $0xd8] sm:$0xff] %v2808
                  %v2810 = vld [vmem:[%s2740 + $0xd0] sm:$0xff]
                  %2811 = vst [vmem:[%s2741 + $0xe0] sm:$0xff] %v2810
                  %v2812 = vld [vmem:[%s2740 + $0xd8] sm:$0xff]
                  %2813 = vst [vmem:[%s2741 + $0xe8] sm:$0xff] %v2812
                  %v2814 = vld [vmem:[%s2740 + $0xe0] sm:$0xff]
                  %2815 = vst [vmem:[%s2741 + $0xf0] sm:$0xff] %v2814
                  %v2816 = vld [vmem:[%s2740 + $0xe8] sm:$0xff]
                  %2817 = vst [vmem:[%s2741 + $0xf8] sm:$0xff] %v2816
                  %v2818 = vld [vmem:[%s2740 + $0xf0] sm:$0xff]
                  %2819 = vst [vmem:[%s2741 + $0x100] sm:$0xff] %v2818
                  %v2820 = vld [vmem:[%s2740 + $0xf8] sm:$0xff]
                  %2821 = vst [vmem:[%s2741 + $0x108] sm:$0xff] %v2820
                  %v2822 = vld [vmem:[%s2740 + $0x100] sm:$0xff]
                  %2823 = vst [vmem:[%s2741 + $0x110] sm:$0xff] %v2822
                  %v2824 = vld [vmem:[%s2740 + $0x108] sm:$0xff]
                  %2825 = vst [vmem:[%s2741 + $0x118] sm:$0xff] %v2824
                  %v2826 = vld [vmem:[%s2740 + $0x110] sm:$0xff]
                  %2827 = vst [vmem:[%s2741 + $0x120] sm:$0xff] %v2826
                  %v2828 = vld [vmem:[%s2740 + $0x118] sm:$0xff]
                  %2829 = vst [vmem:[%s2741 + $0x128] sm:$0xff] %v2828
                  %v2830 = vld [vmem:[%s2740 + $0x120] sm:$0xff]
                  %2831 = vst [vmem:[%s2741 + $0x130] sm:$0xff] %v2830
                  %v2832 = vld [vmem:[%s2740 + $0x128] sm:$0xff]
                  %2833 = vst [vmem:[%s2741 + $0x138] sm:$0xff] %v2832
                  %v2834 = vld [vmem:[%s2740 + $0x130] sm:$0xff]
                  %2835 = vst [vmem:[%s2741 + $0x140] sm:$0xff] %v2834
                  %v2836 = vld [vmem:[%s2740 + $0x138] sm:$0xff]
                  %2837 = vst [vmem:[%s2741 + $0x148] sm:$0xff] %v2836
                  %v2838 = vld [vmem:[%s2740 + $0x100] sm:$0xff]
                  %2839 = vst [vmem:[%s2741 + $0x120] sm:$0xff] %v2838
                  %v2840 = vld [vmem:[%s2740 + $0x108] sm:$0xff]
                  %2841 = vst [vmem:[%s2741 + $0x128] sm:$0xff] %v2840
                  %v2842 = vld [vmem:[%s2740 + $0x110] sm:$0xff]
                  %2843 = vst [vmem:[%s2741 + $0x130] sm:$0xff] %v2842
                  %v2844 = vld [vmem:[%s2740 + $0x118] sm:$0xff]
                  %2845 = vst [vmem:[%s2741 + $0x138] sm:$0xff] %v2844
                  %v2846 = vld [vmem:[%s2740 + $0x120] sm:$0xff]
                  %2847 = vst [vmem:[%s2741 + $0x140] sm:$0xff] %v2846
                  %v2848 = vld [vmem:[%s2740 + $0x128] sm:$0xff]
                  %2849 = vst [vmem:[%s2741 + $0x148] sm:$0xff] %v2848
                  %v2850 = vld [vmem:[%s2740 + $0x130] sm:$0xff]
                  %2851 = vst [vmem:[%s2741 + $0x150] sm:$0xff] %v2850
                  %v2852 = vld [vmem:[%s2740 + $0x138] sm:$0xff]
                  %2853 = vst [vmem:[%s2741 + $0x158] sm:$0xff] %v2852
                  %v2854 = vld [vmem:[%s2740 + $0x140] sm:$0xff]
                  %2855 = vst [vmem:[%s2741 + $0x160] sm:$0xff] %v2854
                  %v2856 = vld [vmem:[%s2740 + $0x148] sm:$0xff]
                  %2857 = vst [vmem:[%s2741 + $0x168] sm:$0xff] %v2856
                  %v2858 = vld [vmem:[%s2740 + $0x150] sm:$0xff]
                  %2859 = vst [vmem:[%s2741 + $0x170] sm:$0xff] %v2858
                  %v2860 = vld [vmem:[%s2740 + $0x158] sm:$0xff]
                  %2861 = vst [vmem:[%s2741 + $0x178] sm:$0xff] %v2860
                  %v2862 = vld [vmem:[%s2740 + $0x160] sm:$0xff]
                  %2863 = vst [vmem:[%s2741 + $0x180] sm:$0xff] %v2862
                  %v2864 = vld [vmem:[%s2740 + $0x168] sm:$0xff]
                  %2865 = vst [vmem:[%s2741 + $0x188] sm:$0xff] %v2864
                  %v2866 = vld [vmem:[%s2740 + $0x170] sm:$0xff]
                  %2867 = vst [vmem:[%s2741 + $0x190] sm:$0xff] %v2866
                  %v2868 = vld [vmem:[%s2740 + $0x178] sm:$0xff]
                  %2869 = vst [vmem:[%s2741 + $0x198] sm:$0xff] %v2868
                  %v2870 = vld [vmem:[%s2740 + $0x180] sm:$0xff]
                  %2871 = vst [vmem:[%s2741 + $0x1a0] sm:$0xff] %v2870
                  %v2872 = vld [vmem:[%s2740 + $0x188] sm:$0xff]
                  %2873 = vst [vmem:[%s2741 + $0x1a8] sm:$0xff] %v2872
                  %v2874 = vld [vmem:[%s2740 + $0x190] sm:$0xff]
                  %2875 = vst [vmem:[%s2741 + $0x1b0] sm:$0xff] %v2874
                  %v2876 = vld [vmem:[%s2740 + $0x198] sm:$0xff]
                  %2877 = vst [vmem:[%s2741 + $0x1b8] sm:$0xff] %v2876
                  %v2878 = vld [vmem:[%s2740 + $0x1a0] sm:$0xff]
                  %2879 = vst [vmem:[%s2741 + $0x1c0] sm:$0xff] %v2878
                  %v2880 = vld [vmem:[%s2740 + $0x1a8] sm:$0xff]
                  %2881 = vst [vmem:[%s2741 + $0x1c8] sm:$0xff] %v2880
                  %v2882 = vld [vmem:[%s2740 + $0x1b0] sm:$0xff]
                  %2883 = vst [vmem:[%s2741 + $0x1d0] sm:$0xff] %v2882
                  %v2884 = vld [vmem:[%s2740 + $0x1b8] sm:$0xff]
                  %2885 = vst [vmem:[%s2741 + $0x1d8] sm:$0xff] %v2884
                  %s2886 = sadd.s32 1, %s2739
                  %p2887 = scmp.ge.s32.totalorder %s2886, %s2729
                  %s2888 = scalar_select %p2887, 0, %s2886
                  %s2889 = smul.u32 %s2888, 192
                  %s2890 = smul.u32 %s2888, 192
                  %s2891 = scalar_lea.vmem %s2473, %s2889 [#allocation7]
                  %s2892 = scalar_lea.vmem %s2490, %s2890
                $region102: #{tpu_custom_call.1} parent=96 // loop_footer
                  %s2736 = sadd.s32 %s2734, 1
                $region103: #{tpu_custom_call.1} parent=96 // loop_footer_branch
                  %2733 = sbr.rel target = $region99
                $region104: #{tpu_custom_call.1} parent=96 // loop_exit
                  _
                %s2893 = sdiv.u32.pop %s2728, 24
                %s2894 = srem.u32.pop %s2728, 24
                %s2895 = smul.u32 %s2893, 24
                %s2896 = smul.u32 128, %s2895
                %s2897 = sshra.s32 %s2896, 4
                %s2898 = scalar_lea.vmem %s2473, %s2897 [#allocation7]
                %s2899 = smul.u32 128, %s2895
                %s2900 = sshra.s32 %s2899, 4
                %s2901 = scalar_lea.vmem %s2490, %s2900
                // While loop
                $region105: #{tpu_custom_call.1} parent=96 // loop_pre_header
                  _
                $region106: #{tpu_custom_call.1} parent=96 // loop_header
                  %s2905 = sphi 0, %s2907
                  %p2906 = scmp.ge.s32.totalorder %s2905, %s2894
                  %s2910 = sphi 0, %s2921
                  %s2911 = sphi %s2898, %s2924
                  %s2912 = sphi %s2901, %s2925
                $region107: #{tpu_custom_call.1} parent=96 // loop_header_branch
                  %2909 = sbr.rel (%p2906) target = $region111
                $region108: #{tpu_custom_call.1} parent=96 // loop_body
                  %v2913 = vld [vmem:[%s2911] sm:$0xff]
                  %2914 = vst [vmem:[%s2912] sm:$0xff] %v2913
                  %v2915 = vld [vmem:[%s2911 + $0x80] sm:$0xff]
                  %2916 = vst [vmem:[%s2912 + $0x90] sm:$0xff] %v2915
                  %v2917 = vld [vmem:[%s2911 + $0x100] sm:$0xff]
                  %2918 = vst [vmem:[%s2912 + $0x120] sm:$0xff] %v2917
                  %s2919 = sadd.s32 1, %s2910
                  %p2920 = scmp.ge.s32.totalorder %s2919, %s2894
                  %s2921 = scalar_select %p2920, 0, %s2919
                  %s2922 = smul.u32 %s2921, 8
                  %s2923 = smul.u32 %s2921, 8
                  %s2924 = scalar_lea.vmem %s2898, %s2922 [#allocation7]
                  %s2925 = scalar_lea.vmem %s2901, %s2923
                $region109: #{tpu_custom_call.1} parent=96 // loop_footer
                  %s2907 = sadd.s32 %s2905, 1
                $region110: #{tpu_custom_call.1} parent=96 // loop_footer_branch
                  %2904 = sbr.rel target = $region106
                $region111: #{tpu_custom_call.1} parent=96 // loop_exit
                  _
                %s2926 = sshllo.u32 0, %s2723
                loop: start=0, step=1, limit=1
                $region112: #{tpu_custom_call.1} parent=96 // loop_pre_header
                  _
                $region113: #{tpu_custom_call.1} parent=96 // loop_header
                  %s2928 = sphi 0, %s2932
                  %p2929 = scmp.ge.s32.totalorder %s2928, 1
                  %s2933 = sphi %s2725, %s2725
                  %s2934 = sphi %s2727, %s2727
                $region114: #{tpu_custom_call.1} parent=96 // loop_header_branch
                  %2931 = sbr.rel (%p2929) target = $region118
                $region115: #{tpu_custom_call.1} parent=96 // loop_body
                  %v2935 = vld [vmem:[%s2933] sm:%s2926]
                  %2936 = vst [vmem:[%s2934] sm:%s2926] %v2935
                  %v2937 = vld [vmem:[%s2933 + $0x80] sm:%s2926]
                  %2938 = vst [vmem:[%s2934 + $0x90] sm:%s2926] %v2937
                  %v2939 = vld [vmem:[%s2933 + $0x100] sm:%s2926]
                  %2940 = vst [vmem:[%s2934 + $0x120] sm:%s2926] %v2939
                $region116: #{tpu_custom_call.1} parent=96 // loop_footer
                  %s2932 = sadd.s32 1, %s2928
                $region117: #{tpu_custom_call.1} parent=96 // loop_footer_branch
                  %2927 = sbr.rel target = $region113
                $region118: #{tpu_custom_call.1} parent=96 // loop_exit
                  _
              $region97: #{tpu_custom_call.1} parent=63 // pred_fallthru
                _
            $region64: #{tpu_custom_call.1} parent=59 // pred_fallthru
              _
            // Predicated region
            $region65: #{tpu_custom_call.1} parent=59 // pred_check
              %p2499 = pneg %p2495
            $region66: #{tpu_custom_call.1} parent=59 // pred_check_branch
              %2501 = sbr.rel (%p2499) target = $region68
            $region67: #{tpu_custom_call.1} parent=59 // pred_region
              %s2502 = sshllo.u32 0, %s2491
              loop: start=0, step=1, limit=1
              $region69: #{tpu_custom_call.1} parent=67 // loop_pre_header
                _
              $region70: #{tpu_custom_call.1} parent=67 // loop_header
                %s2504 = sphi 0, %s2508
                %p2505 = scmp.ge.s32.totalorder %s2504, 1
                %s2509 = sphi %s2473, %s2473
                %s2510 = sphi %s2490, %s2490
              $region71: #{tpu_custom_call.1} parent=67 // loop_header_branch
                %2507 = sbr.rel (%p2505) target = $region75
              $region72: #{tpu_custom_call.1} parent=67 // loop_body
                %v2511 = vld [vmem:[%s2509] sm:%s2502]
                %2512 = vst [vmem:[%s2510] sm:%s2502] %v2511
                %v2513 = vld [vmem:[%s2509 + $0x80] sm:%s2502]
                %2514 = vst [vmem:[%s2510 + $0x90] sm:%s2502] %v2513
                %v2515 = vld [vmem:[%s2509 + $0x100] sm:%s2502]
                %2516 = vst [vmem:[%s2510 + $0x120] sm:%s2502] %v2515
              $region73: #{tpu_custom_call.1} parent=67 // loop_footer
                %s2508 = sadd.s32 1, %s2504
              $region74: #{tpu_custom_call.1} parent=67 // loop_footer_branch
                %2503 = sbr.rel target = $region70
              $region75: #{tpu_custom_call.1} parent=67 // loop_exit
                _
            $region68: #{tpu_custom_call.1} parent=59 // pred_fallthru
              _
          $region60: #{tpu_custom_call.1} parent=55 // pred_fallthru
            _
          %2941 = vnop
        $region56: #{tpu_custom_call.1} parent=39 // pred_fallthru
          _
        // Predicated region
        $region119: #{tpu_custom_call.1} parent=39 // pred_check
          %p2942 = pneg %p192
        $region120: #{tpu_custom_call.1} parent=39 // pred_check_branch
          %2944 = sbr.rel (%p2942) target = $region122
        $region121: #{tpu_custom_call.1} parent=39 // pred_region
          %s2945 = smul.u32 16, %s25
          %s2946 = ssub.s32 18, %s2945
          %p2947 = scmp.lt.s32.totalorder %s2946, 16
          %s2948 = scalar_select %p2947, %s2946, 16
          %s2949 = smul.u32 640, %s2948
          %p2950 = scmp.ne.s32.totalorder 0, %s2949
          %s2951 = smul.addr %s24, 90
          %s2952 = sadd.s32 %s2945, %s2951
          %s2953 = smul.addr %s2952, 8
          %s2954 = scalar_lea.vmem %s6, %s2953
          %s2955 = smul.u32 %s2948, 8
          // Predicated region
          $region123: #{tpu_custom_call.1} parent=121 // pred_check
            %p2956 = pneg %p2950
          $region124: #{tpu_custom_call.1} parent=121 // pred_check_branch
            %2958 = sbr.rel (%p2956) target = $region126
          $region125: #{tpu_custom_call.1} parent=121 // pred_region
            %p2959 = scmp.lt.u32.totalorder %s2955, 8
            %p2960 = pneg %p2959
            // Predicated region
            $region127: #{tpu_custom_call.1} parent=125 // pred_check
              _
            $region128: #{tpu_custom_call.1} parent=125 // pred_check_branch
              %2962 = sbr.rel (%p2959) target = $region130
            $region129: #{tpu_custom_call.1} parent=125 // pred_region
              %s2985 = sand.u32 %s2955, 7
              %p2986 = scmp.eq.s32.totalorder %s2985, 0
              // Predicated region
              $region142: #{tpu_custom_call.1} parent=129 // pred_check
                %p2987 = pneg %p2986
              $region143: #{tpu_custom_call.1} parent=129 // pred_check_branch
                %2989 = sbr.rel (%p2987) target = $region145
              $region144: #{tpu_custom_call.1} parent=129 // pred_region
                %s2990 = sshrl.u32 %s2955, 3
                %s2991 = sshrl.u32 %s2990, 4
                // While loop
                $region146: #{tpu_custom_call.1} parent=144 // loop_pre_header
                  _
                $region147: #{tpu_custom_call.1} parent=144 // loop_header
                  %s2995 = sphi 0, %s2997
                  %p2996 = scmp.ge.s32.totalorder %s2995, %s2991
                  %s3000 = sphi 0, %s3165
                  %s3001 = sphi %s2477, %s3168
                  %s3002 = sphi %s2954, %s3169
                $region148: #{tpu_custom_call.1} parent=144 // loop_header_branch
                  %2999 = sbr.rel (%p2996) target = $region152
                $region149: #{tpu_custom_call.1} parent=144 // loop_body
                  %v3003 = vld [vmem:[%s3001] sm:$0xff]
                  %3004 = vst [vmem:[%s3002] sm:$0xff] %v3003
                  %v3005 = vld [vmem:[%s3001 + $0x8] sm:$0xff]
                  %3006 = vst [vmem:[%s3002 + $0x8] sm:$0xff] %v3005
                  %v3007 = vld [vmem:[%s3001 + $0x10] sm:$0xff]
                  %3008 = vst [vmem:[%s3002 + $0x10] sm:$0xff] %v3007
                  %v3009 = vld [vmem:[%s3001 + $0x18] sm:$0xff]
                  %3010 = vst [vmem:[%s3002 + $0x18] sm:$0xff] %v3009
                  %v3011 = vld [vmem:[%s3001 + $0x20] sm:$0xff]
                  %3012 = vst [vmem:[%s3002 + $0x20] sm:$0xff] %v3011
                  %v3013 = vld [vmem:[%s3001 + $0x28] sm:$0xff]
                  %3014 = vst [vmem:[%s3002 + $0x28] sm:$0xff] %v3013
                  %v3015 = vld [vmem:[%s3001 + $0x30] sm:$0xff]
                  %3016 = vst [vmem:[%s3002 + $0x30] sm:$0xff] %v3015
                  %v3017 = vld [vmem:[%s3001 + $0x38] sm:$0xff]
                  %3018 = vst [vmem:[%s3002 + $0x38] sm:$0xff] %v3017
                  %v3019 = vld [vmem:[%s3001 + $0x40] sm:$0xff]
                  %3020 = vst [vmem:[%s3002 + $0x40] sm:$0xff] %v3019
                  %v3021 = vld [vmem:[%s3001 + $0x48] sm:$0xff]
                  %3022 = vst [vmem:[%s3002 + $0x48] sm:$0xff] %v3021
                  %v3023 = vld [vmem:[%s3001 + $0x50] sm:$0xff]
                  %3024 = vst [vmem:[%s3002 + $0x50] sm:$0xff] %v3023
                  %v3025 = vld [vmem:[%s3001 + $0x58] sm:$0xff]
                  %3026 = vst [vmem:[%s3002 + $0x58] sm:$0xff] %v3025
                  %v3027 = vld [vmem:[%s3001 + $0x60] sm:$0xff]
                  %3028 = vst [vmem:[%s3002 + $0x60] sm:$0xff] %v3027
                  %v3029 = vld [vmem:[%s3001 + $0x68] sm:$0xff]
                  %3030 = vst [vmem:[%s3002 + $0x68] sm:$0xff] %v3029
                  %v3031 = vld [vmem:[%s3001 + $0x70] sm:$0xff]
                  %3032 = vst [vmem:[%s3002 + $0x70] sm:$0xff] %v3031
                  %v3033 = vld [vmem:[%s3001 + $0x78] sm:$0xff]
                  %3034 = vst [vmem:[%s3002 + $0x78] sm:$0xff] %v3033
                  %v3035 = vld [vmem:[%s3001 + $0x80] sm:$0xff]
                  %3036 = vst [vmem:[%s3002 + $0x90] sm:$0xff] %v3035
                  %v3037 = vld [vmem:[%s3001 + $0x88] sm:$0xff]
                  %3038 = vst [vmem:[%s3002 + $0x98] sm:$0xff] %v3037
                  %v3039 = vld [vmem:[%s3001 + $0x90] sm:$0xff]
                  %3040 = vst [vmem:[%s3002 + $0xa0] sm:$0xff] %v3039
                  %v3041 = vld [vmem:[%s3001 + $0x98] sm:$0xff]
                  %3042 = vst [vmem:[%s3002 + $0xa8] sm:$0xff] %v3041
                  %v3043 = vld [vmem:[%s3001 + $0xa0] sm:$0xff]
                  %3044 = vst [vmem:[%s3002 + $0xb0] sm:$0xff] %v3043
                  %v3045 = vld [vmem:[%s3001 + $0xa8] sm:$0xff]
                  %3046 = vst [vmem:[%s3002 + $0xb8] sm:$0xff] %v3045
                  %v3047 = vld [vmem:[%s3001 + $0xb0] sm:$0xff]
                  %3048 = vst [vmem:[%s3002 + $0xc0] sm:$0xff] %v3047
                  %v3049 = vld [vmem:[%s3001 + $0xb8] sm:$0xff]
                  %3050 = vst [vmem:[%s3002 + $0xc8] sm:$0xff] %v3049
                  %v3051 = vld [vmem:[%s3001 + $0xc0] sm:$0xff]
                  %3052 = vst [vmem:[%s3002 + $0xd0] sm:$0xff] %v3051
                  %v3053 = vld [vmem:[%s3001 + $0xc8] sm:$0xff]
                  %3054 = vst [vmem:[%s3002 + $0xd8] sm:$0xff] %v3053
                  %v3055 = vld [vmem:[%s3001 + $0xd0] sm:$0xff]
                  %3056 = vst [vmem:[%s3002 + $0xe0] sm:$0xff] %v3055
                  %v3057 = vld [vmem:[%s3001 + $0xd8] sm:$0xff]
                  %3058 = vst [vmem:[%s3002 + $0xe8] sm:$0xff] %v3057
                  %v3059 = vld [vmem:[%s3001 + $0xe0] sm:$0xff]
                  %3060 = vst [vmem:[%s3002 + $0xf0] sm:$0xff] %v3059
                  %v3061 = vld [vmem:[%s3001 + $0xe8] sm:$0xff]
                  %3062 = vst [vmem:[%s3002 + $0xf8] sm:$0xff] %v3061
                  %v3063 = vld [vmem:[%s3001 + $0xf0] sm:$0xff]
                  %3064 = vst [vmem:[%s3002 + $0x100] sm:$0xff] %v3063
                  %v3065 = vld [vmem:[%s3001 + $0xf8] sm:$0xff]
                  %3066 = vst [vmem:[%s3002 + $0x108] sm:$0xff] %v3065
                  %v3067 = vld [vmem:[%s3001 + $0x100] sm:$0xff]
                  %3068 = vst [vmem:[%s3002 + $0x120] sm:$0xff] %v3067
                  %v3069 = vld [vmem:[%s3001 + $0x108] sm:$0xff]
                  %3070 = vst [vmem:[%s3002 + $0x128] sm:$0xff] %v3069
                  %v3071 = vld [vmem:[%s3001 + $0x110] sm:$0xff]
                  %3072 = vst [vmem:[%s3002 + $0x130] sm:$0xff] %v3071
                  %v3073 = vld [vmem:[%s3001 + $0x118] sm:$0xff]
                  %3074 = vst [vmem:[%s3002 + $0x138] sm:$0xff] %v3073
                  %v3075 = vld [vmem:[%s3001 + $0x120] sm:$0xff]
                  %3076 = vst [vmem:[%s3002 + $0x140] sm:$0xff] %v3075
                  %v3077 = vld [vmem:[%s3001 + $0x128] sm:$0xff]
                  %3078 = vst [vmem:[%s3002 + $0x148] sm:$0xff] %v3077
                  %v3079 = vld [vmem:[%s3001 + $0x130] sm:$0xff]
                  %3080 = vst [vmem:[%s3002 + $0x150] sm:$0xff] %v3079
                  %v3081 = vld [vmem:[%s3001 + $0x138] sm:$0xff]
                  %3082 = vst [vmem:[%s3002 + $0x158] sm:$0xff] %v3081
                  %v3083 = vld [vmem:[%s3001 + $0x140] sm:$0xff]
                  %3084 = vst [vmem:[%s3002 + $0x160] sm:$0xff] %v3083
                  %v3085 = vld [vmem:[%s3001 + $0x148] sm:$0xff]
                  %3086 = vst [vmem:[%s3002 + $0x168] sm:$0xff] %v3085
                  %v3087 = vld [vmem:[%s3001 + $0x150] sm:$0xff]
                  %3088 = vst [vmem:[%s3002 + $0x170] sm:$0xff] %v3087
                  %v3089 = vld [vmem:[%s3001 + $0x158] sm:$0xff]
                  %3090 = vst [vmem:[%s3002 + $0x178] sm:$0xff] %v3089
                  %v3091 = vld [vmem:[%s3001 + $0x160] sm:$0xff]
                  %3092 = vst [vmem:[%s3002 + $0x180] sm:$0xff] %v3091
                  %v3093 = vld [vmem:[%s3001 + $0x168] sm:$0xff]
                  %3094 = vst [vmem:[%s3002 + $0x188] sm:$0xff] %v3093
                  %v3095 = vld [vmem:[%s3001 + $0x170] sm:$0xff]
                  %3096 = vst [vmem:[%s3002 + $0x190] sm:$0xff] %v3095
                  %v3097 = vld [vmem:[%s3001 + $0x178] sm:$0xff]
                  %3098 = vst [vmem:[%s3002 + $0x198] sm:$0xff] %v3097
                  %v3099 = vld [vmem:[%s3001 + $0x180] sm:$0xff]
                  %3100 = vst [vmem:[%s3002 + $0x1b0] sm:$0xff] %v3099
                  %v3101 = vld [vmem:[%s3001 + $0x188] sm:$0xff]
                  %3102 = vst [vmem:[%s3002 + $0x1b8] sm:$0xff] %v3101
                  %v3103 = vld [vmem:[%s3001 + $0x190] sm:$0xff]
                  %3104 = vst [vmem:[%s3002 + $0x1c0] sm:$0xff] %v3103
                  %v3105 = vld [vmem:[%s3001 + $0x198] sm:$0xff]
                  %3106 = vst [vmem:[%s3002 + $0x1c8] sm:$0xff] %v3105
                  %v3107 = vld [vmem:[%s3001 + $0x1a0] sm:$0xff]
                  %3108 = vst [vmem:[%s3002 + $0x1d0] sm:$0xff] %v3107
                  %v3109 = vld [vmem:[%s3001 + $0x1a8] sm:$0xff]
                  %3110 = vst [vmem:[%s3002 + $0x1d8] sm:$0xff] %v3109
                  %v3111 = vld [vmem:[%s3001 + $0x1b0] sm:$0xff]
                  %3112 = vst [vmem:[%s3002 + $0x1e0] sm:$0xff] %v3111
                  %v3113 = vld [vmem:[%s3001 + $0x1b8] sm:$0xff]
                  %3114 = vst [vmem:[%s3002 + $0x1e8] sm:$0xff] %v3113
                  %v3115 = vld [vmem:[%s3001 + $0x1c0] sm:$0xff]
                  %3116 = vst [vmem:[%s3002 + $0x1f0] sm:$0xff] %v3115
                  %v3117 = vld [vmem:[%s3001 + $0x1c8] sm:$0xff]
                  %3118 = vst [vmem:[%s3002 + $0x1f8] sm:$0xff] %v3117
                  %v3119 = vld [vmem:[%s3001 + $0x1d0] sm:$0xff]
                  %3120 = vst [vmem:[%s3002 + $0x200] sm:$0xff] %v3119
                  %v3121 = vld [vmem:[%s3001 + $0x1d8] sm:$0xff]
                  %3122 = vst [vmem:[%s3002 + $0x208] sm:$0xff] %v3121
                  %v3123 = vld [vmem:[%s3001 + $0x1e0] sm:$0xff]
                  %3124 = vst [vmem:[%s3002 + $0x210] sm:$0xff] %v3123
                  %v3125 = vld [vmem:[%s3001 + $0x1e8] sm:$0xff]
                  %3126 = vst [vmem:[%s3002 + $0x218] sm:$0xff] %v3125
                  %v3127 = vld [vmem:[%s3001 + $0x1f0] sm:$0xff]
                  %3128 = vst [vmem:[%s3002 + $0x220] sm:$0xff] %v3127
                  %v3129 = vld [vmem:[%s3001 + $0x1f8] sm:$0xff]
                  %3130 = vst [vmem:[%s3002 + $0x228] sm:$0xff] %v3129
                  %v3131 = vld [vmem:[%s3001 + $0x200] sm:$0xff]
                  %3132 = vst [vmem:[%s3002 + $0x240] sm:$0xff] %v3131
                  %v3133 = vld [vmem:[%s3001 + $0x208] sm:$0xff]
                  %3134 = vst [vmem:[%s3002 + $0x248] sm:$0xff] %v3133
                  %v3135 = vld [vmem:[%s3001 + $0x210] sm:$0xff]
                  %3136 = vst [vmem:[%s3002 + $0x250] sm:$0xff] %v3135
                  %v3137 = vld [vmem:[%s3001 + $0x218] sm:$0xff]
                  %3138 = vst [vmem:[%s3002 + $0x258] sm:$0xff] %v3137
                  %v3139 = vld [vmem:[%s3001 + $0x220] sm:$0xff]
                  %3140 = vst [vmem:[%s3002 + $0x260] sm:$0xff] %v3139
                  %v3141 = vld [vmem:[%s3001 + $0x228] sm:$0xff]
                  %3142 = vst [vmem:[%s3002 + $0x268] sm:$0xff] %v3141
                  %v3143 = vld [vmem:[%s3001 + $0x230] sm:$0xff]
                  %3144 = vst [vmem:[%s3002 + $0x270] sm:$0xff] %v3143
                  %v3145 = vld [vmem:[%s3001 + $0x238] sm:$0xff]
                  %3146 = vst [vmem:[%s3002 + $0x278] sm:$0xff] %v3145
                  %v3147 = vld [vmem:[%s3001 + $0x240] sm:$0xff]
                  %3148 = vst [vmem:[%s3002 + $0x280] sm:$0xff] %v3147
                  %v3149 = vld [vmem:[%s3001 + $0x248] sm:$0xff]
                  %3150 = vst [vmem:[%s3002 + $0x288] sm:$0xff] %v3149
                  %v3151 = vld [vmem:[%s3001 + $0x250] sm:$0xff]
                  %3152 = vst [vmem:[%s3002 + $0x290] sm:$0xff] %v3151
                  %v3153 = vld [vmem:[%s3001 + $0x258] sm:$0xff]
                  %3154 = vst [vmem:[%s3002 + $0x298] sm:$0xff] %v3153
                  %v3155 = vld [vmem:[%s3001 + $0x260] sm:$0xff]
                  %3156 = vst [vmem:[%s3002 + $0x2a0] sm:$0xff] %v3155
                  %v3157 = vld [vmem:[%s3001 + $0x268] sm:$0xff]
                  %3158 = vst [vmem:[%s3002 + $0x2a8] sm:$0xff] %v3157
                  %v3159 = vld [vmem:[%s3001 + $0x270] sm:$0xff]
                  %3160 = vst [vmem:[%s3002 + $0x2b0] sm:$0xff] %v3159
                  %v3161 = vld [vmem:[%s3001 + $0x278] sm:$0xff]
                  %3162 = vst [vmem:[%s3002 + $0x2b8] sm:$0xff] %v3161
                  %s3163 = sadd.s32 1, %s3000
                  %p3164 = scmp.ge.s32.totalorder %s3163, %s2991
                  %s3165 = scalar_select %p3164, 0, %s3163
                  %s3166 = smul.u32 %s3165, 128
                  %s3167 = smul.u32 %s3165, 128
                  %s3168 = scalar_lea.vmem %s2477, %s3166 [#allocation8]
                  %s3169 = scalar_lea.vmem %s2954, %s3167
                $region150: #{tpu_custom_call.1} parent=144 // loop_footer
                  %s2997 = sadd.s32 %s2995, 1
                $region151: #{tpu_custom_call.1} parent=144 // loop_footer_branch
                  %2994 = sbr.rel target = $region147
                $region152: #{tpu_custom_call.1} parent=144 // loop_exit
                  _
                %s3170 = sshrl.u32 %s2990, 4
                %s3171 = sand.u32 %s2990, 15
                %s3172 = smul.u32 %s3170, 16
                %s3173 = smul.u32 128, %s3172
                %s3174 = sshra.s32 %s3173, 4
                %s3175 = scalar_lea.vmem %s2477, %s3174 [#allocation8]
                %s3176 = smul.u32 128, %s3172
                %s3177 = sshra.s32 %s3176, 4
                %s3178 = scalar_lea.vmem %s2954, %s3177
                // While loop
                $region153: #{tpu_custom_call.1} parent=144 // loop_pre_header
                  _
                $region154: #{tpu_custom_call.1} parent=144 // loop_header
                  %s3182 = sphi 0, %s3184
                  %p3183 = scmp.ge.s32.totalorder %s3182, %s3171
                  %s3187 = sphi 0, %s3202
                  %s3188 = sphi %s3175, %s3205
                  %s3189 = sphi %s3178, %s3206
                $region155: #{tpu_custom_call.1} parent=144 // loop_header_branch
                  %3186 = sbr.rel (%p3183) target = $region159
                $region156: #{tpu_custom_call.1} parent=144 // loop_body
                  %v3190 = vld [vmem:[%s3188] sm:$0xff]
                  %3191 = vst [vmem:[%s3189] sm:$0xff] %v3190
                  %v3192 = vld [vmem:[%s3188 + $0x80] sm:$0xff]
                  %3193 = vst [vmem:[%s3189 + $0x90] sm:$0xff] %v3192
                  %v3194 = vld [vmem:[%s3188 + $0x100] sm:$0xff]
                  %3195 = vst [vmem:[%s3189 + $0x120] sm:$0xff] %v3194
                  %v3196 = vld [vmem:[%s3188 + $0x180] sm:$0xff]
                  %3197 = vst [vmem:[%s3189 + $0x1b0] sm:$0xff] %v3196
                  %v3198 = vld [vmem:[%s3188 + $0x200] sm:$0xff]
                  %3199 = vst [vmem:[%s3189 + $0x240] sm:$0xff] %v3198
                  %s3200 = sadd.s32 1, %s3187
                  %p3201 = scmp.ge.s32.totalorder %s3200, %s3171
                  %s3202 = scalar_select %p3201, 0, %s3200
                  %s3203 = smul.u32 %s3202, 8
                  %s3204 = smul.u32 %s3202, 8
                  %s3205 = scalar_lea.vmem %s3175, %s3203 [#allocation8]
                  %s3206 = scalar_lea.vmem %s3178, %s3204
                $region157: #{tpu_custom_call.1} parent=144 // loop_footer
                  %s3184 = sadd.s32 %s3182, 1
                $region158: #{tpu_custom_call.1} parent=144 // loop_footer_branch
                  %3181 = sbr.rel target = $region154
                $region159: #{tpu_custom_call.1} parent=144 // loop_exit
                  _
              $region145: #{tpu_custom_call.1} parent=129 // pred_fallthru
                _
              %p3207 = pneg %p2986
              // Predicated region
              $region160: #{tpu_custom_call.1} parent=129 // pred_check
                _
              $region161: #{tpu_custom_call.1} parent=129 // pred_check_branch
                %3209 = sbr.rel (%p2986) target = $region163
              $region162: #{tpu_custom_call.1} parent=129 // pred_region
                %s3210 = sand.u32 %s2955, 7
                %s3211 = ssub.s32 %s2955, %s3210
                %s3212 = scalar_lea.vmem %s2477, %s3211 [#allocation8]
                %s3213 = ssub.s32 %s2955, %s3210
                %s3214 = scalar_lea.vmem %s2954, %s3213
                %s3215 = sshrl.u32 %s2955, 3
                %s3216 = sshrl.u32 %s3215, 4
                // While loop
                $region164: #{tpu_custom_call.1} parent=162 // loop_pre_header
                  _
                $region165: #{tpu_custom_call.1} parent=162 // loop_header
                  %s3220 = sphi 0, %s3222
                  %p3221 = scmp.ge.s32.totalorder %s3220, %s3216
                  %s3225 = sphi 0, %s3390
                  %s3226 = sphi %s2477, %s3393
                  %s3227 = sphi %s2954, %s3394
                $region166: #{tpu_custom_call.1} parent=162 // loop_header_branch
                  %3224 = sbr.rel (%p3221) target = $region170
                $region167: #{tpu_custom_call.1} parent=162 // loop_body
                  %v3228 = vld [vmem:[%s3226] sm:$0xff]
                  %3229 = vst [vmem:[%s3227] sm:$0xff] %v3228
                  %v3230 = vld [vmem:[%s3226 + $0x8] sm:$0xff]
                  %3231 = vst [vmem:[%s3227 + $0x8] sm:$0xff] %v3230
                  %v3232 = vld [vmem:[%s3226 + $0x10] sm:$0xff]
                  %3233 = vst [vmem:[%s3227 + $0x10] sm:$0xff] %v3232
                  %v3234 = vld [vmem:[%s3226 + $0x18] sm:$0xff]
                  %3235 = vst [vmem:[%s3227 + $0x18] sm:$0xff] %v3234
                  %v3236 = vld [vmem:[%s3226 + $0x20] sm:$0xff]
                  %3237 = vst [vmem:[%s3227 + $0x20] sm:$0xff] %v3236
                  %v3238 = vld [vmem:[%s3226 + $0x28] sm:$0xff]
                  %3239 = vst [vmem:[%s3227 + $0x28] sm:$0xff] %v3238
                  %v3240 = vld [vmem:[%s3226 + $0x30] sm:$0xff]
                  %3241 = vst [vmem:[%s3227 + $0x30] sm:$0xff] %v3240
                  %v3242 = vld [vmem:[%s3226 + $0x38] sm:$0xff]
                  %3243 = vst [vmem:[%s3227 + $0x38] sm:$0xff] %v3242
                  %v3244 = vld [vmem:[%s3226 + $0x40] sm:$0xff]
                  %3245 = vst [vmem:[%s3227 + $0x40] sm:$0xff] %v3244
                  %v3246 = vld [vmem:[%s3226 + $0x48] sm:$0xff]
                  %3247 = vst [vmem:[%s3227 + $0x48] sm:$0xff] %v3246
                  %v3248 = vld [vmem:[%s3226 + $0x50] sm:$0xff]
                  %3249 = vst [vmem:[%s3227 + $0x50] sm:$0xff] %v3248
                  %v3250 = vld [vmem:[%s3226 + $0x58] sm:$0xff]
                  %3251 = vst [vmem:[%s3227 + $0x58] sm:$0xff] %v3250
                  %v3252 = vld [vmem:[%s3226 + $0x60] sm:$0xff]
                  %3253 = vst [vmem:[%s3227 + $0x60] sm:$0xff] %v3252
                  %v3254 = vld [vmem:[%s3226 + $0x68] sm:$0xff]
                  %3255 = vst [vmem:[%s3227 + $0x68] sm:$0xff] %v3254
                  %v3256 = vld [vmem:[%s3226 + $0x70] sm:$0xff]
                  %3257 = vst [vmem:[%s3227 + $0x70] sm:$0xff] %v3256
                  %v3258 = vld [vmem:[%s3226 + $0x78] sm:$0xff]
                  %3259 = vst [vmem:[%s3227 + $0x78] sm:$0xff] %v3258
                  %v3260 = vld [vmem:[%s3226 + $0x80] sm:$0xff]
                  %3261 = vst [vmem:[%s3227 + $0x90] sm:$0xff] %v3260
                  %v3262 = vld [vmem:[%s3226 + $0x88] sm:$0xff]
                  %3263 = vst [vmem:[%s3227 + $0x98] sm:$0xff] %v3262
                  %v3264 = vld [vmem:[%s3226 + $0x90] sm:$0xff]
                  %3265 = vst [vmem:[%s3227 + $0xa0] sm:$0xff] %v3264
                  %v3266 = vld [vmem:[%s3226 + $0x98] sm:$0xff]
                  %3267 = vst [vmem:[%s3227 + $0xa8] sm:$0xff] %v3266
                  %v3268 = vld [vmem:[%s3226 + $0xa0] sm:$0xff]
                  %3269 = vst [vmem:[%s3227 + $0xb0] sm:$0xff] %v3268
                  %v3270 = vld [vmem:[%s3226 + $0xa8] sm:$0xff]
                  %3271 = vst [vmem:[%s3227 + $0xb8] sm:$0xff] %v3270
                  %v3272 = vld [vmem:[%s3226 + $0xb0] sm:$0xff]
                  %3273 = vst [vmem:[%s3227 + $0xc0] sm:$0xff] %v3272
                  %v3274 = vld [vmem:[%s3226 + $0xb8] sm:$0xff]
                  %3275 = vst [vmem:[%s3227 + $0xc8] sm:$0xff] %v3274
                  %v3276 = vld [vmem:[%s3226 + $0xc0] sm:$0xff]
                  %3277 = vst [vmem:[%s3227 + $0xd0] sm:$0xff] %v3276
                  %v3278 = vld [vmem:[%s3226 + $0xc8] sm:$0xff]
                  %3279 = vst [vmem:[%s3227 + $0xd8] sm:$0xff] %v3278
                  %v3280 = vld [vmem:[%s3226 + $0xd0] sm:$0xff]
                  %3281 = vst [vmem:[%s3227 + $0xe0] sm:$0xff] %v3280
                  %v3282 = vld [vmem:[%s3226 + $0xd8] sm:$0xff]
                  %3283 = vst [vmem:[%s3227 + $0xe8] sm:$0xff] %v3282
                  %v3284 = vld [vmem:[%s3226 + $0xe0] sm:$0xff]
                  %3285 = vst [vmem:[%s3227 + $0xf0] sm:$0xff] %v3284
                  %v3286 = vld [vmem:[%s3226 + $0xe8] sm:$0xff]
                  %3287 = vst [vmem:[%s3227 + $0xf8] sm:$0xff] %v3286
                  %v3288 = vld [vmem:[%s3226 + $0xf0] sm:$0xff]
                  %3289 = vst [vmem:[%s3227 + $0x100] sm:$0xff] %v3288
                  %v3290 = vld [vmem:[%s3226 + $0xf8] sm:$0xff]
                  %3291 = vst [vmem:[%s3227 + $0x108] sm:$0xff] %v3290
                  %v3292 = vld [vmem:[%s3226 + $0x100] sm:$0xff]
                  %3293 = vst [vmem:[%s3227 + $0x120] sm:$0xff] %v3292
                  %v3294 = vld [vmem:[%s3226 + $0x108] sm:$0xff]
                  %3295 = vst [vmem:[%s3227 + $0x128] sm:$0xff] %v3294
                  %v3296 = vld [vmem:[%s3226 + $0x110] sm:$0xff]
                  %3297 = vst [vmem:[%s3227 + $0x130] sm:$0xff] %v3296
                  %v3298 = vld [vmem:[%s3226 + $0x118] sm:$0xff]
                  %3299 = vst [vmem:[%s3227 + $0x138] sm:$0xff] %v3298
                  %v3300 = vld [vmem:[%s3226 + $0x120] sm:$0xff]
                  %3301 = vst [vmem:[%s3227 + $0x140] sm:$0xff] %v3300
                  %v3302 = vld [vmem:[%s3226 + $0x128] sm:$0xff]
                  %3303 = vst [vmem:[%s3227 + $0x148] sm:$0xff] %v3302
                  %v3304 = vld [vmem:[%s3226 + $0x130] sm:$0xff]
                  %3305 = vst [vmem:[%s3227 + $0x150] sm:$0xff] %v3304
                  %v3306 = vld [vmem:[%s3226 + $0x138] sm:$0xff]
                  %3307 = vst [vmem:[%s3227 + $0x158] sm:$0xff] %v3306
                  %v3308 = vld [vmem:[%s3226 + $0x140] sm:$0xff]
                  %3309 = vst [vmem:[%s3227 + $0x160] sm:$0xff] %v3308
                  %v3310 = vld [vmem:[%s3226 + $0x148] sm:$0xff]
                  %3311 = vst [vmem:[%s3227 + $0x168] sm:$0xff] %v3310
                  %v3312 = vld [vmem:[%s3226 + $0x150] sm:$0xff]
                  %3313 = vst [vmem:[%s3227 + $0x170] sm:$0xff] %v3312
                  %v3314 = vld [vmem:[%s3226 + $0x158] sm:$0xff]
                  %3315 = vst [vmem:[%s3227 + $0x178] sm:$0xff] %v3314
                  %v3316 = vld [vmem:[%s3226 + $0x160] sm:$0xff]
                  %3317 = vst [vmem:[%s3227 + $0x180] sm:$0xff] %v3316
                  %v3318 = vld [vmem:[%s3226 + $0x168] sm:$0xff]
                  %3319 = vst [vmem:[%s3227 + $0x188] sm:$0xff] %v3318
                  %v3320 = vld [vmem:[%s3226 + $0x170] sm:$0xff]
                  %3321 = vst [vmem:[%s3227 + $0x190] sm:$0xff] %v3320
                  %v3322 = vld [vmem:[%s3226 + $0x178] sm:$0xff]
                  %3323 = vst [vmem:[%s3227 + $0x198] sm:$0xff] %v3322
                  %v3324 = vld [vmem:[%s3226 + $0x180] sm:$0xff]
                  %3325 = vst [vmem:[%s3227 + $0x1b0] sm:$0xff] %v3324
                  %v3326 = vld [vmem:[%s3226 + $0x188] sm:$0xff]
                  %3327 = vst [vmem:[%s3227 + $0x1b8] sm:$0xff] %v3326
                  %v3328 = vld [vmem:[%s3226 + $0x190] sm:$0xff]
                  %3329 = vst [vmem:[%s3227 + $0x1c0] sm:$0xff] %v3328
                  %v3330 = vld [vmem:[%s3226 + $0x198] sm:$0xff]
                  %3331 = vst [vmem:[%s3227 + $0x1c8] sm:$0xff] %v3330
                  %v3332 = vld [vmem:[%s3226 + $0x1a0] sm:$0xff]
                  %3333 = vst [vmem:[%s3227 + $0x1d0] sm:$0xff] %v3332
                  %v3334 = vld [vmem:[%s3226 + $0x1a8] sm:$0xff]
                  %3335 = vst [vmem:[%s3227 + $0x1d8] sm:$0xff] %v3334
                  %v3336 = vld [vmem:[%s3226 + $0x1b0] sm:$0xff]
                  %3337 = vst [vmem:[%s3227 + $0x1e0] sm:$0xff] %v3336
                  %v3338 = vld [vmem:[%s3226 + $0x1b8] sm:$0xff]
                  %3339 = vst [vmem:[%s3227 + $0x1e8] sm:$0xff] %v3338
                  %v3340 = vld [vmem:[%s3226 + $0x1c0] sm:$0xff]
                  %3341 = vst [vmem:[%s3227 + $0x1f0] sm:$0xff] %v3340
                  %v3342 = vld [vmem:[%s3226 + $0x1c8] sm:$0xff]
                  %3343 = vst [vmem:[%s3227 + $0x1f8] sm:$0xff] %v3342
                  %v3344 = vld [vmem:[%s3226 + $0x1d0] sm:$0xff]
                  %3345 = vst [vmem:[%s3227 + $0x200] sm:$0xff] %v3344
                  %v3346 = vld [vmem:[%s3226 + $0x1d8] sm:$0xff]
                  %3347 = vst [vmem:[%s3227 + $0x208] sm:$0xff] %v3346
                  %v3348 = vld [vmem:[%s3226 + $0x1e0] sm:$0xff]
                  %3349 = vst [vmem:[%s3227 + $0x210] sm:$0xff] %v3348
                  %v3350 = vld [vmem:[%s3226 + $0x1e8] sm:$0xff]
                  %3351 = vst [vmem:[%s3227 + $0x218] sm:$0xff] %v3350
                  %v3352 = vld [vmem:[%s3226 + $0x1f0] sm:$0xff]
                  %3353 = vst [vmem:[%s3227 + $0x220] sm:$0xff] %v3352
                  %v3354 = vld [vmem:[%s3226 + $0x1f8] sm:$0xff]
                  %3355 = vst [vmem:[%s3227 + $0x228] sm:$0xff] %v3354
                  %v3356 = vld [vmem:[%s3226 + $0x200] sm:$0xff]
                  %3357 = vst [vmem:[%s3227 + $0x240] sm:$0xff] %v3356
                  %v3358 = vld [vmem:[%s3226 + $0x208] sm:$0xff]
                  %3359 = vst [vmem:[%s3227 + $0x248] sm:$0xff] %v3358
                  %v3360 = vld [vmem:[%s3226 + $0x210] sm:$0xff]
                  %3361 = vst [vmem:[%s3227 + $0x250] sm:$0xff] %v3360
                  %v3362 = vld [vmem:[%s3226 + $0x218] sm:$0xff]
                  %3363 = vst [vmem:[%s3227 + $0x258] sm:$0xff] %v3362
                  %v3364 = vld [vmem:[%s3226 + $0x220] sm:$0xff]
                  %3365 = vst [vmem:[%s3227 + $0x260] sm:$0xff] %v3364
                  %v3366 = vld [vmem:[%s3226 + $0x228] sm:$0xff]
                  %3367 = vst [vmem:[%s3227 + $0x268] sm:$0xff] %v3366
                  %v3368 = vld [vmem:[%s3226 + $0x230] sm:$0xff]
                  %3369 = vst [vmem:[%s3227 + $0x270] sm:$0xff] %v3368
                  %v3370 = vld [vmem:[%s3226 + $0x238] sm:$0xff]
                  %3371 = vst [vmem:[%s3227 + $0x278] sm:$0xff] %v3370
                  %v3372 = vld [vmem:[%s3226 + $0x240] sm:$0xff]
                  %3373 = vst [vmem:[%s3227 + $0x280] sm:$0xff] %v3372
                  %v3374 = vld [vmem:[%s3226 + $0x248] sm:$0xff]
                  %3375 = vst [vmem:[%s3227 + $0x288] sm:$0xff] %v3374
                  %v3376 = vld [vmem:[%s3226 + $0x250] sm:$0xff]
                  %3377 = vst [vmem:[%s3227 + $0x290] sm:$0xff] %v3376
                  %v3378 = vld [vmem:[%s3226 + $0x258] sm:$0xff]
                  %3379 = vst [vmem:[%s3227 + $0x298] sm:$0xff] %v3378
                  %v3380 = vld [vmem:[%s3226 + $0x260] sm:$0xff]
                  %3381 = vst [vmem:[%s3227 + $0x2a0] sm:$0xff] %v3380
                  %v3382 = vld [vmem:[%s3226 + $0x268] sm:$0xff]
                  %3383 = vst [vmem:[%s3227 + $0x2a8] sm:$0xff] %v3382
                  %v3384 = vld [vmem:[%s3226 + $0x270] sm:$0xff]
                  %3385 = vst [vmem:[%s3227 + $0x2b0] sm:$0xff] %v3384
                  %v3386 = vld [vmem:[%s3226 + $0x278] sm:$0xff]
                  %3387 = vst [vmem:[%s3227 + $0x2b8] sm:$0xff] %v3386
                  %s3388 = sadd.s32 1, %s3225
                  %p3389 = scmp.ge.s32.totalorder %s3388, %s3216
                  %s3390 = scalar_select %p3389, 0, %s3388
                  %s3391 = smul.u32 %s3390, 128
                  %s3392 = smul.u32 %s3390, 128
                  %s3393 = scalar_lea.vmem %s2477, %s3391 [#allocation8]
                  %s3394 = scalar_lea.vmem %s2954, %s3392
                $region168: #{tpu_custom_call.1} parent=162 // loop_footer
                  %s3222 = sadd.s32 %s3220, 1
                $region169: #{tpu_custom_call.1} parent=162 // loop_footer_branch
                  %3219 = sbr.rel target = $region165
                $region170: #{tpu_custom_call.1} parent=162 // loop_exit
                  _
                %s3395 = sshrl.u32 %s3215, 4
                %s3396 = sand.u32 %s3215, 15
                %s3397 = smul.u32 %s3395, 16
                %s3398 = smul.u32 128, %s3397
                %s3399 = sshra.s32 %s3398, 4
                %s3400 = scalar_lea.vmem %s2477, %s3399 [#allocation8]
                %s3401 = smul.u32 128, %s3397
                %s3402 = sshra.s32 %s3401, 4
                %s3403 = scalar_lea.vmem %s2954, %s3402
                // While loop
                $region171: #{tpu_custom_call.1} parent=162 // loop_pre_header
                  _
                $region172: #{tpu_custom_call.1} parent=162 // loop_header
                  %s3407 = sphi 0, %s3409
                  %p3408 = scmp.ge.s32.totalorder %s3407, %s3396
                  %s3412 = sphi 0, %s3427
                  %s3413 = sphi %s3400, %s3430
                  %s3414 = sphi %s3403, %s3431
                $region173: #{tpu_custom_call.1} parent=162 // loop_header_branch
                  %3411 = sbr.rel (%p3408) target = $region177
                $region174: #{tpu_custom_call.1} parent=162 // loop_body
                  %v3415 = vld [vmem:[%s3413] sm:$0xff]
                  %3416 = vst [vmem:[%s3414] sm:$0xff] %v3415
                  %v3417 = vld [vmem:[%s3413 + $0x80] sm:$0xff]
                  %3418 = vst [vmem:[%s3414 + $0x90] sm:$0xff] %v3417
                  %v3419 = vld [vmem:[%s3413 + $0x100] sm:$0xff]
                  %3420 = vst [vmem:[%s3414 + $0x120] sm:$0xff] %v3419
                  %v3421 = vld [vmem:[%s3413 + $0x180] sm:$0xff]
                  %3422 = vst [vmem:[%s3414 + $0x1b0] sm:$0xff] %v3421
                  %v3423 = vld [vmem:[%s3413 + $0x200] sm:$0xff]
                  %3424 = vst [vmem:[%s3414 + $0x240] sm:$0xff] %v3423
                  %s3425 = sadd.s32 1, %s3412
                  %p3426 = scmp.ge.s32.totalorder %s3425, %s3396
                  %s3427 = scalar_select %p3426, 0, %s3425
                  %s3428 = smul.u32 %s3427, 8
                  %s3429 = smul.u32 %s3427, 8
                  %s3430 = scalar_lea.vmem %s3400, %s3428 [#allocation8]
                  %s3431 = scalar_lea.vmem %s3403, %s3429
                $region175: #{tpu_custom_call.1} parent=162 // loop_footer
                  %s3409 = sadd.s32 %s3407, 1
                $region176: #{tpu_custom_call.1} parent=162 // loop_footer_branch
                  %3406 = sbr.rel target = $region172
                $region177: #{tpu_custom_call.1} parent=162 // loop_exit
                  _
                %s3432 = sshllo.u32 0, %s3210
                loop: start=0, step=1, limit=1
                $region178: #{tpu_custom_call.1} parent=162 // loop_pre_header
                  _
                $region179: #{tpu_custom_call.1} parent=162 // loop_header
                  %s3434 = sphi 0, %s3438
                  %p3435 = scmp.ge.s32.totalorder %s3434, 1
                  %s3439 = sphi %s3212, %s3212
                  %s3440 = sphi %s3214, %s3214
                $region180: #{tpu_custom_call.1} parent=162 // loop_header_branch
                  %3437 = sbr.rel (%p3435) target = $region184
                $region181: #{tpu_custom_call.1} parent=162 // loop_body
                  %v3441 = vld [vmem:[%s3439] sm:%s3432]
                  %3442 = vst [vmem:[%s3440] sm:%s3432] %v3441
                  %v3443 = vld [vmem:[%s3439 + $0x80] sm:%s3432]
                  %3444 = vst [vmem:[%s3440 + $0x90] sm:%s3432] %v3443
                  %v3445 = vld [vmem:[%s3439 + $0x100] sm:%s3432]
                  %3446 = vst [vmem:[%s3440 + $0x120] sm:%s3432] %v3445
                  %v3447 = vld [vmem:[%s3439 + $0x180] sm:%s3432]
                  %3448 = vst [vmem:[%s3440 + $0x1b0] sm:%s3432] %v3447
                  %v3449 = vld [vmem:[%s3439 + $0x200] sm:%s3432]
                  %3450 = vst [vmem:[%s3440 + $0x240] sm:%s3432] %v3449
                $region182: #{tpu_custom_call.1} parent=162 // loop_footer
                  %s3438 = sadd.s32 1, %s3434
                $region183: #{tpu_custom_call.1} parent=162 // loop_footer_branch
                  %3433 = sbr.rel target = $region179
                $region184: #{tpu_custom_call.1} parent=162 // loop_exit
                  _
              $region163: #{tpu_custom_call.1} parent=129 // pred_fallthru
                _
            $region130: #{tpu_custom_call.1} parent=125 // pred_fallthru
              _
            // Predicated region
            $region131: #{tpu_custom_call.1} parent=125 // pred_check
              %p2963 = pneg %p2959
            $region132: #{tpu_custom_call.1} parent=125 // pred_check_branch
              %2965 = sbr.rel (%p2963) target = $region134
            $region133: #{tpu_custom_call.1} parent=125 // pred_region
              %s2966 = sshllo.u32 0, %s2955
              loop: start=0, step=1, limit=1
              $region135: #{tpu_custom_call.1} parent=133 // loop_pre_header
                _
              $region136: #{tpu_custom_call.1} parent=133 // loop_header
                %s2968 = sphi 0, %s2972
                %p2969 = scmp.ge.s32.totalorder %s2968, 1
                %s2973 = sphi %s2477, %s2477
                %s2974 = sphi %s2954, %s2954
              $region137: #{tpu_custom_call.1} parent=133 // loop_header_branch
                %2971 = sbr.rel (%p2969) target = $region141
              $region138: #{tpu_custom_call.1} parent=133 // loop_body
                %v2975 = vld [vmem:[%s2973] sm:%s2966]
                %2976 = vst [vmem:[%s2974] sm:%s2966] %v2975
                %v2977 = vld [vmem:[%s2973 + $0x80] sm:%s2966]
                %2978 = vst [vmem:[%s2974 + $0x90] sm:%s2966] %v2977
                %v2979 = vld [vmem:[%s2973 + $0x100] sm:%s2966]
                %2980 = vst [vmem:[%s2974 + $0x120] sm:%s2966] %v2979
                %v2981 = vld [vmem:[%s2973 + $0x180] sm:%s2966]
                %2982 = vst [vmem:[%s2974 + $0x1b0] sm:%s2966] %v2981
                %v2983 = vld [vmem:[%s2973 + $0x200] sm:%s2966]
                %2984 = vst [vmem:[%s2974 + $0x240] sm:%s2966] %v2983
              $region139: #{tpu_custom_call.1} parent=133 // loop_footer
                %s2972 = sadd.s32 1, %s2968
              $region140: #{tpu_custom_call.1} parent=133 // loop_footer_branch
                %2967 = sbr.rel target = $region136
              $region141: #{tpu_custom_call.1} parent=133 // loop_exit
                _
            $region134: #{tpu_custom_call.1} parent=125 // pred_fallthru
              _
          $region126: #{tpu_custom_call.1} parent=121 // pred_fallthru
            _
          %3451 = vnop
        $region122: #{tpu_custom_call.1} parent=39 // pred_fallthru
          _
      $region40: #{tpu_custom_call.1} parent=5 // pred_fallthru
        _
      %p3452 = scmp.le.s32.totalorder 2, %s15
      // Predicated region
      $region185: #{tpu_custom_call.1} parent=5 // pred_check
        %p3453 = pneg %p3452
      $region186: #{tpu_custom_call.1} parent=5 // pred_check_branch
        %3455 = sbr.rel (%p3453) target = $region188
      $region187: #{tpu_custom_call.1} parent=5 // pred_region
        %s3456 = ssub.s32 %s15, 2
        // Predicated region
        $region189: #{tpu_custom_call.1} parent=187 // pred_check
          %p3457 = pneg %p170
        $region190: #{tpu_custom_call.1} parent=187 // pred_check_branch
          %3459 = sbr.rel (%p3457) target = $region192
        $region191: #{tpu_custom_call.1} parent=187 // pred_region
          %s3460 = sand.u32 %s155, 1
          %s3461 = sand.u32 %s155, 1
          %s3462 = smul.addr %s3461, 384
          %s3463 = scalar_lea.vmem [#allocation7], %s3462
        $region192: #{tpu_custom_call.1} parent=187 // pred_fallthru
          _
        // Predicated region
        $region193: #{tpu_custom_call.1} parent=187 // pred_check
          %p3464 = pneg %p198
        $region194: #{tpu_custom_call.1} parent=187 // pred_check_branch
          %3466 = sbr.rel (%p3464) target = $region196
        $region195: #{tpu_custom_call.1} parent=187 // pred_region
          %s3467 = sand.u32 %s183, 1
          %s3468 = sand.u32 %s183, 1
          %s3469 = smul.addr %s3468, 640
          %s3470 = scalar_lea.vmem [#allocation8], %s3469
        $region196: #{tpu_custom_call.1} parent=187 // pred_fallthru
          _
      $region188: #{tpu_custom_call.1} parent=5 // pred_fallthru
        _
    $region6: #{tpu_custom_call.1} parent=1 // loop_footer
      %s19 = sadd.s32 1, %s15
    $region7: #{tpu_custom_call.1} parent=1 // loop_footer_branch
      %14 = sbr.rel target = $region3
    $region8: #{tpu_custom_call.1} parent=1 // loop_exit
      _
    %3471 = vsyncpa [#allocation3], 1
    %s3472 = scalar_lea.sflag [#allocation3], 1
    %3473 = vsyncpa %s3472, 1
    %3474 = vsyncpa [#allocation5], 1

</llo_original>
